<compile_context>
chip_gen: v6e
topology: v6e:2x2x1
jax: 0.10.0
libtpu: 0.0.40
codegen_flags: <defaults>
</compile_context>

<pallas_src>
import functools

import jax
import jax.numpy as jnp
from jax.experimental import pallas as pl
from jax.experimental.pallas import tpu as pltpu


# ----------------------------------------------------------------------------
# Fused kernel: LSTM1+attention, LSTM2+attention, regression head.
# ----------------------------------------------------------------------------
def fused_molecular_lstm_kernel(
    x1_ref, x2_ref,                                    # (S*B, D) time-major
    w_ih1_ref, w_hh1_ref, b1_ref, wa1_ref,             # branch 1 params
    w_ih2_ref, w_hh2_ref, b2_ref, wa2_ref,             # branch 2 params
    hw1_ref, hb1_ref, hw2_ref, hb2_ref,                # regression head
    hw3_ref, hb3_ref, hw4_ref, hb4_ref,
    ba1_ref, ba2_ref,                                  # SMEM scalar attn biases
    out_ref,                                           # (B, output_dim)
    *, batch, seq1, seq2):

    def lstm_attn_branch(x_ref, w_ih_ref, w_hh_ref, b_ref, wa_ref, ba, seq):
        B = batch
        H = w_hh_ref.shape[0]

        # Hoisted input projection: one (S*B, D) @ (D, 4H) MXU matmul.
        gates_x = (jnp.dot(x_ref[...], w_ih_ref[...],
                           preferred_element_type=jnp.float32)
                   + b_ref[...])                        # (S*B, 4H), time-major

        w_hh = w_hh_ref[...]                            # (H, 4H)
        wa = wa_ref[...]                                # (1, H)

        h = jnp.zeros((B, H), jnp.float32)
        c = jnp.zeros((B, H), jnp.float32)
        # online-softmax (flash-style) attention state
        m = jnp.full((B, 1), -1e30, jnp.float32)
        l = jnp.zeros((B, 1), jnp.float32)
        acc = jnp.zeros((B, H), jnp.float32)

        # Fully unrolled serial recurrence (seq is small and static).
        for t in range(seq):
            gates = gates_x[t * B:(t + 1) * B, :] + jnp.dot(
                h, w_hh, preferred_element_type=jnp.float32)    # (B, 4H)
            # Full-width EUP activations, then per-gate lane slices.
            sig = jax.nn.sigmoid(gates)
            th = jnp.tanh(gates)
            i_g = sig[:, 0 * H:1 * H]
            f_g = sig[:, 1 * H:2 * H]
            o_g = sig[:, 3 * H:4 * H]
            g_g = th[:, 2 * H:3 * H]
            c = f_g * c + i_g * g_g
            h = o_g * jnp.tanh(c)

            # Online attention update (softmax over the time axis).
            score = jnp.sum(h * wa, axis=-1, keepdims=True) + ba   # (B, 1)
            m_new = jnp.maximum(m, score)
            scale = jnp.exp(m - m_new)
            p = jnp.exp(score - m_new)
            l = scale * l + p
            acc = scale * acc + p * h
            m = m_new

        return acc * pl.reciprocal(l, approx=True)       # (B, H) context

    H = w_hh1_ref.shape[0]
    ctx1 = lstm_attn_branch(x1_ref, w_ih1_ref, w_hh1_ref, b1_ref,
                            wa1_ref, ba1_ref[0, 0], seq1)
    ctx2 = lstm_attn_branch(x2_ref, w_ih2_ref, w_hh2_ref, b2_ref,
                            wa2_ref, ba2_ref[0, 0], seq2)
    # dropout1 / dropout2: identity in inference mode.

    # Regression head, fused; concat avoided by splitting the layer-1 weight.
    w1 = hw1_ref[...]                                    # (2H, H)
    z = (jnp.dot(ctx1, w1[:H, :], preferred_element_type=jnp.float32)
         + jnp.dot(ctx2, w1[H:, :], preferred_element_type=jnp.float32)
         + hb1_ref[...])
    z = jnp.maximum(z, 0.0)
    z = jnp.maximum(jnp.dot(z, hw2_ref[...], preferred_element_type=jnp.float32)
                    + hb2_ref[...], 0.0)
    z = jnp.maximum(jnp.dot(z, hw3_ref[...], preferred_element_type=jnp.float32)
                    + hb3_ref[...], 0.0)
    out_ref[...] = (jnp.dot(z, hw4_ref[...], preferred_element_type=jnp.float32)
                    + hb4_ref[...])


# ----------------------------------------------------------------------------
# Wrapper
# ----------------------------------------------------------------------------
def _vmem_spec():
    return pl.BlockSpec(memory_space=pltpu.MemorySpace.VMEM)


def _smem_spec():
    return pl.BlockSpec(memory_space=pltpu.MemorySpace.SMEM)


@jax.jit
def molecular_lstm_forward(params, x1, x2):
    """x1: (B, S1, num_tokens1) float32 one-hot; x2: (B, S2) int32 token ids."""
    B, S1, D1 = x1.shape
    S2 = x2.shape[1]
    E = params["emb2"].shape[1]
    O = params["head_w4"].shape[1]

    # Tiny glue ops (fused by XLA): embedding gather, time-major flatten,
    # PyTorch bias folding b_ih + b_hh.
    x2_emb = jnp.take(params["emb2"], x2, axis=0)                # (B, S2, E)
    x1_tm = jnp.transpose(x1, (1, 0, 2)).reshape(S1 * B, D1)     # time-major flat
    x2_tm = jnp.transpose(x2_emb, (1, 0, 2)).reshape(S2 * B, E)
    b1 = params["lstm1_b_ih"] + params["lstm1_b_hh"]
    b2 = params["lstm2_b_ih"] + params["lstm2_b_hh"]

    kernel = functools.partial(fused_molecular_lstm_kernel,
                               batch=B, seq1=S1, seq2=S2)
    return pl.pallas_call(
        kernel,
        out_shape=jax.ShapeDtypeStruct((B, O), jnp.float32),
        in_specs=[_vmem_spec()] * 18 + [_smem_spec()] * 2,
        out_specs=_vmem_spec(),
    )(x1_tm, x2_tm,
      params["lstm1_w_ih"], params["lstm1_w_hh"], b1, params["attn1_w"],
      params["lstm2_w_ih"], params["lstm2_w_hh"], b2, params["attn2_w"],
      params["head_w1"], params["head_b1"],
      params["head_w2"], params["head_b2"],
      params["head_w3"], params["head_b3"],
      params["head_w4"], params["head_b4"],
      params["attn1_b"], params["attn2_b"])


# ----------------------------------------------------------------------------
# Synthetic parameters (PyTorch module shapes, stored transposed)
# ----------------------------------------------------------------------------
def init_params(key, num_tokens1, num_tokens2, emb_dim, hidden_dim, output_dim):
    ks = jax.random.split(key, 20)
    H = hidden_dim
    d_emb = 2 * H  # regression-head input width

    def lin_w(k, fan_in, fan_out):
        return (jax.random.normal(k, (fan_in, fan_out), jnp.float32)
                * (1.0 / jnp.sqrt(fan_in)))

    def lin_b(k, fan_in, fan_out):
        return (jax.random.uniform(k, (1, fan_out), jnp.float32, -1.0, 1.0)
                * (1.0 / jnp.sqrt(fan_in)))

    return {
        # lstm1 (input = one-hot over num_tokens1); gate order i, f, g, o.
        "lstm1_w_ih": lin_w(ks[0], num_tokens1, 4 * H),
        "lstm1_w_hh": lin_w(ks[1], H, 4 * H),
        "lstm1_b_ih": lin_b(ks[2], H, 4 * H),
        "lstm1_b_hh": lin_b(ks[3], H, 4 * H),
        "attn1_w": jax.random.normal(ks[4], (1, H), jnp.float32) / jnp.sqrt(H),
        "attn1_b": jax.random.normal(ks[5], (1, 1), jnp.float32) * 0.1,
        # embedding2 + lstm2
        "emb2": jax.random.normal(ks[6], (num_tokens2, emb_dim), jnp.float32) * 0.1,
        "lstm2_w_ih": lin_w(ks[7], emb_dim, 4 * H),
        "lstm2_w_hh": lin_w(ks[8], H, 4 * H),
        "lstm2_b_ih": lin_b(ks[9], H, 4 * H),
        "lstm2_b_hh": lin_b(ks[10], H, 4 * H),
        "attn2_w": jax.random.normal(ks[11], (1, H), jnp.float32) / jnp.sqrt(H),
        "attn2_b": jax.random.normal(ks[12], (1, 1), jnp.float32) * 0.1,
        # regression head on 2H features: 2H -> H -> H/2 -> H/4 -> out.
        "head_w1": lin_w(ks[13], d_emb, d_emb // 2),
        "head_b1": lin_b(ks[14], d_emb, d_emb // 2),
        "head_w2": lin_w(ks[15], d_emb // 2, d_emb // 4),
        "head_b2": lin_b(ks[16], d_emb // 2, d_emb // 4),
        "head_w3": lin_w(ks[17], d_emb // 4, d_emb // 8),
        "head_b3": lin_b(ks[18], d_emb // 4, d_emb // 8),
        "head_w4": lin_w(ks[19], d_emb // 8, output_dim),
        "head_b4": jnp.zeros((1, output_dim), jnp.float32),
    }


# ----------------------------------------------------------------------------
# Pure-JAX reference (mirrors the PyTorch module in eval mode)
# ----------------------------------------------------------------------------
def reference_forward(params, x1, x2):
    def lstm_outputs(x, w_ih, w_hh, b):
        B, S, _ = x.shape
        H = w_hh.shape[0]
        h = jnp.zeros((B, H), jnp.float32)
        c = jnp.zeros((B, H), jnp.float32)
        outs = []
        for t in range(S):
            g = x[:, t, :] @ w_ih + h @ w_hh + b
            i = jax.nn.sigmoid(g[:, :H])
            f = jax.nn.sigmoid(g[:, H:2 * H])
            gg = jnp.tanh(g[:, 2 * H:3 * H])
            o = jax.nn.sigmoid(g[:, 3 * H:])
            c = f * c + i * gg
            h = o * jnp.tanh(c)
            outs.append(h)
        return jnp.stack(outs, axis=1)                       # (B, S, H)

    def attention(outs, wa, ba):
        scores = jnp.einsum("bsh,h->bs", outs, wa[0]) + ba[0, 0]
        w = jax.nn.softmax(scores, axis=1)
        return jnp.einsum("bs,bsh->bh", w, outs)

    b1 = params["lstm1_b_ih"] + params["lstm1_b_hh"]
    b2 = params["lstm2_b_ih"] + params["lstm2_b_hh"]
    ctx1 = attention(lstm_outputs(x1, params["lstm1_w_ih"],
                                  params["lstm1_w_hh"], b1),
                     params["attn1_w"], params["attn1_b"])
    x2_emb = jnp.take(params["emb2"], x2, axis=0)
    ctx2 = attention(lstm_outputs(x2_emb, params["lstm2_w_ih"],
                                  params["lstm2_w_hh"], b2),
                     params["attn2_w"], params["attn2_b"])
    z = jnp.concatenate([ctx1, ctx2], axis=1)
    z = jax.nn.relu(z @ params["head_w1"] + params["head_b1"])
    z = jax.nn.relu(z @ params["head_w2"] + params["head_b2"])
    z = jax.nn.relu(z @ params["head_w3"] + params["head_b3"])
    return z @ params["head_w4"] + params["head_b4"]


if __name__ == "__main__":
    B, S1, S2 = 2, 8, 8
    num_tokens1 = 16       # one-hot vocab for part 1
    num_tokens2 = 20       # vocab for part 2 (embedding)
    emb_dim = 16
    hidden_dim = 32
    output_dim = 1

    key = jax.random.PRNGKey(0)
    k_p, k_x1, k_x2 = jax.random.split(key, 3)

    params = init_params(k_p, num_tokens1, num_tokens2,
                         emb_dim, hidden_dim, output_dim)

    # x1: one-hot encoded sequence (B, S1, num_tokens1)
    idx1 = jax.random.randint(k_x1, (B, S1), 0, num_tokens1)
    x1 = jax.nn.one_hot(idx1, num_tokens1, dtype=jnp.float32)
    # x2: integer token ids (B, S2)
    x2 = jax.random.randint(k_x2, (B, S2), 0, num_tokens2).astype(jnp.int32)

    out = molecular_lstm_forward(params, x1, x2)
    jax.block_until_ready(out)
    assert out.shape == (B, output_dim)

    ref = reference_forward(params, x1, x2)
    assert jnp.allclose(out, ref, rtol=5e-2, atol=5e-3), (out, ref)

    print("KERNEL_OK")
</pallas_src>

<mosaic_0001>
module attributes {stable_mosaic.version = 11 : i64} {
  func.func @fused_molecular_lstm_kernel(%arg0: memref<16x16xf32, #tpu.memory_space<vmem>>, %arg1: memref<16x16xf32, #tpu.memory_space<vmem>>, %arg2: memref<16x128xf32, #tpu.memory_space<vmem>>, %arg3: memref<32x128xf32, #tpu.memory_space<vmem>>, %arg4: memref<1x128xf32, #tpu.memory_space<vmem>>, %arg5: memref<1x32xf32, #tpu.memory_space<vmem>>, %arg6: memref<16x128xf32, #tpu.memory_space<vmem>>, %arg7: memref<32x128xf32, #tpu.memory_space<vmem>>, %arg8: memref<1x128xf32, #tpu.memory_space<vmem>>, %arg9: memref<1x32xf32, #tpu.memory_space<vmem>>, %arg10: memref<64x32xf32, #tpu.memory_space<vmem>>, %arg11: memref<1x32xf32, #tpu.memory_space<vmem>>, %arg12: memref<32x16xf32, #tpu.memory_space<vmem>>, %arg13: memref<1x16xf32, #tpu.memory_space<vmem>>, %arg14: memref<16x8xf32, #tpu.memory_space<vmem>>, %arg15: memref<1x8xf32, #tpu.memory_space<vmem>>, %arg16: memref<8x1xf32, #tpu.memory_space<vmem>>, %arg17: memref<1x1xf32, #tpu.memory_space<vmem>>, %arg18: memref<1x1xf32, #tpu.memory_space<smem>>, %arg19: memref<1x1xf32, #tpu.memory_space<smem>>, %arg20: memref<2x1xf32, #tpu.memory_space<vmem>>) attributes {dimension_semantics = [], scalar_prefetch = 0 : i64, scratch_operands = 0 : i64, tpu.core_type = #tpu.core_type<tc>} {
    %c0 = arith.constant 0 : index
    %c0_0 = arith.constant 0 : index
    %0 = memref.load %arg18[%c0, %c0_0] : memref<1x1xf32, #tpu.memory_space<smem>>
    %c0_1 = arith.constant 0 : index
    %c0_2 = arith.constant 0 : index
    %1 = vector.load %arg0[%c0_1, %c0_2] : memref<16x16xf32, #tpu.memory_space<vmem>>, vector<16x16xf32>
    %c0_3 = arith.constant 0 : index
    %c0_4 = arith.constant 0 : index
    %2 = vector.load %arg2[%c0_3, %c0_4] : memref<16x128xf32, #tpu.memory_space<vmem>>, vector<16x128xf32>
    %cst = arith.constant dense<0.000000e+00> : vector<16x128xf32>
    %3 = tpu.matmul %1, %2, %cst {dimension_numbers = #tpu.dot_dimension_numbers<[1], [0], [0], [1], [0, 0, 1, 1], [], []>} : vector<16x16xf32>, vector<16x128xf32>, vector<16x128xf32> -> vector<16x128xf32>
    %c0_5 = arith.constant 0 : index
    %c0_6 = arith.constant 0 : index
    %4 = vector.load %arg4[%c0_5, %c0_6] : memref<1x128xf32, #tpu.memory_space<vmem>>, vector<1x128xf32>
    %5 = vector.broadcast %4 : vector<1x128xf32> to vector<16x128xf32>
    %6 = arith.addf %3, %5 : vector<16x128xf32>
    %c0_7 = arith.constant 0 : index
    %c0_8 = arith.constant 0 : index
    %7 = vector.load %arg3[%c0_7, %c0_8] : memref<32x128xf32, #tpu.memory_space<vmem>>, vector<32x128xf32>
    %c0_9 = arith.constant 0 : index
    %c0_10 = arith.constant 0 : index
    %8 = vector.load %arg5[%c0_9, %c0_10] : memref<1x32xf32, #tpu.memory_space<vmem>>, vector<1x32xf32>
    %cst_11 = arith.constant 0.000000e+00 : f32
    %9 = vector.broadcast %cst_11 : f32 to vector<2x32xf32>
    %cst_12 = arith.constant 0.000000e+00 : f32
    %10 = vector.broadcast %cst_12 : f32 to vector<2x32xf32>
    %cst_13 = arith.constant -1.000000e+30 : f32
    %11 = vector.broadcast %cst_13 : f32 to vector<2x1xf32>
    %cst_14 = arith.constant 0.000000e+00 : f32
    %12 = vector.broadcast %cst_14 : f32 to vector<2x1xf32>
    %cst_15 = arith.constant 0.000000e+00 : f32
    %13 = vector.broadcast %cst_15 : f32 to vector<2x32xf32>
    %14 = vector.extract_strided_slice %6 {offsets = [0, 0], sizes = [2, 128], strides = [1, 1]} : vector<16x128xf32> to vector<2x128xf32>
    %cst_16 = arith.constant dense<0.000000e+00> : vector<2x128xf32>
    %15 = tpu.matmul %9, %7, %cst_16 {dimension_numbers = #tpu.dot_dimension_numbers<[1], [0], [0], [1], [0, 0, 1, 1], [], []>} : vector<2x32xf32>, vector<32x128xf32>, vector<2x128xf32> -> vector<2x128xf32>
    %16 = arith.addf %14, %15 : vector<2x128xf32>
    %17 = arith.negf %16 : vector<2x128xf32>
    %18 = math.exp %17 : vector<2x128xf32>
    %cst_17 = arith.constant 1.000000e+00 : f32
    %19 = vector.broadcast %cst_17 : f32 to vector<2x128xf32>
    %20 = arith.addf %19, %18 : vector<2x128xf32>
    %21 = arith.divf %19, %20 : vector<2x128xf32>
    %22 = math.tanh %16 : vector<2x128xf32>
    %23 = vector.extract_strided_slice %21 {offsets = [0, 0], sizes = [2, 32], strides = [1, 1]} : vector<2x128xf32> to vector<2x32xf32>
    %24 = vector.extract_strided_slice %21 {offsets = [0, 32], sizes = [2, 32], strides = [1, 1]} : vector<2x128xf32> to vector<2x32xf32>
    %25 = vector.extract_strided_slice %21 {offsets = [0, 96], sizes = [2, 32], strides = [1, 1]} : vector<2x128xf32> to vector<2x32xf32>
    %26 = vector.extract_strided_slice %22 {offsets = [0, 64], sizes = [2, 32], strides = [1, 1]} : vector<2x128xf32> to vector<2x32xf32>
    %27 = arith.mulf %24, %10 : vector<2x32xf32>
    %28 = arith.mulf %23, %26 : vector<2x32xf32>
    %29 = arith.addf %27, %28 : vector<2x32xf32>
    %30 = math.tanh %29 : vector<2x32xf32>
    %31 = arith.mulf %25, %30 : vector<2x32xf32>
    %32 = vector.broadcast %8 : vector<1x32xf32> to vector<2x32xf32>
    %33 = arith.mulf %31, %32 : vector<2x32xf32>
    %cst_18 = arith.constant dense<0.000000e+00> : vector<2xf32>
    %34 = vector.multi_reduction <add>, %33, %cst_18 [1] : vector<2x32xf32> to vector<2xf32>
    %35 = vector.shape_cast %34 : vector<2xf32> to vector<2x1xf32>
    %36 = vector.broadcast %0 : f32 to vector<2x1xf32>
    %37 = arith.addf %35, %36 : vector<2x1xf32>
    %38 = arith.maximumf %11, %37 : vector<2x1xf32>
    %39 = arith.subf %11, %38 : vector<2x1xf32>
    %40 = math.exp %39 : vector<2x1xf32>
    %41 = arith.subf %37, %38 : vector<2x1xf32>
    %42 = math.exp %41 : vector<2x1xf32>
    %43 = arith.mulf %40, %12 : vector<2x1xf32>
    %44 = arith.addf %43, %42 : vector<2x1xf32>
    %45 = vector.broadcast %40 : vector<2x1xf32> to vector<2x32xf32>
    %46 = arith.mulf %45, %13 : vector<2x32xf32>
    %47 = vector.broadcast %42 : vector<2x1xf32> to vector<2x32xf32>
    %48 = arith.mulf %47, %31 : vector<2x32xf32>
    %49 = arith.addf %46, %48 : vector<2x32xf32>
    %50 = vector.extract_strided_slice %6 {offsets = [2, 0], sizes = [2, 128], strides = [1, 1]} : vector<16x128xf32> to vector<2x128xf32>
    %cst_19 = arith.constant dense<0.000000e+00> : vector<2x128xf32>
    %51 = tpu.matmul %31, %7, %cst_19 {dimension_numbers = #tpu.dot_dimension_numbers<[1], [0], [0], [1], [0, 0, 1, 1], [], []>} : vector<2x32xf32>, vector<32x128xf32>, vector<2x128xf32> -> vector<2x128xf32>
    %52 = arith.addf %50, %51 : vector<2x128xf32>
    %53 = arith.negf %52 : vector<2x128xf32>
    %54 = math.exp %53 : vector<2x128xf32>
    %cst_20 = arith.constant 1.000000e+00 : f32
    %55 = vector.broadcast %cst_20 : f32 to vector<2x128xf32>
    %56 = arith.addf %55, %54 : vector<2x128xf32>
    %57 = arith.divf %55, %56 : vector<2x128xf32>
    %58 = math.tanh %52 : vector<2x128xf32>
    %59 = vector.extract_strided_slice %57 {offsets = [0, 0], sizes = [2, 32], strides = [1, 1]} : vector<2x128xf32> to vector<2x32xf32>
    %60 = vector.extract_strided_slice %57 {offsets = [0, 32], sizes = [2, 32], strides = [1, 1]} : vector<2x128xf32> to vector<2x32xf32>
    %61 = vector.extract_strided_slice %57 {offsets = [0, 96], sizes = [2, 32], strides = [1, 1]} : vector<2x128xf32> to vector<2x32xf32>
    %62 = vector.extract_strided_slice %58 {offsets = [0, 64], sizes = [2, 32], strides = [1, 1]} : vector<2x128xf32> to vector<2x32xf32>
    %63 = arith.mulf %60, %29 : vector<2x32xf32>
    %64 = arith.mulf %59, %62 : vector<2x32xf32>
    %65 = arith.addf %63, %64 : vector<2x32xf32>
    %66 = math.tanh %65 : vector<2x32xf32>
    %67 = arith.mulf %61, %66 : vector<2x32xf32>
    %68 = vector.broadcast %8 : vector<1x32xf32> to vector<2x32xf32>
    %69 = arith.mulf %67, %68 : vector<2x32xf32>
    %cst_21 = arith.constant dense<0.000000e+00> : vector<2xf32>
    %70 = vector.multi_reduction <add>, %69, %cst_21 [1] : vector<2x32xf32> to vector<2xf32>
    %71 = vector.shape_cast %70 : vector<2xf32> to vector<2x1xf32>
    %72 = vector.broadcast %0 : f32 to vector<2x1xf32>
    %73 = arith.addf %71, %72 : vector<2x1xf32>
    %74 = arith.maximumf %38, %73 : vector<2x1xf32>
    %75 = arith.subf %38, %74 : vector<2x1xf32>
    %76 = math.exp %75 : vector<2x1xf32>
    %77 = arith.subf %73, %74 : vector<2x1xf32>
    %78 = math.exp %77 : vector<2x1xf32>
    %79 = arith.mulf %76, %44 : vector<2x1xf32>
    %80 = arith.addf %79, %78 : vector<2x1xf32>
    %81 = vector.broadcast %76 : vector<2x1xf32> to vector<2x32xf32>
    %82 = arith.mulf %81, %49 : vector<2x32xf32>
    %83 = vector.broadcast %78 : vector<2x1xf32> to vector<2x32xf32>
    %84 = arith.mulf %83, %67 : vector<2x32xf32>
    %85 = arith.addf %82, %84 : vector<2x32xf32>
    %86 = vector.extract_strided_slice %6 {offsets = [4, 0], sizes = [2, 128], strides = [1, 1]} : vector<16x128xf32> to vector<2x128xf32>
    %cst_22 = arith.constant dense<0.000000e+00> : vector<2x128xf32>
    %87 = tpu.matmul %67, %7, %cst_22 {dimension_numbers = #tpu.dot_dimension_numbers<[1], [0], [0], [1], [0, 0, 1, 1], [], []>} : vector<2x32xf32>, vector<32x128xf32>, vector<2x128xf32> -> vector<2x128xf32>
    %88 = arith.addf %86, %87 : vector<2x128xf32>
    %89 = arith.negf %88 : vector<2x128xf32>
    %90 = math.exp %89 : vector<2x128xf32>
    %cst_23 = arith.constant 1.000000e+00 : f32
    %91 = vector.broadcast %cst_23 : f32 to vector<2x128xf32>
    %92 = arith.addf %91, %90 : vector<2x128xf32>
    %93 = arith.divf %91, %92 : vector<2x128xf32>
    %94 = math.tanh %88 : vector<2x128xf32>
    %95 = vector.extract_strided_slice %93 {offsets = [0, 0], sizes = [2, 32], strides = [1, 1]} : vector<2x128xf32> to vector<2x32xf32>
    %96 = vector.extract_strided_slice %93 {offsets = [0, 32], sizes = [2, 32], strides = [1, 1]} : vector<2x128xf32> to vector<2x32xf32>
    %97 = vector.extract_strided_slice %93 {offsets = [0, 96], sizes = [2, 32], strides = [1, 1]} : vector<2x128xf32> to vector<2x32xf32>
    %98 = vector.extract_strided_slice %94 {offsets = [0, 64], sizes = [2, 32], strides = [1, 1]} : vector<2x128xf32> to vector<2x32xf32>
    %99 = arith.mulf %96, %65 : vector<2x32xf32>
    %100 = arith.mulf %95, %98 : vector<2x32xf32>
    %101 = arith.addf %99, %100 : vector<2x32xf32>
    %102 = math.tanh %101 : vector<2x32xf32>
    %103 = arith.mulf %97, %102 : vector<2x32xf32>
    %104 = vector.broadcast %8 : vector<1x32xf32> to vector<2x32xf32>
    %105 = arith.mulf %103, %104 : vector<2x32xf32>
    %cst_24 = arith.constant dense<0.000000e+00> : vector<2xf32>
    %106 = vector.multi_reduction <add>, %105, %cst_24 [1] : vector<2x32xf32> to vector<2xf32>
    %107 = vector.shape_cast %106 : vector<2xf32> to vector<2x1xf32>
    %108 = vector.broadcast %0 : f32 to vector<2x1xf32>
    %109 = arith.addf %107, %108 : vector<2x1xf32>
    %110 = arith.maximumf %74, %109 : vector<2x1xf32>
    %111 = arith.subf %74, %110 : vector<2x1xf32>
    %112 = math.exp %111 : vector<2x1xf32>
    %113 = arith.subf %109, %110 : vector<2x1xf32>
    %114 = math.exp %113 : vector<2x1xf32>
    %115 = arith.mulf %112, %80 : vector<2x1xf32>
    %116 = arith.addf %115, %114 : vector<2x1xf32>
    %117 = vector.broadcast %112 : vector<2x1xf32> to vector<2x32xf32>
    %118 = arith.mulf %117, %85 : vector<2x32xf32>
    %119 = vector.broadcast %114 : vector<2x1xf32> to vector<2x32xf32>
    %120 = arith.mulf %119, %103 : vector<2x32xf32>
    %121 = arith.addf %118, %120 : vector<2x32xf32>
    %122 = vector.extract_strided_slice %6 {offsets = [6, 0], sizes = [2, 128], strides = [1, 1]} : vector<16x128xf32> to vector<2x128xf32>
    %cst_25 = arith.constant dense<0.000000e+00> : vector<2x128xf32>
    %123 = tpu.matmul %103, %7, %cst_25 {dimension_numbers = #tpu.dot_dimension_numbers<[1], [0], [0], [1], [0, 0, 1, 1], [], []>} : vector<2x32xf32>, vector<32x128xf32>, vector<2x128xf32> -> vector<2x128xf32>
    %124 = arith.addf %122, %123 : vector<2x128xf32>
    %125 = arith.negf %124 : vector<2x128xf32>
    %126 = math.exp %125 : vector<2x128xf32>
    %cst_26 = arith.constant 1.000000e+00 : f32
    %127 = vector.broadcast %cst_26 : f32 to vector<2x128xf32>
    %128 = arith.addf %127, %126 : vector<2x128xf32>
    %129 = arith.divf %127, %128 : vector<2x128xf32>
    %130 = math.tanh %124 : vector<2x128xf32>
    %131 = vector.extract_strided_slice %129 {offsets = [0, 0], sizes = [2, 32], strides = [1, 1]} : vector<2x128xf32> to vector<2x32xf32>
    %132 = vector.extract_strided_slice %129 {offsets = [0, 32], sizes = [2, 32], strides = [1, 1]} : vector<2x128xf32> to vector<2x32xf32>
    %133 = vector.extract_strided_slice %129 {offsets = [0, 96], sizes = [2, 32], strides = [1, 1]} : vector<2x128xf32> to vector<2x32xf32>
    %134 = vector.extract_strided_slice %130 {offsets = [0, 64], sizes = [2, 32], strides = [1, 1]} : vector<2x128xf32> to vector<2x32xf32>
    %135 = arith.mulf %132, %101 : vector<2x32xf32>
    %136 = arith.mulf %131, %134 : vector<2x32xf32>
    %137 = arith.addf %135, %136 : vector<2x32xf32>
    %138 = math.tanh %137 : vector<2x32xf32>
    %139 = arith.mulf %133, %138 : vector<2x32xf32>
    %140 = vector.broadcast %8 : vector<1x32xf32> to vector<2x32xf32>
    %141 = arith.mulf %139, %140 : vector<2x32xf32>
    %cst_27 = arith.constant dense<0.000000e+00> : vector<2xf32>
    %142 = vector.multi_reduction <add>, %141, %cst_27 [1] : vector<2x32xf32> to vector<2xf32>
    %143 = vector.shape_cast %142 : vector<2xf32> to vector<2x1xf32>
    %144 = vector.broadcast %0 : f32 to vector<2x1xf32>
    %145 = arith.addf %143, %144 : vector<2x1xf32>
    %146 = arith.maximumf %110, %145 : vector<2x1xf32>
    %147 = arith.subf %110, %146 : vector<2x1xf32>
    %148 = math.exp %147 : vector<2x1xf32>
    %149 = arith.subf %145, %146 : vector<2x1xf32>
    %150 = math.exp %149 : vector<2x1xf32>
    %151 = arith.mulf %148, %116 : vector<2x1xf32>
    %152 = arith.addf %151, %150 : vector<2x1xf32>
    %153 = vector.broadcast %148 : vector<2x1xf32> to vector<2x32xf32>
    %154 = arith.mulf %153, %121 : vector<2x32xf32>
    %155 = vector.broadcast %150 : vector<2x1xf32> to vector<2x32xf32>
    %156 = arith.mulf %155, %139 : vector<2x32xf32>
    %157 = arith.addf %154, %156 : vector<2x32xf32>
    %158 = vector.extract_strided_slice %6 {offsets = [8, 0], sizes = [2, 128], strides = [1, 1]} : vector<16x128xf32> to vector<2x128xf32>
    %cst_28 = arith.constant dense<0.000000e+00> : vector<2x128xf32>
    %159 = tpu.matmul %139, %7, %cst_28 {dimension_numbers = #tpu.dot_dimension_numbers<[1], [0], [0], [1], [0, 0, 1, 1], [], []>} : vector<2x32xf32>, vector<32x128xf32>, vector<2x128xf32> -> vector<2x128xf32>
    %160 = arith.addf %158, %159 : vector<2x128xf32>
    %161 = arith.negf %160 : vector<2x128xf32>
    %162 = math.exp %161 : vector<2x128xf32>
    %cst_29 = arith.constant 1.000000e+00 : f32
    %163 = vector.broadcast %cst_29 : f32 to vector<2x128xf32>
    %164 = arith.addf %163, %162 : vector<2x128xf32>
    %165 = arith.divf %163, %164 : vector<2x128xf32>
    %166 = math.tanh %160 : vector<2x128xf32>
    %167 = vector.extract_strided_slice %165 {offsets = [0, 0], sizes = [2, 32], strides = [1, 1]} : vector<2x128xf32> to vector<2x32xf32>
    %168 = vector.extract_strided_slice %165 {offsets = [0, 32], sizes = [2, 32], strides = [1, 1]} : vector<2x128xf32> to vector<2x32xf32>
    %169 = vector.extract_strided_slice %165 {offsets = [0, 96], sizes = [2, 32], strides = [1, 1]} : vector<2x128xf32> to vector<2x32xf32>
    %170 = vector.extract_strided_slice %166 {offsets = [0, 64], sizes = [2, 32], strides = [1, 1]} : vector<2x128xf32> to vector<2x32xf32>
    %171 = arith.mulf %168, %137 : vector<2x32xf32>
    %172 = arith.mulf %167, %170 : vector<2x32xf32>
    %173 = arith.addf %171, %172 : vector<2x32xf32>
    %174 = math.tanh %173 : vector<2x32xf32>
    %175 = arith.mulf %169, %174 : vector<2x32xf32>
    %176 = vector.broadcast %8 : vector<1x32xf32> to vector<2x32xf32>
    %177 = arith.mulf %175, %176 : vector<2x32xf32>
    %cst_30 = arith.constant dense<0.000000e+00> : vector<2xf32>
    %178 = vector.multi_reduction <add>, %177, %cst_30 [1] : vector<2x32xf32> to vector<2xf32>
    %179 = vector.shape_cast %178 : vector<2xf32> to vector<2x1xf32>
    %180 = vector.broadcast %0 : f32 to vector<2x1xf32>
    %181 = arith.addf %179, %180 : vector<2x1xf32>
    %182 = arith.maximumf %146, %181 : vector<2x1xf32>
    %183 = arith.subf %146, %182 : vector<2x1xf32>
    %184 = math.exp %183 : vector<2x1xf32>
    %185 = arith.subf %181, %182 : vector<2x1xf32>
    %186 = math.exp %185 : vector<2x1xf32>
    %187 = arith.mulf %184, %152 : vector<2x1xf32>
    %188 = arith.addf %187, %186 : vector<2x1xf32>
    %189 = vector.broadcast %184 : vector<2x1xf32> to vector<2x32xf32>
    %190 = arith.mulf %189, %157 : vector<2x32xf32>
    %191 = vector.broadcast %186 : vector<2x1xf32> to vector<2x32xf32>
    %192 = arith.mulf %191, %175 : vector<2x32xf32>
    %193 = arith.addf %190, %192 : vector<2x32xf32>
    %194 = vector.extract_strided_slice %6 {offsets = [10, 0], sizes = [2, 128], strides = [1, 1]} : vector<16x128xf32> to vector<2x128xf32>
    %cst_31 = arith.constant dense<0.000000e+00> : vector<2x128xf32>
    %195 = tpu.matmul %175, %7, %cst_31 {dimension_numbers = #tpu.dot_dimension_numbers<[1], [0], [0], [1], [0, 0, 1, 1], [], []>} : vector<2x32xf32>, vector<32x128xf32>, vector<2x128xf32> -> vector<2x128xf32>
    %196 = arith.addf %194, %195 : vector<2x128xf32>
    %197 = arith.negf %196 : vector<2x128xf32>
    %198 = math.exp %197 : vector<2x128xf32>
    %cst_32 = arith.constant 1.000000e+00 : f32
    %199 = vector.broadcast %cst_32 : f32 to vector<2x128xf32>
    %200 = arith.addf %199, %198 : vector<2x128xf32>
    %201 = arith.divf %199, %200 : vector<2x128xf32>
    %202 = math.tanh %196 : vector<2x128xf32>
    %203 = vector.extract_strided_slice %201 {offsets = [0, 0], sizes = [2, 32], strides = [1, 1]} : vector<2x128xf32> to vector<2x32xf32>
    %204 = vector.extract_strided_slice %201 {offsets = [0, 32], sizes = [2, 32], strides = [1, 1]} : vector<2x128xf32> to vector<2x32xf32>
    %205 = vector.extract_strided_slice %201 {offsets = [0, 96], sizes = [2, 32], strides = [1, 1]} : vector<2x128xf32> to vector<2x32xf32>
    %206 = vector.extract_strided_slice %202 {offsets = [0, 64], sizes = [2, 32], strides = [1, 1]} : vector<2x128xf32> to vector<2x32xf32>
    %207 = arith.mulf %204, %173 : vector<2x32xf32>
    %208 = arith.mulf %203, %206 : vector<2x32xf32>
    %209 = arith.addf %207, %208 : vector<2x32xf32>
    %210 = math.tanh %209 : vector<2x32xf32>
    %211 = arith.mulf %205, %210 : vector<2x32xf32>
    %212 = vector.broadcast %8 : vector<1x32xf32> to vector<2x32xf32>
    %213 = arith.mulf %211, %212 : vector<2x32xf32>
    %cst_33 = arith.constant dense<0.000000e+00> : vector<2xf32>
    %214 = vector.multi_reduction <add>, %213, %cst_33 [1] : vector<2x32xf32> to vector<2xf32>
    %215 = vector.shape_cast %214 : vector<2xf32> to vector<2x1xf32>
    %216 = vector.broadcast %0 : f32 to vector<2x1xf32>
    %217 = arith.addf %215, %216 : vector<2x1xf32>
    %218 = arith.maximumf %182, %217 : vector<2x1xf32>
    %219 = arith.subf %182, %218 : vector<2x1xf32>
    %220 = math.exp %219 : vector<2x1xf32>
    %221 = arith.subf %217, %218 : vector<2x1xf32>
    %222 = math.exp %221 : vector<2x1xf32>
    %223 = arith.mulf %220, %188 : vector<2x1xf32>
    %224 = arith.addf %223, %222 : vector<2x1xf32>
    %225 = vector.broadcast %220 : vector<2x1xf32> to vector<2x32xf32>
    %226 = arith.mulf %225, %193 : vector<2x32xf32>
    %227 = vector.broadcast %222 : vector<2x1xf32> to vector<2x32xf32>
    %228 = arith.mulf %227, %211 : vector<2x32xf32>
    %229 = arith.addf %226, %228 : vector<2x32xf32>
    %230 = vector.extract_strided_slice %6 {offsets = [12, 0], sizes = [2, 128], strides = [1, 1]} : vector<16x128xf32> to vector<2x128xf32>
    %cst_34 = arith.constant dense<0.000000e+00> : vector<2x128xf32>
    %231 = tpu.matmul %211, %7, %cst_34 {dimension_numbers = #tpu.dot_dimension_numbers<[1], [0], [0], [1], [0, 0, 1, 1], [], []>} : vector<2x32xf32>, vector<32x128xf32>, vector<2x128xf32> -> vector<2x128xf32>
    %232 = arith.addf %230, %231 : vector<2x128xf32>
    %233 = arith.negf %232 : vector<2x128xf32>
    %234 = math.exp %233 : vector<2x128xf32>
    %cst_35 = arith.constant 1.000000e+00 : f32
    %235 = vector.broadcast %cst_35 : f32 to vector<2x128xf32>
    %236 = arith.addf %235, %234 : vector<2x128xf32>
    %237 = arith.divf %235, %236 : vector<2x128xf32>
    %238 = math.tanh %232 : vector<2x128xf32>
    %239 = vector.extract_strided_slice %237 {offsets = [0, 0], sizes = [2, 32], strides = [1, 1]} : vector<2x128xf32> to vector<2x32xf32>
    %240 = vector.extract_strided_slice %237 {offsets = [0, 32], sizes = [2, 32], strides = [1, 1]} : vector<2x128xf32> to vector<2x32xf32>
    %241 = vector.extract_strided_slice %237 {offsets = [0, 96], sizes = [2, 32], strides = [1, 1]} : vector<2x128xf32> to vector<2x32xf32>
    %242 = vector.extract_strided_slice %238 {offsets = [0, 64], sizes = [2, 32], strides = [1, 1]} : vector<2x128xf32> to vector<2x32xf32>
    %243 = arith.mulf %240, %209 : vector<2x32xf32>
    %244 = arith.mulf %239, %242 : vector<2x32xf32>
    %245 = arith.addf %243, %244 : vector<2x32xf32>
    %246 = math.tanh %245 : vector<2x32xf32>
    %247 = arith.mulf %241, %246 : vector<2x32xf32>
    %248 = vector.broadcast %8 : vector<1x32xf32> to vector<2x32xf32>
    %249 = arith.mulf %247, %248 : vector<2x32xf32>
    %cst_36 = arith.constant dense<0.000000e+00> : vector<2xf32>
    %250 = vector.multi_reduction <add>, %249, %cst_36 [1] : vector<2x32xf32> to vector<2xf32>
    %251 = vector.shape_cast %250 : vector<2xf32> to vector<2x1xf32>
    %252 = vector.broadcast %0 : f32 to vector<2x1xf32>
    %253 = arith.addf %251, %252 : vector<2x1xf32>
    %254 = arith.maximumf %218, %253 : vector<2x1xf32>
    %255 = arith.subf %218, %254 : vector<2x1xf32>
    %256 = math.exp %255 : vector<2x1xf32>
    %257 = arith.subf %253, %254 : vector<2x1xf32>
    %258 = math.exp %257 : vector<2x1xf32>
    %259 = arith.mulf %256, %224 : vector<2x1xf32>
    %260 = arith.addf %259, %258 : vector<2x1xf32>
    %261 = vector.broadcast %256 : vector<2x1xf32> to vector<2x32xf32>
    %262 = arith.mulf %261, %229 : vector<2x32xf32>
    %263 = vector.broadcast %258 : vector<2x1xf32> to vector<2x32xf32>
    %264 = arith.mulf %263, %247 : vector<2x32xf32>
    %265 = arith.addf %262, %264 : vector<2x32xf32>
    %266 = vector.extract_strided_slice %6 {offsets = [14, 0], sizes = [2, 128], strides = [1, 1]} : vector<16x128xf32> to vector<2x128xf32>
    %cst_37 = arith.constant dense<0.000000e+00> : vector<2x128xf32>
    %267 = tpu.matmul %247, %7, %cst_37 {dimension_numbers = #tpu.dot_dimension_numbers<[1], [0], [0], [1], [0, 0, 1, 1], [], []>} : vector<2x32xf32>, vector<32x128xf32>, vector<2x128xf32> -> vector<2x128xf32>
    %268 = arith.addf %266, %267 : vector<2x128xf32>
    %269 = arith.negf %268 : vector<2x128xf32>
    %270 = math.exp %269 : vector<2x128xf32>
    %cst_38 = arith.constant 1.000000e+00 : f32
    %271 = vector.broadcast %cst_38 : f32 to vector<2x128xf32>
    %272 = arith.addf %271, %270 : vector<2x128xf32>
    %273 = arith.divf %271, %272 : vector<2x128xf32>
    %274 = math.tanh %268 : vector<2x128xf32>
    %275 = vector.extract_strided_slice %273 {offsets = [0, 0], sizes = [2, 32], strides = [1, 1]} : vector<2x128xf32> to vector<2x32xf32>
    %276 = vector.extract_strided_slice %273 {offsets = [0, 32], sizes = [2, 32], strides = [1, 1]} : vector<2x128xf32> to vector<2x32xf32>
    %277 = vector.extract_strided_slice %273 {offsets = [0, 96], sizes = [2, 32], strides = [1, 1]} : vector<2x128xf32> to vector<2x32xf32>
    %278 = vector.extract_strided_slice %274 {offsets = [0, 64], sizes = [2, 32], strides = [1, 1]} : vector<2x128xf32> to vector<2x32xf32>
    %279 = arith.mulf %276, %245 : vector<2x32xf32>
    %280 = arith.mulf %275, %278 : vector<2x32xf32>
    %281 = arith.addf %279, %280 : vector<2x32xf32>
    %282 = math.tanh %281 : vector<2x32xf32>
    %283 = arith.mulf %277, %282 : vector<2x32xf32>
    %284 = vector.broadcast %8 : vector<1x32xf32> to vector<2x32xf32>
    %285 = arith.mulf %283, %284 : vector<2x32xf32>
    %cst_39 = arith.constant dense<0.000000e+00> : vector<2xf32>
    %286 = vector.multi_reduction <add>, %285, %cst_39 [1] : vector<2x32xf32> to vector<2xf32>
    %287 = vector.shape_cast %286 : vector<2xf32> to vector<2x1xf32>
    %288 = vector.broadcast %0 : f32 to vector<2x1xf32>
    %289 = arith.addf %287, %288 : vector<2x1xf32>
    %290 = arith.maximumf %254, %289 : vector<2x1xf32>
    %291 = arith.subf %254, %290 : vector<2x1xf32>
    %292 = math.exp %291 : vector<2x1xf32>
    %293 = arith.subf %289, %290 : vector<2x1xf32>
    %294 = math.exp %293 : vector<2x1xf32>
    %295 = arith.mulf %292, %260 : vector<2x1xf32>
    %296 = arith.addf %295, %294 : vector<2x1xf32>
    %297 = vector.broadcast %292 : vector<2x1xf32> to vector<2x32xf32>
    %298 = arith.mulf %297, %265 : vector<2x32xf32>
    %299 = vector.broadcast %294 : vector<2x1xf32> to vector<2x32xf32>
    %300 = arith.mulf %299, %283 : vector<2x32xf32>
    %301 = arith.addf %298, %300 : vector<2x32xf32>
    %302 = tpu.reciprocal %296 {approx = true} : vector<2x1xf32> -> vector<2x1xf32>
    %303 = vector.broadcast %302 : vector<2x1xf32> to vector<2x32xf32>
    %304 = arith.mulf %301, %303 : vector<2x32xf32>
    %c0_40 = arith.constant 0 : index
    %c0_41 = arith.constant 0 : index
    %305 = memref.load %arg19[%c0_40, %c0_41] : memref<1x1xf32, #tpu.memory_space<smem>>
    %c0_42 = arith.constant 0 : index
    %c0_43 = arith.constant 0 : index
    %306 = vector.load %arg1[%c0_42, %c0_43] : memref<16x16xf32, #tpu.memory_space<vmem>>, vector<16x16xf32>
    %c0_44 = arith.constant 0 : index
    %c0_45 = arith.constant 0 : index
    %307 = vector.load %arg6[%c0_44, %c0_45] : memref<16x128xf32, #tpu.memory_space<vmem>>, vector<16x128xf32>
    %cst_46 = arith.constant dense<0.000000e+00> : vector<16x128xf32>
    %308 = tpu.matmul %306, %307, %cst_46 {dimension_numbers = #tpu.dot_dimension_numbers<[1], [0], [0], [1], [0, 0, 1, 1], [], []>} : vector<16x16xf32>, vector<16x128xf32>, vector<16x128xf32> -> vector<16x128xf32>
    %c0_47 = arith.constant 0 : index
    %c0_48 = arith.constant 0 : index
    %309 = vector.load %arg8[%c0_47, %c0_48] : memref<1x128xf32, #tpu.memory_space<vmem>>, vector<1x128xf32>
    %310 = vector.broadcast %309 : vector<1x128xf32> to vector<16x128xf32>
    %311 = arith.addf %308, %310 : vector<16x128xf32>
    %c0_49 = arith.constant 0 : index
    %c0_50 = arith.constant 0 : index
    %312 = vector.load %arg7[%c0_49, %c0_50] : memref<32x128xf32, #tpu.memory_space<vmem>>, vector<32x128xf32>
    %c0_51 = arith.constant 0 : index
    %c0_52 = arith.constant 0 : index
    %313 = vector.load %arg9[%c0_51, %c0_52] : memref<1x32xf32, #tpu.memory_space<vmem>>, vector<1x32xf32>
    %cst_53 = arith.constant 0.000000e+00 : f32
    %314 = vector.broadcast %cst_53 : f32 to vector<2x32xf32>
    %cst_54 = arith.constant 0.000000e+00 : f32
    %315 = vector.broadcast %cst_54 : f32 to vector<2x32xf32>
    %cst_55 = arith.constant -1.000000e+30 : f32
    %316 = vector.broadcast %cst_55 : f32 to vector<2x1xf32>
    %cst_56 = arith.constant 0.000000e+00 : f32
    %317 = vector.broadcast %cst_56 : f32 to vector<2x1xf32>
    %cst_57 = arith.constant 0.000000e+00 : f32
    %318 = vector.broadcast %cst_57 : f32 to vector<2x32xf32>
    %319 = vector.extract_strided_slice %311 {offsets = [0, 0], sizes = [2, 128], strides = [1, 1]} : vector<16x128xf32> to vector<2x128xf32>
    %cst_58 = arith.constant dense<0.000000e+00> : vector<2x128xf32>
    %320 = tpu.matmul %314, %312, %cst_58 {dimension_numbers = #tpu.dot_dimension_numbers<[1], [0], [0], [1], [0, 0, 1, 1], [], []>} : vector<2x32xf32>, vector<32x128xf32>, vector<2x128xf32> -> vector<2x128xf32>
    %321 = arith.addf %319, %320 : vector<2x128xf32>
    %322 = arith.negf %321 : vector<2x128xf32>
    %323 = math.exp %322 : vector<2x128xf32>
    %cst_59 = arith.constant 1.000000e+00 : f32
    %324 = vector.broadcast %cst_59 : f32 to vector<2x128xf32>
    %325 = arith.addf %324, %323 : vector<2x128xf32>
    %326 = arith.divf %324, %325 : vector<2x128xf32>
    %327 = math.tanh %321 : vector<2x128xf32>
    %328 = vector.extract_strided_slice %326 {offsets = [0, 0], sizes = [2, 32], strides = [1, 1]} : vector<2x128xf32> to vector<2x32xf32>
    %329 = vector.extract_strided_slice %326 {offsets = [0, 32], sizes = [2, 32], strides = [1, 1]} : vector<2x128xf32> to vector<2x32xf32>
    %330 = vector.extract_strided_slice %326 {offsets = [0, 96], sizes = [2, 32], strides = [1, 1]} : vector<2x128xf32> to vector<2x32xf32>
    %331 = vector.extract_strided_slice %327 {offsets = [0, 64], sizes = [2, 32], strides = [1, 1]} : vector<2x128xf32> to vector<2x32xf32>
    %332 = arith.mulf %329, %315 : vector<2x32xf32>
    %333 = arith.mulf %328, %331 : vector<2x32xf32>
    %334 = arith.addf %332, %333 : vector<2x32xf32>
    %335 = math.tanh %334 : vector<2x32xf32>
    %336 = arith.mulf %330, %335 : vector<2x32xf32>
    %337 = vector.broadcast %313 : vector<1x32xf32> to vector<2x32xf32>
    %338 = arith.mulf %336, %337 : vector<2x32xf32>
    %cst_60 = arith.constant dense<0.000000e+00> : vector<2xf32>
    %339 = vector.multi_reduction <add>, %338, %cst_60 [1] : vector<2x32xf32> to vector<2xf32>
    %340 = vector.shape_cast %339 : vector<2xf32> to vector<2x1xf32>
    %341 = vector.broadcast %305 : f32 to vector<2x1xf32>
    %342 = arith.addf %340, %341 : vector<2x1xf32>
    %343 = arith.maximumf %316, %342 : vector<2x1xf32>
    %344 = arith.subf %316, %343 : vector<2x1xf32>
    %345 = math.exp %344 : vector<2x1xf32>
    %346 = arith.subf %342, %343 : vector<2x1xf32>
    %347 = math.exp %346 : vector<2x1xf32>
    %348 = arith.mulf %345, %317 : vector<2x1xf32>
    %349 = arith.addf %348, %347 : vector<2x1xf32>
    %350 = vector.broadcast %345 : vector<2x1xf32> to vector<2x32xf32>
    %351 = arith.mulf %350, %318 : vector<2x32xf32>
    %352 = vector.broadcast %347 : vector<2x1xf32> to vector<2x32xf32>
    %353 = arith.mulf %352, %336 : vector<2x32xf32>
    %354 = arith.addf %351, %353 : vector<2x32xf32>
    %355 = vector.extract_strided_slice %311 {offsets = [2, 0], sizes = [2, 128], strides = [1, 1]} : vector<16x128xf32> to vector<2x128xf32>
    %cst_61 = arith.constant dense<0.000000e+00> : vector<2x128xf32>
    %356 = tpu.matmul %336, %312, %cst_61 {dimension_numbers = #tpu.dot_dimension_numbers<[1], [0], [0], [1], [0, 0, 1, 1], [], []>} : vector<2x32xf32>, vector<32x128xf32>, vector<2x128xf32> -> vector<2x128xf32>
    %357 = arith.addf %355, %356 : vector<2x128xf32>
    %358 = arith.negf %357 : vector<2x128xf32>
    %359 = math.exp %358 : vector<2x128xf32>
    %cst_62 = arith.constant 1.000000e+00 : f32
    %360 = vector.broadcast %cst_62 : f32 to vector<2x128xf32>
    %361 = arith.addf %360, %359 : vector<2x128xf32>
    %362 = arith.divf %360, %361 : vector<2x128xf32>
    %363 = math.tanh %357 : vector<2x128xf32>
    %364 = vector.extract_strided_slice %362 {offsets = [0, 0], sizes = [2, 32], strides = [1, 1]} : vector<2x128xf32> to vector<2x32xf32>
    %365 = vector.extract_strided_slice %362 {offsets = [0, 32], sizes = [2, 32], strides = [1, 1]} : vector<2x128xf32> to vector<2x32xf32>
    %366 = vector.extract_strided_slice %362 {offsets = [0, 96], sizes = [2, 32], strides = [1, 1]} : vector<2x128xf32> to vector<2x32xf32>
    %367 = vector.extract_strided_slice %363 {offsets = [0, 64], sizes = [2, 32], strides = [1, 1]} : vector<2x128xf32> to vector<2x32xf32>
    %368 = arith.mulf %365, %334 : vector<2x32xf32>
    %369 = arith.mulf %364, %367 : vector<2x32xf32>
    %370 = arith.addf %368, %369 : vector<2x32xf32>
    %371 = math.tanh %370 : vector<2x32xf32>
    %372 = arith.mulf %366, %371 : vector<2x32xf32>
    %373 = vector.broadcast %313 : vector<1x32xf32> to vector<2x32xf32>
    %374 = arith.mulf %372, %373 : vector<2x32xf32>
    %cst_63 = arith.constant dense<0.000000e+00> : vector<2xf32>
    %375 = vector.multi_reduction <add>, %374, %cst_63 [1] : vector<2x32xf32> to vector<2xf32>
    %376 = vector.shape_cast %375 : vector<2xf32> to vector<2x1xf32>
    %377 = vector.broadcast %305 : f32 to vector<2x1xf32>
    %378 = arith.addf %376, %377 : vector<2x1xf32>
    %379 = arith.maximumf %343, %378 : vector<2x1xf32>
    %380 = arith.subf %343, %379 : vector<2x1xf32>
    %381 = math.exp %380 : vector<2x1xf32>
    %382 = arith.subf %378, %379 : vector<2x1xf32>
    %383 = math.exp %382 : vector<2x1xf32>
    %384 = arith.mulf %381, %349 : vector<2x1xf32>
    %385 = arith.addf %384, %383 : vector<2x1xf32>
    %386 = vector.broadcast %381 : vector<2x1xf32> to vector<2x32xf32>
    %387 = arith.mulf %386, %354 : vector<2x32xf32>
    %388 = vector.broadcast %383 : vector<2x1xf32> to vector<2x32xf32>
    %389 = arith.mulf %388, %372 : vector<2x32xf32>
    %390 = arith.addf %387, %389 : vector<2x32xf32>
    %391 = vector.extract_strided_slice %311 {offsets = [4, 0], sizes = [2, 128], strides = [1, 1]} : vector<16x128xf32> to vector<2x128xf32>
    %cst_64 = arith.constant dense<0.000000e+00> : vector<2x128xf32>
    %392 = tpu.matmul %372, %312, %cst_64 {dimension_numbers = #tpu.dot_dimension_numbers<[1], [0], [0], [1], [0, 0, 1, 1], [], []>} : vector<2x32xf32>, vector<32x128xf32>, vector<2x128xf32> -> vector<2x128xf32>
    %393 = arith.addf %391, %392 : vector<2x128xf32>
    %394 = arith.negf %393 : vector<2x128xf32>
    %395 = math.exp %394 : vector<2x128xf32>
    %cst_65 = arith.constant 1.000000e+00 : f32
    %396 = vector.broadcast %cst_65 : f32 to vector<2x128xf32>
    %397 = arith.addf %396, %395 : vector<2x128xf32>
    %398 = arith.divf %396, %397 : vector<2x128xf32>
    %399 = math.tanh %393 : vector<2x128xf32>
    %400 = vector.extract_strided_slice %398 {offsets = [0, 0], sizes = [2, 32], strides = [1, 1]} : vector<2x128xf32> to vector<2x32xf32>
    %401 = vector.extract_strided_slice %398 {offsets = [0, 32], sizes = [2, 32], strides = [1, 1]} : vector<2x128xf32> to vector<2x32xf32>
    %402 = vector.extract_strided_slice %398 {offsets = [0, 96], sizes = [2, 32], strides = [1, 1]} : vector<2x128xf32> to vector<2x32xf32>
    %403 = vector.extract_strided_slice %399 {offsets = [0, 64], sizes = [2, 32], strides = [1, 1]} : vector<2x128xf32> to vector<2x32xf32>
    %404 = arith.mulf %401, %370 : vector<2x32xf32>
    %405 = arith.mulf %400, %403 : vector<2x32xf32>
    %406 = arith.addf %404, %405 : vector<2x32xf32>
    %407 = math.tanh %406 : vector<2x32xf32>
    %408 = arith.mulf %402, %407 : vector<2x32xf32>
    %409 = vector.broadcast %313 : vector<1x32xf32> to vector<2x32xf32>
    %410 = arith.mulf %408, %409 : vector<2x32xf32>
    %cst_66 = arith.constant dense<0.000000e+00> : vector<2xf32>
    %411 = vector.multi_reduction <add>, %410, %cst_66 [1] : vector<2x32xf32> to vector<2xf32>
    %412 = vector.shape_cast %411 : vector<2xf32> to vector<2x1xf32>
    %413 = vector.broadcast %305 : f32 to vector<2x1xf32>
    %414 = arith.addf %412, %413 : vector<2x1xf32>
    %415 = arith.maximumf %379, %414 : vector<2x1xf32>
    %416 = arith.subf %379, %415 : vector<2x1xf32>
    %417 = math.exp %416 : vector<2x1xf32>
    %418 = arith.subf %414, %415 : vector<2x1xf32>
    %419 = math.exp %418 : vector<2x1xf32>
    %420 = arith.mulf %417, %385 : vector<2x1xf32>
    %421 = arith.addf %420, %419 : vector<2x1xf32>
    %422 = vector.broadcast %417 : vector<2x1xf32> to vector<2x32xf32>
    %423 = arith.mulf %422, %390 : vector<2x32xf32>
    %424 = vector.broadcast %419 : vector<2x1xf32> to vector<2x32xf32>
    %425 = arith.mulf %424, %408 : vector<2x32xf32>
    %426 = arith.addf %423, %425 : vector<2x32xf32>
    %427 = vector.extract_strided_slice %311 {offsets = [6, 0], sizes = [2, 128], strides = [1, 1]} : vector<16x128xf32> to vector<2x128xf32>
    %cst_67 = arith.constant dense<0.000000e+00> : vector<2x128xf32>
    %428 = tpu.matmul %408, %312, %cst_67 {dimension_numbers = #tpu.dot_dimension_numbers<[1], [0], [0], [1], [0, 0, 1, 1], [], []>} : vector<2x32xf32>, vector<32x128xf32>, vector<2x128xf32> -> vector<2x128xf32>
    %429 = arith.addf %427, %428 : vector<2x128xf32>
    %430 = arith.negf %429 : vector<2x128xf32>
    %431 = math.exp %430 : vector<2x128xf32>
    %cst_68 = arith.constant 1.000000e+00 : f32
    %432 = vector.broadcast %cst_68 : f32 to vector<2x128xf32>
    %433 = arith.addf %432, %431 : vector<2x128xf32>
    %434 = arith.divf %432, %433 : vector<2x128xf32>
    %435 = math.tanh %429 : vector<2x128xf32>
    %436 = vector.extract_strided_slice %434 {offsets = [0, 0], sizes = [2, 32], strides = [1, 1]} : vector<2x128xf32> to vector<2x32xf32>
    %437 = vector.extract_strided_slice %434 {offsets = [0, 32], sizes = [2, 32], strides = [1, 1]} : vector<2x128xf32> to vector<2x32xf32>
    %438 = vector.extract_strided_slice %434 {offsets = [0, 96], sizes = [2, 32], strides = [1, 1]} : vector<2x128xf32> to vector<2x32xf32>
    %439 = vector.extract_strided_slice %435 {offsets = [0, 64], sizes = [2, 32], strides = [1, 1]} : vector<2x128xf32> to vector<2x32xf32>
    %440 = arith.mulf %437, %406 : vector<2x32xf32>
    %441 = arith.mulf %436, %439 : vector<2x32xf32>
    %442 = arith.addf %440, %441 : vector<2x32xf32>
    %443 = math.tanh %442 : vector<2x32xf32>
    %444 = arith.mulf %438, %443 : vector<2x32xf32>
    %445 = vector.broadcast %313 : vector<1x32xf32> to vector<2x32xf32>
    %446 = arith.mulf %444, %445 : vector<2x32xf32>
    %cst_69 = arith.constant dense<0.000000e+00> : vector<2xf32>
    %447 = vector.multi_reduction <add>, %446, %cst_69 [1] : vector<2x32xf32> to vector<2xf32>
    %448 = vector.shape_cast %447 : vector<2xf32> to vector<2x1xf32>
    %449 = vector.broadcast %305 : f32 to vector<2x1xf32>
    %450 = arith.addf %448, %449 : vector<2x1xf32>
    %451 = arith.maximumf %415, %450 : vector<2x1xf32>
    %452 = arith.subf %415, %451 : vector<2x1xf32>
    %453 = math.exp %452 : vector<2x1xf32>
    %454 = arith.subf %450, %451 : vector<2x1xf32>
    %455 = math.exp %454 : vector<2x1xf32>
    %456 = arith.mulf %453, %421 : vector<2x1xf32>
    %457 = arith.addf %456, %455 : vector<2x1xf32>
    %458 = vector.broadcast %453 : vector<2x1xf32> to vector<2x32xf32>
    %459 = arith.mulf %458, %426 : vector<2x32xf32>
    %460 = vector.broadcast %455 : vector<2x1xf32> to vector<2x32xf32>
    %461 = arith.mulf %460, %444 : vector<2x32xf32>
    %462 = arith.addf %459, %461 : vector<2x32xf32>
    %463 = vector.extract_strided_slice %311 {offsets = [8, 0], sizes = [2, 128], strides = [1, 1]} : vector<16x128xf32> to vector<2x128xf32>
    %cst_70 = arith.constant dense<0.000000e+00> : vector<2x128xf32>
    %464 = tpu.matmul %444, %312, %cst_70 {dimension_numbers = #tpu.dot_dimension_numbers<[1], [0], [0], [1], [0, 0, 1, 1], [], []>} : vector<2x32xf32>, vector<32x128xf32>, vector<2x128xf32> -> vector<2x128xf32>
    %465 = arith.addf %463, %464 : vector<2x128xf32>
    %466 = arith.negf %465 : vector<2x128xf32>
    %467 = math.exp %466 : vector<2x128xf32>
    %cst_71 = arith.constant 1.000000e+00 : f32
    %468 = vector.broadcast %cst_71 : f32 to vector<2x128xf32>
    %469 = arith.addf %468, %467 : vector<2x128xf32>
    %470 = arith.divf %468, %469 : vector<2x128xf32>
    %471 = math.tanh %465 : vector<2x128xf32>
    %472 = vector.extract_strided_slice %470 {offsets = [0, 0], sizes = [2, 32], strides = [1, 1]} : vector<2x128xf32> to vector<2x32xf32>
    %473 = vector.extract_strided_slice %470 {offsets = [0, 32], sizes = [2, 32], strides = [1, 1]} : vector<2x128xf32> to vector<2x32xf32>
    %474 = vector.extract_strided_slice %470 {offsets = [0, 96], sizes = [2, 32], strides = [1, 1]} : vector<2x128xf32> to vector<2x32xf32>
    %475 = vector.extract_strided_slice %471 {offsets = [0, 64], sizes = [2, 32], strides = [1, 1]} : vector<2x128xf32> to vector<2x32xf32>
    %476 = arith.mulf %473, %442 : vector<2x32xf32>
    %477 = arith.mulf %472, %475 : vector<2x32xf32>
    %478 = arith.addf %476, %477 : vector<2x32xf32>
    %479 = math.tanh %478 : vector<2x32xf32>
    %480 = arith.mulf %474, %479 : vector<2x32xf32>
    %481 = vector.broadcast %313 : vector<1x32xf32> to vector<2x32xf32>
    %482 = arith.mulf %480, %481 : vector<2x32xf32>
    %cst_72 = arith.constant dense<0.000000e+00> : vector<2xf32>
    %483 = vector.multi_reduction <add>, %482, %cst_72 [1] : vector<2x32xf32> to vector<2xf32>
    %484 = vector.shape_cast %483 : vector<2xf32> to vector<2x1xf32>
    %485 = vector.broadcast %305 : f32 to vector<2x1xf32>
    %486 = arith.addf %484, %485 : vector<2x1xf32>
    %487 = arith.maximumf %451, %486 : vector<2x1xf32>
    %488 = arith.subf %451, %487 : vector<2x1xf32>
    %489 = math.exp %488 : vector<2x1xf32>
    %490 = arith.subf %486, %487 : vector<2x1xf32>
    %491 = math.exp %490 : vector<2x1xf32>
    %492 = arith.mulf %489, %457 : vector<2x1xf32>
    %493 = arith.addf %492, %491 : vector<2x1xf32>
    %494 = vector.broadcast %489 : vector<2x1xf32> to vector<2x32xf32>
    %495 = arith.mulf %494, %462 : vector<2x32xf32>
    %496 = vector.broadcast %491 : vector<2x1xf32> to vector<2x32xf32>
    %497 = arith.mulf %496, %480 : vector<2x32xf32>
    %498 = arith.addf %495, %497 : vector<2x32xf32>
    %499 = vector.extract_strided_slice %311 {offsets = [10, 0], sizes = [2, 128], strides = [1, 1]} : vector<16x128xf32> to vector<2x128xf32>
    %cst_73 = arith.constant dense<0.000000e+00> : vector<2x128xf32>
    %500 = tpu.matmul %480, %312, %cst_73 {dimension_numbers = #tpu.dot_dimension_numbers<[1], [0], [0], [1], [0, 0, 1, 1], [], []>} : vector<2x32xf32>, vector<32x128xf32>, vector<2x128xf32> -> vector<2x128xf32>
    %501 = arith.addf %499, %500 : vector<2x128xf32>
    %502 = arith.negf %501 : vector<2x128xf32>
    %503 = math.exp %502 : vector<2x128xf32>
    %cst_74 = arith.constant 1.000000e+00 : f32
    %504 = vector.broadcast %cst_74 : f32 to vector<2x128xf32>
    %505 = arith.addf %504, %503 : vector<2x128xf32>
    %506 = arith.divf %504, %505 : vector<2x128xf32>
    %507 = math.tanh %501 : vector<2x128xf32>
    %508 = vector.extract_strided_slice %506 {offsets = [0, 0], sizes = [2, 32], strides = [1, 1]} : vector<2x128xf32> to vector<2x32xf32>
    %509 = vector.extract_strided_slice %506 {offsets = [0, 32], sizes = [2, 32], strides = [1, 1]} : vector<2x128xf32> to vector<2x32xf32>
    %510 = vector.extract_strided_slice %506 {offsets = [0, 96], sizes = [2, 32], strides = [1, 1]} : vector<2x128xf32> to vector<2x32xf32>
    %511 = vector.extract_strided_slice %507 {offsets = [0, 64], sizes = [2, 32], strides = [1, 1]} : vector<2x128xf32> to vector<2x32xf32>
    %512 = arith.mulf %509, %478 : vector<2x32xf32>
    %513 = arith.mulf %508, %511 : vector<2x32xf32>
    %514 = arith.addf %512, %513 : vector<2x32xf32>
    %515 = math.tanh %514 : vector<2x32xf32>
    %516 = arith.mulf %510, %515 : vector<2x32xf32>
    %517 = vector.broadcast %313 : vector<1x32xf32> to vector<2x32xf32>
    %518 = arith.mulf %516, %517 : vector<2x32xf32>
    %cst_75 = arith.constant dense<0.000000e+00> : vector<2xf32>
    %519 = vector.multi_reduction <add>, %518, %cst_75 [1] : vector<2x32xf32> to vector<2xf32>
    %520 = vector.shape_cast %519 : vector<2xf32> to vector<2x1xf32>
    %521 = vector.broadcast %305 : f32 to vector<2x1xf32>
    %522 = arith.addf %520, %521 : vector<2x1xf32>
    %523 = arith.maximumf %487, %522 : vector<2x1xf32>
    %524 = arith.subf %487, %523 : vector<2x1xf32>
    %525 = math.exp %524 : vector<2x1xf32>
    %526 = arith.subf %522, %523 : vector<2x1xf32>
    %527 = math.exp %526 : vector<2x1xf32>
    %528 = arith.mulf %525, %493 : vector<2x1xf32>
    %529 = arith.addf %528, %527 : vector<2x1xf32>
    %530 = vector.broadcast %525 : vector<2x1xf32> to vector<2x32xf32>
    %531 = arith.mulf %530, %498 : vector<2x32xf32>
    %532 = vector.broadcast %527 : vector<2x1xf32> to vector<2x32xf32>
    %533 = arith.mulf %532, %516 : vector<2x32xf32>
    %534 = arith.addf %531, %533 : vector<2x32xf32>
    %535 = vector.extract_strided_slice %311 {offsets = [12, 0], sizes = [2, 128], strides = [1, 1]} : vector<16x128xf32> to vector<2x128xf32>
    %cst_76 = arith.constant dense<0.000000e+00> : vector<2x128xf32>
    %536 = tpu.matmul %516, %312, %cst_76 {dimension_numbers = #tpu.dot_dimension_numbers<[1], [0], [0], [1], [0, 0, 1, 1], [], []>} : vector<2x32xf32>, vector<32x128xf32>, vector<2x128xf32> -> vector<2x128xf32>
    %537 = arith.addf %535, %536 : vector<2x128xf32>
    %538 = arith.negf %537 : vector<2x128xf32>
    %539 = math.exp %538 : vector<2x128xf32>
    %cst_77 = arith.constant 1.000000e+00 : f32
    %540 = vector.broadcast %cst_77 : f32 to vector<2x128xf32>
    %541 = arith.addf %540, %539 : vector<2x128xf32>
    %542 = arith.divf %540, %541 : vector<2x128xf32>
    %543 = math.tanh %537 : vector<2x128xf32>
    %544 = vector.extract_strided_slice %542 {offsets = [0, 0], sizes = [2, 32], strides = [1, 1]} : vector<2x128xf32> to vector<2x32xf32>
    %545 = vector.extract_strided_slice %542 {offsets = [0, 32], sizes = [2, 32], strides = [1, 1]} : vector<2x128xf32> to vector<2x32xf32>
    %546 = vector.extract_strided_slice %542 {offsets = [0, 96], sizes = [2, 32], strides = [1, 1]} : vector<2x128xf32> to vector<2x32xf32>
    %547 = vector.extract_strided_slice %543 {offsets = [0, 64], sizes = [2, 32], strides = [1, 1]} : vector<2x128xf32> to vector<2x32xf32>
    %548 = arith.mulf %545, %514 : vector<2x32xf32>
    %549 = arith.mulf %544, %547 : vector<2x32xf32>
    %550 = arith.addf %548, %549 : vector<2x32xf32>
    %551 = math.tanh %550 : vector<2x32xf32>
    %552 = arith.mulf %546, %551 : vector<2x32xf32>
    %553 = vector.broadcast %313 : vector<1x32xf32> to vector<2x32xf32>
    %554 = arith.mulf %552, %553 : vector<2x32xf32>
    %cst_78 = arith.constant dense<0.000000e+00> : vector<2xf32>
    %555 = vector.multi_reduction <add>, %554, %cst_78 [1] : vector<2x32xf32> to vector<2xf32>
    %556 = vector.shape_cast %555 : vector<2xf32> to vector<2x1xf32>
    %557 = vector.broadcast %305 : f32 to vector<2x1xf32>
    %558 = arith.addf %556, %557 : vector<2x1xf32>
    %559 = arith.maximumf %523, %558 : vector<2x1xf32>
    %560 = arith.subf %523, %559 : vector<2x1xf32>
    %561 = math.exp %560 : vector<2x1xf32>
    %562 = arith.subf %558, %559 : vector<2x1xf32>
    %563 = math.exp %562 : vector<2x1xf32>
    %564 = arith.mulf %561, %529 : vector<2x1xf32>
    %565 = arith.addf %564, %563 : vector<2x1xf32>
    %566 = vector.broadcast %561 : vector<2x1xf32> to vector<2x32xf32>
    %567 = arith.mulf %566, %534 : vector<2x32xf32>
    %568 = vector.broadcast %563 : vector<2x1xf32> to vector<2x32xf32>
    %569 = arith.mulf %568, %552 : vector<2x32xf32>
    %570 = arith.addf %567, %569 : vector<2x32xf32>
    %571 = vector.extract_strided_slice %311 {offsets = [14, 0], sizes = [2, 128], strides = [1, 1]} : vector<16x128xf32> to vector<2x128xf32>
    %cst_79 = arith.constant dense<0.000000e+00> : vector<2x128xf32>
    %572 = tpu.matmul %552, %312, %cst_79 {dimension_numbers = #tpu.dot_dimension_numbers<[1], [0], [0], [1], [0, 0, 1, 1], [], []>} : vector<2x32xf32>, vector<32x128xf32>, vector<2x128xf32> -> vector<2x128xf32>
    %573 = arith.addf %571, %572 : vector<2x128xf32>
    %574 = arith.negf %573 : vector<2x128xf32>
    %575 = math.exp %574 : vector<2x128xf32>
    %cst_80 = arith.constant 1.000000e+00 : f32
    %576 = vector.broadcast %cst_80 : f32 to vector<2x128xf32>
    %577 = arith.addf %576, %575 : vector<2x128xf32>
    %578 = arith.divf %576, %577 : vector<2x128xf32>
    %579 = math.tanh %573 : vector<2x128xf32>
    %580 = vector.extract_strided_slice %578 {offsets = [0, 0], sizes = [2, 32], strides = [1, 1]} : vector<2x128xf32> to vector<2x32xf32>
    %581 = vector.extract_strided_slice %578 {offsets = [0, 32], sizes = [2, 32], strides = [1, 1]} : vector<2x128xf32> to vector<2x32xf32>
    %582 = vector.extract_strided_slice %578 {offsets = [0, 96], sizes = [2, 32], strides = [1, 1]} : vector<2x128xf32> to vector<2x32xf32>
    %583 = vector.extract_strided_slice %579 {offsets = [0, 64], sizes = [2, 32], strides = [1, 1]} : vector<2x128xf32> to vector<2x32xf32>
    %584 = arith.mulf %581, %550 : vector<2x32xf32>
    %585 = arith.mulf %580, %583 : vector<2x32xf32>
    %586 = arith.addf %584, %585 : vector<2x32xf32>
    %587 = math.tanh %586 : vector<2x32xf32>
    %588 = arith.mulf %582, %587 : vector<2x32xf32>
    %589 = vector.broadcast %313 : vector<1x32xf32> to vector<2x32xf32>
    %590 = arith.mulf %588, %589 : vector<2x32xf32>
    %cst_81 = arith.constant dense<0.000000e+00> : vector<2xf32>
    %591 = vector.multi_reduction <add>, %590, %cst_81 [1] : vector<2x32xf32> to vector<2xf32>
    %592 = vector.shape_cast %591 : vector<2xf32> to vector<2x1xf32>
    %593 = vector.broadcast %305 : f32 to vector<2x1xf32>
    %594 = arith.addf %592, %593 : vector<2x1xf32>
    %595 = arith.maximumf %559, %594 : vector<2x1xf32>
    %596 = arith.subf %559, %595 : vector<2x1xf32>
    %597 = math.exp %596 : vector<2x1xf32>
    %598 = arith.subf %594, %595 : vector<2x1xf32>
    %599 = math.exp %598 : vector<2x1xf32>
    %600 = arith.mulf %597, %565 : vector<2x1xf32>
    %601 = arith.addf %600, %599 : vector<2x1xf32>
    %602 = vector.broadcast %597 : vector<2x1xf32> to vector<2x32xf32>
    %603 = arith.mulf %602, %570 : vector<2x32xf32>
    %604 = vector.broadcast %599 : vector<2x1xf32> to vector<2x32xf32>
    %605 = arith.mulf %604, %588 : vector<2x32xf32>
    %606 = arith.addf %603, %605 : vector<2x32xf32>
    %607 = tpu.reciprocal %601 {approx = true} : vector<2x1xf32> -> vector<2x1xf32>
    %608 = vector.broadcast %607 : vector<2x1xf32> to vector<2x32xf32>
    %609 = arith.mulf %606, %608 : vector<2x32xf32>
    %c0_82 = arith.constant 0 : index
    %c0_83 = arith.constant 0 : index
    %610 = vector.load %arg10[%c0_82, %c0_83] : memref<64x32xf32, #tpu.memory_space<vmem>>, vector<64x32xf32>
    %611 = vector.extract_strided_slice %610 {offsets = [0, 0], sizes = [32, 32], strides = [1, 1]} : vector<64x32xf32> to vector<32x32xf32>
    %cst_84 = arith.constant dense<0.000000e+00> : vector<2x32xf32>
    %612 = tpu.matmul %304, %611, %cst_84 {dimension_numbers = #tpu.dot_dimension_numbers<[1], [0], [0], [1], [0, 0, 1, 1], [], []>} : vector<2x32xf32>, vector<32x32xf32>, vector<2x32xf32> -> vector<2x32xf32>
    %613 = vector.extract_strided_slice %610 {offsets = [32, 0], sizes = [32, 32], strides = [1, 1]} : vector<64x32xf32> to vector<32x32xf32>
    %cst_85 = arith.constant dense<0.000000e+00> : vector<2x32xf32>
    %614 = tpu.matmul %609, %613, %cst_85 {dimension_numbers = #tpu.dot_dimension_numbers<[1], [0], [0], [1], [0, 0, 1, 1], [], []>} : vector<2x32xf32>, vector<32x32xf32>, vector<2x32xf32> -> vector<2x32xf32>
    %615 = arith.addf %612, %614 : vector<2x32xf32>
    %c0_86 = arith.constant 0 : index
    %c0_87 = arith.constant 0 : index
    %616 = vector.load %arg11[%c0_86, %c0_87] : memref<1x32xf32, #tpu.memory_space<vmem>>, vector<1x32xf32>
    %617 = vector.broadcast %616 : vector<1x32xf32> to vector<2x32xf32>
    %618 = arith.addf %615, %617 : vector<2x32xf32>
    %cst_88 = arith.constant 0.000000e+00 : f32
    %619 = vector.broadcast %cst_88 : f32 to vector<2x32xf32>
    %620 = arith.maximumf %618, %619 : vector<2x32xf32>
    %c0_89 = arith.constant 0 : index
    %c0_90 = arith.constant 0 : index
    %621 = vector.load %arg12[%c0_89, %c0_90] : memref<32x16xf32, #tpu.memory_space<vmem>>, vector<32x16xf32>
    %cst_91 = arith.constant dense<0.000000e+00> : vector<2x16xf32>
    %622 = tpu.matmul %620, %621, %cst_91 {dimension_numbers = #tpu.dot_dimension_numbers<[1], [0], [0], [1], [0, 0, 1, 1], [], []>} : vector<2x32xf32>, vector<32x16xf32>, vector<2x16xf32> -> vector<2x16xf32>
    %c0_92 = arith.constant 0 : index
    %c0_93 = arith.constant 0 : index
    %623 = vector.load %arg13[%c0_92, %c0_93] : memref<1x16xf32, #tpu.memory_space<vmem>>, vector<1x16xf32>
    %624 = vector.broadcast %623 : vector<1x16xf32> to vector<2x16xf32>
    %625 = arith.addf %622, %624 : vector<2x16xf32>
    %cst_94 = arith.constant 0.000000e+00 : f32
    %626 = vector.broadcast %cst_94 : f32 to vector<2x16xf32>
    %627 = arith.maximumf %625, %626 : vector<2x16xf32>
    %c0_95 = arith.constant 0 : index
    %c0_96 = arith.constant 0 : index
    %628 = vector.load %arg14[%c0_95, %c0_96] : memref<16x8xf32, #tpu.memory_space<vmem>>, vector<16x8xf32>
    %cst_97 = arith.constant dense<0.000000e+00> : vector<2x8xf32>
    %629 = tpu.matmul %627, %628, %cst_97 {dimension_numbers = #tpu.dot_dimension_numbers<[1], [0], [0], [1], [0, 0, 1, 1], [], []>} : vector<2x16xf32>, vector<16x8xf32>, vector<2x8xf32> -> vector<2x8xf32>
    %c0_98 = arith.constant 0 : index
    %c0_99 = arith.constant 0 : index
    %630 = vector.load %arg15[%c0_98, %c0_99] : memref<1x8xf32, #tpu.memory_space<vmem>>, vector<1x8xf32>
    %631 = vector.broadcast %630 : vector<1x8xf32> to vector<2x8xf32>
    %632 = arith.addf %629, %631 : vector<2x8xf32>
    %cst_100 = arith.constant 0.000000e+00 : f32
    %633 = vector.broadcast %cst_100 : f32 to vector<2x8xf32>
    %634 = arith.maximumf %632, %633 : vector<2x8xf32>
    %c0_101 = arith.constant 0 : index
    %c0_102 = arith.constant 0 : index
    %635 = vector.load %arg16[%c0_101, %c0_102] : memref<8x1xf32, #tpu.memory_space<vmem>>, vector<8x1xf32>
    %cst_103 = arith.constant dense<0.000000e+00> : vector<2x1xf32>
    %636 = tpu.matmul %634, %635, %cst_103 {dimension_numbers = #tpu.dot_dimension_numbers<[1], [0], [0], [1], [0, 0, 1, 1], [], []>} : vector<2x8xf32>, vector<8x1xf32>, vector<2x1xf32> -> vector<2x1xf32>
    %c0_104 = arith.constant 0 : index
    %c0_105 = arith.constant 0 : index
    %637 = vector.load %arg17[%c0_104, %c0_105] : memref<1x1xf32, #tpu.memory_space<vmem>>, vector<1x1xf32>
    %638 = vector.broadcast %637 : vector<1x1xf32> to vector<2x1xf32>
    %639 = arith.addf %636, %638 : vector<2x1xf32>
    %c0_106 = arith.constant 0 : index
    %c0_107 = arith.constant 0 : index
    %640 = vector.load %arg20[%c0_106, %c0_107] : memref<2x1xf32, #tpu.memory_space<vmem>>, vector<2x1xf32>
    tpu.vector_store %arg20[%c0_106, %c0_107], %639 {strides = array<i32>} : memref<2x1xf32, #tpu.memory_space<vmem>>, vector<2x1xf32>,
    return
  }
}

</mosaic_0001>

<llo_original>
// kernel: molecular_lstm_forward.1
$region0: #{molecular_lstm_forward.1}
  #allocation0 [shape = 'u32[]', space=smem, size = 0x4, offset = 0x4, fixed_abs, tag = 'smem constant byte address 0x4 - core index']
  #allocation1 [shape = 'u32[144,128]{1,0:T(1,128)}', space=vmem, size = 0x12000, scoped, tag = 'internal scratch']
  #allocation2 [shape = 'f32[1,1]{1,0:T(1,128)S(1)}', space=vmem, size = 0x200, scoped, tag = 'scoped memory for molecular_lstm_forward.1']
  #allocation3 [shape = 'f32[1,1]{1,0:T(1,128)S(6)}', space=smem, size = 0x200, scoped, tag = 'scoped memory for molecular_lstm_forward.1']
  #allocation4 [shape = 'f32[1,1]{1,0:T(1,128)S(6)}', space=smem, size = 0x200, scoped, tag = 'scoped memory for molecular_lstm_forward.1']
  %s0 = inlined_call_operand.vmem [shape: f32[16,16], index: 0, kind: input, shape index: {}]
  %s1 = inlined_call_operand.vmem [shape: f32[16,16], index: 1, kind: input, shape index: {}]
  %s2 = inlined_call_operand.vmem [shape: f32[16,128], index: 2, kind: input, shape index: {}]
  %s3 = inlined_call_operand.vmem [shape: f32[32,128], index: 3, kind: input, shape index: {}]
  %s4 = inlined_call_operand.vmem [shape: f32[1,128], index: 4, kind: input, shape index: {}]
  %s5 = inlined_call_operand.vmem [shape: f32[1,32], index: 5, kind: input, shape index: {}]
  %s6 = inlined_call_operand.vmem [shape: f32[16,128], index: 6, kind: input, shape index: {}]
  %s7 = inlined_call_operand.vmem [shape: f32[32,128], index: 7, kind: input, shape index: {}]
  %s8 = inlined_call_operand.vmem [shape: f32[1,128], index: 8, kind: input, shape index: {}]
  %s9 = inlined_call_operand.vmem [shape: f32[1,32], index: 9, kind: input, shape index: {}]
  %s10 = inlined_call_operand.vmem [shape: f32[64,32], index: 10, kind: input, shape index: {}]
  %s11 = inlined_call_operand.vmem [shape: f32[1,32], index: 11, kind: input, shape index: {}]
  %s12 = inlined_call_operand.vmem [shape: f32[32,16], index: 12, kind: input, shape index: {}]
  %s13 = inlined_call_operand.vmem [shape: f32[1,16], index: 13, kind: input, shape index: {}]
  %s14 = inlined_call_operand.vmem [shape: f32[16,8], index: 14, kind: input, shape index: {}]
  %s15 = inlined_call_operand.vmem [shape: f32[1,8], index: 15, kind: input, shape index: {}]
  %s16 = inlined_call_operand.vmem [shape: f32[8,1], index: 16, kind: input, shape index: {}]
  %s17 = inlined_call_operand.<no memory space> [shape: f32[1,1], index: 17, kind: input, shape index: {}]
  %s18 = inlined_call_operand.<no memory space> [shape: f32[1,1], index: 18, kind: input, shape index: {}]
  %s19 = inlined_call_operand.<no memory space> [shape: f32[1,1], index: 19, kind: input, shape index: {}]
  %s20 = inlined_call_operand.vmem [shape: f32[2,1], index: 20, kind: output, shape index: {}]
  %s21 = sld [smem:[#allocation0]]
  $region90: #{molecular_lstm_forward.1} parent=0
    _
  %s23 = ssub.s32 1, %s21
  %s24 = scalar_select 0, %s23, %s21
  %v25 = vstv %s17
  %26 = vst [vmem:[#allocation2] sm:$0x1] %v25
  %27 = sst [smem:[#allocation3]] %s18
  %28 = sst [smem:[#allocation4]] %s19
  // Predicated region
  $region2: #{molecular_lstm_forward.1} parent=0 // pred_check
    _
  $region3: #{molecular_lstm_forward.1} parent=0 // pred_check_branch
    %30 = sbr.rel (0) target = $region5
  $region4: #{molecular_lstm_forward.1} parent=0 // pred_region
    _
  $region5: #{molecular_lstm_forward.1} parent=0 // pred_fallthru
    _
  // Predicated region
  $region6: #{molecular_lstm_forward.1} parent=0 // pred_check
    _
  $region7: #{molecular_lstm_forward.1} parent=0 // pred_check_branch
    %32 = sbr.rel (0) target = $region9
  $region8: #{molecular_lstm_forward.1} parent=0 // pred_region
    _
  $region9: #{molecular_lstm_forward.1} parent=0 // pred_fallthru
    _
  // Predicated region
  $region10: #{molecular_lstm_forward.1} parent=0 // pred_check
    _
  $region11: #{molecular_lstm_forward.1} parent=0 // pred_check_branch
    %34 = sbr.rel (0) target = $region13
  $region12: #{molecular_lstm_forward.1} parent=0 // pred_region
    _
  $region13: #{molecular_lstm_forward.1} parent=0 // pred_fallthru
    _
  // Predicated region
  $region14: #{molecular_lstm_forward.1} parent=0 // pred_check
    _
  $region15: #{molecular_lstm_forward.1} parent=0 // pred_check_branch
    %36 = sbr.rel (0) target = $region17
  $region16: #{molecular_lstm_forward.1} parent=0 // pred_region
    _
  $region17: #{molecular_lstm_forward.1} parent=0 // pred_fallthru
    _
  // Predicated region
  $region18: #{molecular_lstm_forward.1} parent=0 // pred_check
    _
  $region19: #{molecular_lstm_forward.1} parent=0 // pred_check_branch
    %38 = sbr.rel (0) target = $region21
  $region20: #{molecular_lstm_forward.1} parent=0 // pred_region
    _
  $region21: #{molecular_lstm_forward.1} parent=0 // pred_fallthru
    _
  // Predicated region
  $region22: #{molecular_lstm_forward.1} parent=0 // pred_check
    _
  $region23: #{molecular_lstm_forward.1} parent=0 // pred_check_branch
    %40 = sbr.rel (0) target = $region25
  $region24: #{molecular_lstm_forward.1} parent=0 // pred_region
    _
  $region25: #{molecular_lstm_forward.1} parent=0 // pred_fallthru
    _
  // Predicated region
  $region26: #{molecular_lstm_forward.1} parent=0 // pred_check
    _
  $region27: #{molecular_lstm_forward.1} parent=0 // pred_check_branch
    %42 = sbr.rel (0) target = $region29
  $region28: #{molecular_lstm_forward.1} parent=0 // pred_region
    _
  $region29: #{molecular_lstm_forward.1} parent=0 // pred_fallthru
    _
  // Predicated region
  $region30: #{molecular_lstm_forward.1} parent=0 // pred_check
    _
  $region31: #{molecular_lstm_forward.1} parent=0 // pred_check_branch
    %44 = sbr.rel (0) target = $region33
  $region32: #{molecular_lstm_forward.1} parent=0 // pred_region
    _
  $region33: #{molecular_lstm_forward.1} parent=0 // pred_fallthru
    _
  // Predicated region
  $region34: #{molecular_lstm_forward.1} parent=0 // pred_check
    _
  $region35: #{molecular_lstm_forward.1} parent=0 // pred_check_branch
    %46 = sbr.rel (0) target = $region37
  $region36: #{molecular_lstm_forward.1} parent=0 // pred_region
    _
  $region37: #{molecular_lstm_forward.1} parent=0 // pred_fallthru
    _
  // Predicated region
  $region38: #{molecular_lstm_forward.1} parent=0 // pred_check
    _
  $region39: #{molecular_lstm_forward.1} parent=0 // pred_check_branch
    %48 = sbr.rel (0) target = $region41
  $region40: #{molecular_lstm_forward.1} parent=0 // pred_region
    _
  $region41: #{molecular_lstm_forward.1} parent=0 // pred_fallthru
    _
  // Predicated region
  $region42: #{molecular_lstm_forward.1} parent=0 // pred_check
    _
  $region43: #{molecular_lstm_forward.1} parent=0 // pred_check_branch
    %50 = sbr.rel (0) target = $region45
  $region44: #{molecular_lstm_forward.1} parent=0 // pred_region
    _
  $region45: #{molecular_lstm_forward.1} parent=0 // pred_fallthru
    _
  // Predicated region
  $region46: #{molecular_lstm_forward.1} parent=0 // pred_check
    _
  $region47: #{molecular_lstm_forward.1} parent=0 // pred_check_branch
    %52 = sbr.rel (0) target = $region49
  $region48: #{molecular_lstm_forward.1} parent=0 // pred_region
    _
  $region49: #{molecular_lstm_forward.1} parent=0 // pred_fallthru
    _
  // Predicated region
  $region50: #{molecular_lstm_forward.1} parent=0 // pred_check
    _
  $region51: #{molecular_lstm_forward.1} parent=0 // pred_check_branch
    %54 = sbr.rel (0) target = $region53
  $region52: #{molecular_lstm_forward.1} parent=0 // pred_region
    _
  $region53: #{molecular_lstm_forward.1} parent=0 // pred_fallthru
    _
  // Predicated region
  $region54: #{molecular_lstm_forward.1} parent=0 // pred_check
    _
  $region55: #{molecular_lstm_forward.1} parent=0 // pred_check_branch
    %56 = sbr.rel (0) target = $region57
  $region56: #{molecular_lstm_forward.1} parent=0 // pred_region
    _
  $region57: #{molecular_lstm_forward.1} parent=0 // pred_fallthru
    _
  // Predicated region
  $region58: #{molecular_lstm_forward.1} parent=0 // pred_check
    _
  $region59: #{molecular_lstm_forward.1} parent=0 // pred_check_branch
    %58 = sbr.rel (0) target = $region61
  $region60: #{molecular_lstm_forward.1} parent=0 // pred_region
    _
  $region61: #{molecular_lstm_forward.1} parent=0 // pred_fallthru
    _
  // Predicated region
  $region62: #{molecular_lstm_forward.1} parent=0 // pred_check
    _
  $region63: #{molecular_lstm_forward.1} parent=0 // pred_check_branch
    %60 = sbr.rel (0) target = $region65
  $region64: #{molecular_lstm_forward.1} parent=0 // pred_region
    _
  $region65: #{molecular_lstm_forward.1} parent=0 // pred_fallthru
    _
  // Predicated region
  $region66: #{molecular_lstm_forward.1} parent=0 // pred_check
    _
  $region67: #{molecular_lstm_forward.1} parent=0 // pred_check_branch
    %62 = sbr.rel (0) target = $region69
  $region68: #{molecular_lstm_forward.1} parent=0 // pred_region
    _
  $region69: #{molecular_lstm_forward.1} parent=0 // pred_fallthru
    _
  // Predicated region
  $region70: #{molecular_lstm_forward.1} parent=0 // pred_check
    _
  $region71: #{molecular_lstm_forward.1} parent=0 // pred_check_branch
    %64 = sbr.rel (0) target = $region73
  $region72: #{molecular_lstm_forward.1} parent=0 // pred_region
    _
  $region73: #{molecular_lstm_forward.1} parent=0 // pred_fallthru
    _
  // Predicated region
  $region74: #{molecular_lstm_forward.1} parent=0 // pred_check
    _
  $region75: #{molecular_lstm_forward.1} parent=0 // pred_check_branch
    %66 = sbr.rel (0) target = $region77
  $region76: #{molecular_lstm_forward.1} parent=0 // pred_region
    _
  $region77: #{molecular_lstm_forward.1} parent=0 // pred_fallthru
    _
  // Predicated region
  $region78: #{molecular_lstm_forward.1} parent=0 // pred_check
    _
  $region79: #{molecular_lstm_forward.1} parent=0 // pred_check_branch
    %68 = sbr.rel (0) target = $region81
  $region80: #{molecular_lstm_forward.1} parent=0 // pred_region
    _
  $region81: #{molecular_lstm_forward.1} parent=0 // pred_fallthru
    _
  %s69 = sld [smem:[#allocation3]]
  %v70 = vld [vmem:[%s0] sm:$0xff]
  %v71 = vld [vmem:[%s0 + $0x8] sm:$0xff]
  %v72 = vld [vmem:[%s2] sm:$0xff]
  %v73 = vld [vmem:[%s2 + $0x8] sm:$0xff]
  %v74 = vld [vmem:[%s4] sm:$0x1]
  %v76 = vlaneseq
  %v77 = vshrl.u32 %v76, 7
  %v78 = vsub.s32 0, %v77
  %v79 = vrot.slane %v74, %v78
  %vm81 = vcmask 130048
  %v83 = vsel %vm81, %v70, 0
  %v86 = vsel %vm81, %v71, 0
  %88 = vmatprep.subr.mxu0 0.0
  %89 = vmatpush1.msra.mxu0 0.0
  %90 = vmatprep.subr.mxu0 0.0
  %91 = vmatpush1.msra.mxu0 0.0
  %92 = vmatprep.subr.mxu0 0.0
  %93 = vmatpush1.msra.mxu0 0.0
  %94 = vmatprep.subr.mxu0 0.0
  %95 = vmatpush1.msra.mxu0 0.0
  %96 = vmatprep.subr.mxu0 0.0
  %97 = vmatpush1.msra.mxu0 0.0
  %98 = vmatprep.subr.mxu0 0.0
  %99 = vmatpush1.msra.mxu0 0.0
  %100 = vmatprep.subr.mxu0 0.0
  %101 = vmatpush1.msra.mxu0 0.0
  %102 = vmatprep.subr.mxu0 0.0
  %103 = vmatpush1.msra.mxu0 0.0
  %104 = vmatprep.subr.mxu0 0.0
  %105 = vmatpush1.msra.mxu0 0.0
  %106 = vmatprep.subr.mxu0 0.0
  %107 = vmatpush1.msra.mxu0 0.0
  %108 = vmatprep.subr.mxu0 0.0
  %109 = vmatpush1.msra.mxu0 0.0
  %110 = vmatprep.subr.mxu0 0.0
  %111 = vmatpush1.msra.mxu0 0.0
  %112 = vmatprep.subr.mxu0 0.0
  %113 = vmatpush1.msra.mxu0 0.0
  %114 = vmatprep.subr.mxu0 0.0
  %115 = vmatpush1.msra.mxu0 0.0
  %116 = vmatprep.subr.mxu0 0.0
  %117 = vmatpush1.msra.mxu0 %v73
  %118 = vmatprep.subr.mxu0 0.0
  %119 = vmatpush1.msra.mxu0 %v72
  %120 = vmatprep.subr.mxu0 0.0
  %121 = vmatpush2.msra.mxu0 0.0
  %122 = vmatprep.subr.mxu0 0.0
  %123 = vmatpush2.msra.mxu0 0.0
  %124 = vmatprep.subr.mxu0 0.0
  %125 = vmatpush2.msra.mxu0 0.0
  %126 = vmatprep.subr.mxu0 0.0
  %127 = vmatpush2.msra.mxu0 0.0
  %128 = vmatprep.subr.mxu0 0.0
  %129 = vmatpush2.msra.mxu0 0.0
  %130 = vmatprep.subr.mxu0 0.0
  %131 = vmatpush2.msra.mxu0 0.0
  %132 = vmatprep.subr.mxu0 0.0
  %133 = vmatpush2.msra.mxu0 0.0
  %134 = vmatprep.subr.mxu0 0.0
  %135 = vmatpush2.msra.mxu0 0.0
  %136 = vmatprep.subr.mxu0 0.0
  %137 = vmatpush2.msra.mxu0 0.0
  %138 = vmatprep.subr.mxu0 0.0
  %139 = vmatpush2.msra.mxu0 0.0
  %140 = vmatprep.subr.mxu0 0.0
  %141 = vmatpush2.msra.mxu0 0.0
  %142 = vmatprep.subr.mxu0 0.0
  %143 = vmatpush2.msra.mxu0 0.0
  %144 = vmatprep.subr.mxu0 0.0
  %145 = vmatpush2.msra.mxu0 0.0
  %146 = vmatprep.subr.mxu0 0.0
  %147 = vmatpush2.msra.mxu0 0.0
  %148 = vmatprep.subr.mxu0 0.0
  %149 = vmatpush2.msra.mxu0 0.0
  %150 = vmatprep.subr.mxu0 0.0
  %151 = vmatpush2.msra.mxu0 0.0
  %152 = vmatprep.mubr.f32.mxu0 0.0
  %153 = vmatmul.mubr.f32.gmra.mxu0 %v83
  %v154 = vpop.f32.mrf.mxu0
  %v155 = vadd.f32 %v79, %v154
  %v156 = vpop.f32.mrf.mxu0
  %157 = vmatprep.mubr.f32.mxu0 0.0
  %158 = vmatmul.mubr.f32.gmra.mxu0 %v86
  %v159 = vpop.f32.mrf.mxu0
  %v160 = vadd.f32 %v79, %v159
  %v161 = vpop.f32.mrf.mxu0
  %162 = vdwg.mxu0
  %v163 = vld [vmem:[%s3] sm:$0xff]
  %v164 = vld [vmem:[%s3 + $0x8] sm:$0xff]
  %v165 = vld [vmem:[%s3 + $0x10] sm:$0xff]
  %v166 = vld [vmem:[%s3 + $0x18] sm:$0xff]
  %v167 = vld [vmem:[%s5] sm:$0x1]
  %vm168 = vcmask 261120
  %v170 = vsel %vm168, 0.0, 0
  %172 = vmatprep.subr.mxu0 0.0
  %173 = vmatpush1.msra.mxu0 0.0
  %174 = vmatprep.subr.mxu0 0.0
  %175 = vmatpush1.msra.mxu0 0.0
  %176 = vmatprep.subr.mxu0 0.0
  %177 = vmatpush1.msra.mxu0 0.0
  %178 = vmatprep.subr.mxu0 0.0
  %179 = vmatpush1.msra.mxu0 0.0
  %180 = vmatprep.subr.mxu0 0.0
  %181 = vmatpush1.msra.mxu0 0.0
  %182 = vmatprep.subr.mxu0 0.0
  %183 = vmatpush1.msra.mxu0 0.0
  %184 = vmatprep.subr.mxu0 0.0
  %185 = vmatpush1.msra.mxu0 0.0
  %186 = vmatprep.subr.mxu0 0.0
  %187 = vmatpush1.msra.mxu0 0.0
  %188 = vmatprep.subr.mxu0 0.0
  %189 = vmatpush1.msra.mxu0 0.0
  %190 = vmatprep.subr.mxu0 0.0
  %191 = vmatpush1.msra.mxu0 0.0
  %192 = vmatprep.subr.mxu0 0.0
  %193 = vmatpush1.msra.mxu0 0.0
  %194 = vmatprep.subr.mxu0 0.0
  %195 = vmatpush1.msra.mxu0 0.0
  %196 = vmatprep.subr.mxu0 0.0
  %197 = vmatpush1.msra.mxu0 %v166
  %198 = vmatprep.subr.mxu0 0.0
  %199 = vmatpush1.msra.mxu0 %v165
  %200 = vmatprep.subr.mxu0 0.0
  %201 = vmatpush1.msra.mxu0 %v164
  %202 = vmatprep.subr.mxu0 0.0
  %203 = vmatpush1.msra.mxu0 %v163
  %204 = vmatprep.subr.mxu0 0.0
  %205 = vmatpush2.msra.mxu0 0.0
  %206 = vmatprep.subr.mxu0 0.0
  %207 = vmatpush2.msra.mxu0 0.0
  %208 = vmatprep.subr.mxu0 0.0
  %209 = vmatpush2.msra.mxu0 0.0
  %210 = vmatprep.subr.mxu0 0.0
  %211 = vmatpush2.msra.mxu0 0.0
  %212 = vmatprep.subr.mxu0 0.0
  %213 = vmatpush2.msra.mxu0 0.0
  %214 = vmatprep.subr.mxu0 0.0
  %215 = vmatpush2.msra.mxu0 0.0
  %216 = vmatprep.subr.mxu0 0.0
  %217 = vmatpush2.msra.mxu0 0.0
  %218 = vmatprep.subr.mxu0 0.0
  %219 = vmatpush2.msra.mxu0 0.0
  %220 = vmatprep.subr.mxu0 0.0
  %221 = vmatpush2.msra.mxu0 0.0
  %222 = vmatprep.subr.mxu0 0.0
  %223 = vmatpush2.msra.mxu0 0.0
  %224 = vmatprep.subr.mxu0 0.0
  %225 = vmatpush2.msra.mxu0 0.0
  %226 = vmatprep.subr.mxu0 0.0
  %227 = vmatpush2.msra.mxu0 0.0
  %228 = vmatprep.subr.mxu0 0.0
  %229 = vmatpush2.msra.mxu0 0.0
  %230 = vmatprep.subr.mxu0 0.0
  %231 = vmatpush2.msra.mxu0 0.0
  %232 = vmatprep.subr.mxu0 0.0
  %233 = vmatpush2.msra.mxu0 0.0
  %234 = vmatprep.subr.mxu0 0.0
  %235 = vmatpush2.msra.mxu0 0.0
  %236 = vmatprep.mubr.f32.mxu0 0.0
  %237 = vmatmul.mubr.f32.gmra.mxu0 %v170
  %v238 = vpop.f32.mrf.mxu0
  %v239 = vadd.f32 0.0, %v238
  %v240 = vpop.f32.mrf.mxu0
  %241 = vdwg.mxu0
  %v242 = vadd.f32 %v155, %v239
  %v243 = vxor.u32 %v242, 2147483648
  %v244 = vmul.f32 %v243, 1.442695
  %v245 = vpow.pop %v244
  %v246 = vadd.f32 %v245, 1.0
  %v247 = vrcp.pop %v246
  %v248 = vmul.f32 1.0, %v247
  %v249 = vtanh.pop %v242
  %v250 = vmul.f32 %v248, 0.0
  %252 = vrot.lane.b32.xlu0 %v249, 64
  %v253 = vpop.permute.xlu0 %252
  %v255 = vmul.f32 %v248, %v253
  %257 = vrot.lane.b32.xlu0 %v255, 32
  %v258 = vpop.permute.xlu0 %257
  %v260 = vadd.f32 %v250, %v258
  %v261 = vtanh.pop %v260
  %263 = vrot.lane.b32.xlu0 %v261, 64
  %v264 = vpop.permute.xlu0 %263
  %v266 = vmul.f32 %v248, %v264
  %v268 = vlaneseq
  %v269 = vshrl.u32 %v268, 7
  %v270 = vsub.s32 0, %v269
  %v271 = vrot.slane %v167, %v270
  %272 = vrot.lane.b32.xlu0 %v271, 96
  %v273 = vpop.permute.xlu0 %272
  %v275 = vmul.f32 %v266, %v273
  %277 = vrot.lane.b32.xlu0 %v275, 32
  %v278 = vpop.permute.xlu0 %277
  %vm280 = vcmask 254976
  %v281 = vsel %vm280, %v278, 0.0
  %282 = vadd.xlane.f32.xlu0 %v281
  %v283 = vpop.xlane.xlu0 %282
  %v284 = vstv %s69
  %v285 = vadd.f32 %v283, %v284
  %v286 = vmax.f32 %v285, -1e+30
  %v287 = vsub.f32 -1e+30, %v286
  %v288 = vmul.f32 %v287, 1.442695
  %v289 = vpow.pop %v288
  %v290 = vsub.f32 %v285, %v286
  %v291 = vmul.f32 %v290, 1.442695
  %v292 = vpow.pop %v291
  %v293 = vmul.f32 %v289, 0.0
  %v294 = vadd.f32 %v293, %v292
  %v295 = vmul.f32 %v292, %v266
  %v296 = vadd.f32 %v293, %v295
  %298 = vrot.lane.b32.xlu0 %v266, 32
  %v299 = vpop.permute.xlu0 %298
  %v300 = vsel %vm168, %v299, 0
  %302 = vmatprep.subr.mxu0 0.0
  %303 = vmatpush1.msra.mxu0 0.0
  %304 = vmatprep.subr.mxu0 0.0
  %305 = vmatpush1.msra.mxu0 0.0
  %306 = vmatprep.subr.mxu0 0.0
  %307 = vmatpush1.msra.mxu0 0.0
  %308 = vmatprep.subr.mxu0 0.0
  %309 = vmatpush1.msra.mxu0 0.0
  %310 = vmatprep.subr.mxu0 0.0
  %311 = vmatpush1.msra.mxu0 0.0
  %312 = vmatprep.subr.mxu0 0.0
  %313 = vmatpush1.msra.mxu0 0.0
  %314 = vmatprep.subr.mxu0 0.0
  %315 = vmatpush1.msra.mxu0 0.0
  %316 = vmatprep.subr.mxu0 0.0
  %317 = vmatpush1.msra.mxu0 0.0
  %318 = vmatprep.subr.mxu0 0.0
  %319 = vmatpush1.msra.mxu0 0.0
  %320 = vmatprep.subr.mxu0 0.0
  %321 = vmatpush1.msra.mxu0 0.0
  %322 = vmatprep.subr.mxu0 0.0
  %323 = vmatpush1.msra.mxu0 0.0
  %324 = vmatprep.subr.mxu0 0.0
  %325 = vmatpush1.msra.mxu0 0.0
  %326 = vmatprep.subr.mxu0 0.0
  %327 = vmatpush1.msra.mxu0 %v166
  %328 = vmatprep.subr.mxu0 0.0
  %329 = vmatpush1.msra.mxu0 %v165
  %330 = vmatprep.subr.mxu0 0.0
  %331 = vmatpush1.msra.mxu0 %v164
  %332 = vmatprep.subr.mxu0 0.0
  %333 = vmatpush1.msra.mxu0 %v163
  %334 = vmatprep.subr.mxu0 0.0
  %335 = vmatpush2.msra.mxu0 0.0
  %336 = vmatprep.subr.mxu0 0.0
  %337 = vmatpush2.msra.mxu0 0.0
  %338 = vmatprep.subr.mxu0 0.0
  %339 = vmatpush2.msra.mxu0 0.0
  %340 = vmatprep.subr.mxu0 0.0
  %341 = vmatpush2.msra.mxu0 0.0
  %342 = vmatprep.subr.mxu0 0.0
  %343 = vmatpush2.msra.mxu0 0.0
  %344 = vmatprep.subr.mxu0 0.0
  %345 = vmatpush2.msra.mxu0 0.0
  %346 = vmatprep.subr.mxu0 0.0
  %347 = vmatpush2.msra.mxu0 0.0
  %348 = vmatprep.subr.mxu0 0.0
  %349 = vmatpush2.msra.mxu0 0.0
  %350 = vmatprep.subr.mxu0 0.0
  %351 = vmatpush2.msra.mxu0 0.0
  %352 = vmatprep.subr.mxu0 0.0
  %353 = vmatpush2.msra.mxu0 0.0
  %354 = vmatprep.subr.mxu0 0.0
  %355 = vmatpush2.msra.mxu0 0.0
  %356 = vmatprep.subr.mxu0 0.0
  %357 = vmatpush2.msra.mxu0 0.0
  %358 = vmatprep.subr.mxu0 0.0
  %359 = vmatpush2.msra.mxu0 0.0
  %360 = vmatprep.subr.mxu0 0.0
  %361 = vmatpush2.msra.mxu0 0.0
  %362 = vmatprep.subr.mxu0 0.0
  %363 = vmatpush2.msra.mxu0 0.0
  %364 = vmatprep.subr.mxu0 0.0
  %365 = vmatpush2.msra.mxu0 0.0
  %366 = vmatprep.mubr.f32.mxu0 0.0
  %367 = vmatmul.mubr.f32.gmra.mxu0 %v300
  %v368 = vpop.f32.mrf.mxu0
  %v369 = vadd.f32 0.0, %v368
  %v370 = vpop.f32.mrf.mxu0
  %371 = vdwg.mxu0
  %v373 = vrot.slane %v369, 6
  %v375 = vadd.f32 %v155, %v373
  %v376 = vxor.u32 %v375, 2147483648
  %v377 = vmul.f32 %v376, 1.442695
  %v378 = vpow.pop %v377
  %v379 = vadd.f32 %v378, 1.0
  %v380 = vrcp.pop %v379
  %v381 = vmul.f32 1.0, %v380
  %v382 = vtanh.pop %v375
  %v384 = vrot.slane %v260, 6
  %v386 = vmul.f32 %v381, %v384
  %388 = vrot.lane.b32.xlu0 %v382, 64
  %v389 = vpop.permute.xlu0 %388
  %v391 = vmul.f32 %v381, %v389
  %393 = vrot.lane.b32.xlu0 %v391, 32
  %v394 = vpop.permute.xlu0 %393
  %v396 = vadd.f32 %v386, %v394
  %v397 = vtanh.pop %v396
  %399 = vrot.lane.b32.xlu0 %v397, 64
  %v400 = vpop.permute.xlu0 %399
  %v402 = vmul.f32 %v381, %v400
  %v403 = vmul.f32 %v402, %v273
  %405 = vrot.lane.b32.xlu0 %v403, 32
  %v406 = vpop.permute.xlu0 %405
  %vm408 = vcmask 257026
  %v409 = vsel %vm408, %v406, 0.0
  %410 = vadd.xlane.f32.xlu0 %v409
  %v411 = vpop.xlane.xlu0 %410
  %v412 = vadd.f32 %v411, %v284
  %v414 = vrot.slane %v412, 2
  %v416 = vmax.f32 %v286, %v414
  %v417 = vsub.f32 %v286, %v416
  %v418 = vmul.f32 %v417, 1.442695
  %v419 = vpow.pop %v418
  %v421 = vrot.slane %v416, 6
  %v423 = vsub.f32 %v412, %v421
  %v424 = vmul.f32 %v423, 1.442695
  %v425 = vpow.pop %v424
  %v426 = vmul.f32 %v419, %v294
  %v428 = vrot.slane %v425, 2
  %v430 = vadd.f32 %v426, %v428
  %432 = vset.pattern.permute.xlu0 0
  %433 = vperm.xlu0 %432, %v419
  %v434 = vpop.permute.xlu0 %433
  %v436 = vmul.f32 %v434, %v296
  %437 = vset.pattern.permute.xlu0 0
  %438 = vperm.xlu0 %437, %v425
  %v439 = vpop.permute.xlu0 %438
  %v441 = vmul.f32 %v439, %v402
  %v443 = vrot.slane %v441, 2
  %v445 = vadd.f32 %v436, %v443
  %v447 = vrot.slane %v402, 2
  %448 = vrot.lane.b32.xlu0 %v447, 32
  %v449 = vpop.permute.xlu0 %448
  %v450 = vsel %vm168, %v449, 0
  %452 = vmatprep.subr.mxu0 0.0
  %453 = vmatpush1.msra.mxu0 0.0
  %454 = vmatprep.subr.mxu0 0.0
  %455 = vmatpush1.msra.mxu0 0.0
  %456 = vmatprep.subr.mxu0 0.0
  %457 = vmatpush1.msra.mxu0 0.0
  %458 = vmatprep.subr.mxu0 0.0
  %459 = vmatpush1.msra.mxu0 0.0
  %460 = vmatprep.subr.mxu0 0.0
  %461 = vmatpush1.msra.mxu0 0.0
  %462 = vmatprep.subr.mxu0 0.0
  %463 = vmatpush1.msra.mxu0 0.0
  %464 = vmatprep.subr.mxu0 0.0
  %465 = vmatpush1.msra.mxu0 0.0
  %466 = vmatprep.subr.mxu0 0.0
  %467 = vmatpush1.msra.mxu0 0.0
  %468 = vmatprep.subr.mxu0 0.0
  %469 = vmatpush1.msra.mxu0 0.0
  %470 = vmatprep.subr.mxu0 0.0
  %471 = vmatpush1.msra.mxu0 0.0
  %472 = vmatprep.subr.mxu0 0.0
  %473 = vmatpush1.msra.mxu0 0.0
  %474 = vmatprep.subr.mxu0 0.0
  %475 = vmatpush1.msra.mxu0 0.0
  %476 = vmatprep.subr.mxu0 0.0
  %477 = vmatpush1.msra.mxu0 %v166
  %478 = vmatprep.subr.mxu0 0.0
  %479 = vmatpush1.msra.mxu0 %v165
  %480 = vmatprep.subr.mxu0 0.0
  %481 = vmatpush1.msra.mxu0 %v164
  %482 = vmatprep.subr.mxu0 0.0
  %483 = vmatpush1.msra.mxu0 %v163
  %484 = vmatprep.subr.mxu0 0.0
  %485 = vmatpush2.msra.mxu0 0.0
  %486 = vmatprep.subr.mxu0 0.0
  %487 = vmatpush2.msra.mxu0 0.0
  %488 = vmatprep.subr.mxu0 0.0
  %489 = vmatpush2.msra.mxu0 0.0
  %490 = vmatprep.subr.mxu0 0.0
  %491 = vmatpush2.msra.mxu0 0.0
  %492 = vmatprep.subr.mxu0 0.0
  %493 = vmatpush2.msra.mxu0 0.0
  %494 = vmatprep.subr.mxu0 0.0
  %495 = vmatpush2.msra.mxu0 0.0
  %496 = vmatprep.subr.mxu0 0.0
  %497 = vmatpush2.msra.mxu0 0.0
  %498 = vmatprep.subr.mxu0 0.0
  %499 = vmatpush2.msra.mxu0 0.0
  %500 = vmatprep.subr.mxu0 0.0
  %501 = vmatpush2.msra.mxu0 0.0
  %502 = vmatprep.subr.mxu0 0.0
  %503 = vmatpush2.msra.mxu0 0.0
  %504 = vmatprep.subr.mxu0 0.0
  %505 = vmatpush2.msra.mxu0 0.0
  %506 = vmatprep.subr.mxu0 0.0
  %507 = vmatpush2.msra.mxu0 0.0
  %508 = vmatprep.subr.mxu0 0.0
  %509 = vmatpush2.msra.mxu0 0.0
  %510 = vmatprep.subr.mxu0 0.0
  %511 = vmatpush2.msra.mxu0 0.0
  %512 = vmatprep.subr.mxu0 0.0
  %513 = vmatpush2.msra.mxu0 0.0
  %514 = vmatprep.subr.mxu0 0.0
  %515 = vmatpush2.msra.mxu0 0.0
  %516 = vmatprep.mubr.f32.mxu0 0.0
  %517 = vmatmul.mubr.f32.gmra.mxu0 %v450
  %v518 = vpop.f32.mrf.mxu0
  %v519 = vadd.f32 0.0, %v518
  %v520 = vpop.f32.mrf.mxu0
  %521 = vdwg.mxu0
  %v523 = vrot.slane %v519, 4
  %v525 = vadd.f32 %v155, %v523
  %v526 = vxor.u32 %v525, 2147483648
  %v527 = vmul.f32 %v526, 1.442695
  %v528 = vpow.pop %v527
  %v529 = vadd.f32 %v528, 1.0
  %v530 = vrcp.pop %v529
  %v531 = vmul.f32 1.0, %v530
  %v532 = vtanh.pop %v525
  %v534 = vrot.slane %v396, 6
  %v536 = vmul.f32 %v531, %v534
  %538 = vrot.lane.b32.xlu0 %v532, 64
  %v539 = vpop.permute.xlu0 %538
  %v541 = vmul.f32 %v531, %v539
  %543 = vrot.lane.b32.xlu0 %v541, 32
  %v544 = vpop.permute.xlu0 %543
  %v546 = vadd.f32 %v536, %v544
  %v547 = vtanh.pop %v546
  %549 = vrot.lane.b32.xlu0 %v547, 64
  %v550 = vpop.permute.xlu0 %549
  %v552 = vmul.f32 %v531, %v550
  %v553 = vmul.f32 %v552, %v273
  %555 = vrot.lane.b32.xlu0 %v553, 32
  %v556 = vpop.permute.xlu0 %555
  %vm558 = vcmask 259076
  %v559 = vsel %vm558, %v556, 0.0
  %560 = vadd.xlane.f32.xlu0 %v559
  %v561 = vpop.xlane.xlu0 %560
  %v562 = vadd.f32 %v561, %v284
  %v564 = vrot.slane %v562, 4
  %v566 = vmax.f32 %v416, %v564
  %v567 = vsub.f32 %v416, %v566
  %v568 = vmul.f32 %v567, 1.442695
  %v569 = vpow.pop %v568
  %v571 = vrot.slane %v566, 4
  %v573 = vsub.f32 %v562, %v571
  %v574 = vmul.f32 %v573, 1.442695
  %v575 = vpow.pop %v574
  %v576 = vmul.f32 %v569, %v430
  %v578 = vrot.slane %v575, 4
  %v580 = vadd.f32 %v576, %v578
  %582 = vset.pattern.permute.xlu0 0
  %583 = vperm.xlu0 %582, %v569
  %v584 = vpop.permute.xlu0 %583
  %v586 = vmul.f32 %v584, %v445
  %587 = vset.pattern.permute.xlu0 0
  %588 = vperm.xlu0 %587, %v575
  %v589 = vpop.permute.xlu0 %588
  %v591 = vmul.f32 %v589, %v552
  %v593 = vrot.slane %v591, 4
  %v595 = vadd.f32 %v586, %v593
  %v597 = vrot.slane %v552, 4
  %598 = vrot.lane.b32.xlu0 %v597, 32
  %v599 = vpop.permute.xlu0 %598
  %v600 = vsel %vm168, %v599, 0
  %602 = vmatprep.subr.mxu0 0.0
  %603 = vmatpush1.msra.mxu0 0.0
  %604 = vmatprep.subr.mxu0 0.0
  %605 = vmatpush1.msra.mxu0 0.0
  %606 = vmatprep.subr.mxu0 0.0
  %607 = vmatpush1.msra.mxu0 0.0
  %608 = vmatprep.subr.mxu0 0.0
  %609 = vmatpush1.msra.mxu0 0.0
  %610 = vmatprep.subr.mxu0 0.0
  %611 = vmatpush1.msra.mxu0 0.0
  %612 = vmatprep.subr.mxu0 0.0
  %613 = vmatpush1.msra.mxu0 0.0
  %614 = vmatprep.subr.mxu0 0.0
  %615 = vmatpush1.msra.mxu0 0.0
  %616 = vmatprep.subr.mxu0 0.0
  %617 = vmatpush1.msra.mxu0 0.0
  %618 = vmatprep.subr.mxu0 0.0
  %619 = vmatpush1.msra.mxu0 0.0
  %620 = vmatprep.subr.mxu0 0.0
  %621 = vmatpush1.msra.mxu0 0.0
  %622 = vmatprep.subr.mxu0 0.0
  %623 = vmatpush1.msra.mxu0 0.0
  %624 = vmatprep.subr.mxu0 0.0
  %625 = vmatpush1.msra.mxu0 0.0
  %626 = vmatprep.subr.mxu0 0.0
  %627 = vmatpush1.msra.mxu0 %v166
  %628 = vmatprep.subr.mxu0 0.0
  %629 = vmatpush1.msra.mxu0 %v165
  %630 = vmatprep.subr.mxu0 0.0
  %631 = vmatpush1.msra.mxu0 %v164
  %632 = vmatprep.subr.mxu0 0.0
  %633 = vmatpush1.msra.mxu0 %v163
  %634 = vmatprep.subr.mxu0 0.0
  %635 = vmatpush2.msra.mxu0 0.0
  %636 = vmatprep.subr.mxu0 0.0
  %637 = vmatpush2.msra.mxu0 0.0
  %638 = vmatprep.subr.mxu0 0.0
  %639 = vmatpush2.msra.mxu0 0.0
  %640 = vmatprep.subr.mxu0 0.0
  %641 = vmatpush2.msra.mxu0 0.0
  %642 = vmatprep.subr.mxu0 0.0
  %643 = vmatpush2.msra.mxu0 0.0
  %644 = vmatprep.subr.mxu0 0.0
  %645 = vmatpush2.msra.mxu0 0.0
  %646 = vmatprep.subr.mxu0 0.0
  %647 = vmatpush2.msra.mxu0 0.0
  %648 = vmatprep.subr.mxu0 0.0
  %649 = vmatpush2.msra.mxu0 0.0
  %650 = vmatprep.subr.mxu0 0.0
  %651 = vmatpush2.msra.mxu0 0.0
  %652 = vmatprep.subr.mxu0 0.0
  %653 = vmatpush2.msra.mxu0 0.0
  %654 = vmatprep.subr.mxu0 0.0
  %655 = vmatpush2.msra.mxu0 0.0
  %656 = vmatprep.subr.mxu0 0.0
  %657 = vmatpush2.msra.mxu0 0.0
  %658 = vmatprep.subr.mxu0 0.0
  %659 = vmatpush2.msra.mxu0 0.0
  %660 = vmatprep.subr.mxu0 0.0
  %661 = vmatpush2.msra.mxu0 0.0
  %662 = vmatprep.subr.mxu0 0.0
  %663 = vmatpush2.msra.mxu0 0.0
  %664 = vmatprep.subr.mxu0 0.0
  %665 = vmatpush2.msra.mxu0 0.0
  %666 = vmatprep.mubr.f32.mxu0 0.0
  %667 = vmatmul.mubr.f32.gmra.mxu0 %v600
  %v668 = vpop.f32.mrf.mxu0
  %v669 = vadd.f32 0.0, %v668
  %v670 = vpop.f32.mrf.mxu0
  %671 = vdwg.mxu0
  %v673 = vrot.slane %v669, 2
  %v675 = vadd.f32 %v155, %v673
  %v676 = vxor.u32 %v675, 2147483648
  %v677 = vmul.f32 %v676, 1.442695
  %v678 = vpow.pop %v677
  %v679 = vadd.f32 %v678, 1.0
  %v680 = vrcp.pop %v679
  %v681 = vmul.f32 1.0, %v680
  %v682 = vtanh.pop %v675
  %v684 = vrot.slane %v546, 6
  %v686 = vmul.f32 %v681, %v684
  %688 = vrot.lane.b32.xlu0 %v682, 64
  %v689 = vpop.permute.xlu0 %688
  %v691 = vmul.f32 %v681, %v689
  %693 = vrot.lane.b32.xlu0 %v691, 32
  %v694 = vpop.permute.xlu0 %693
  %v696 = vadd.f32 %v686, %v694
  %v697 = vtanh.pop %v696
  %699 = vrot.lane.b32.xlu0 %v697, 64
  %v700 = vpop.permute.xlu0 %699
  %v702 = vmul.f32 %v681, %v700
  %v703 = vmul.f32 %v702, %v273
  %705 = vrot.lane.b32.xlu0 %v703, 32
  %v706 = vpop.permute.xlu0 %705
  %vm708 = vcmask 261126
  %v709 = vsel %vm708, %v706, 0.0
  %710 = vadd.xlane.f32.xlu0 %v709
  %v711 = vpop.xlane.xlu0 %710
  %v712 = vadd.f32 %v711, %v284
  %v714 = vrot.slane %v712, 6
  %v716 = vmax.f32 %v566, %v714
  %v717 = vsub.f32 %v566, %v716
  %v718 = vmul.f32 %v717, 1.442695
  %v719 = vpow.pop %v718
  %v721 = vrot.slane %v716, 2
  %v723 = vsub.f32 %v712, %v721
  %v724 = vmul.f32 %v723, 1.442695
  %v725 = vpow.pop %v724
  %v726 = vmul.f32 %v719, %v580
  %v728 = vrot.slane %v725, 6
  %v730 = vadd.f32 %v726, %v728
  %732 = vset.pattern.permute.xlu0 0
  %733 = vperm.xlu0 %732, %v719
  %v734 = vpop.permute.xlu0 %733
  %v736 = vmul.f32 %v734, %v595
  %737 = vset.pattern.permute.xlu0 0
  %738 = vperm.xlu0 %737, %v725
  %v739 = vpop.permute.xlu0 %738
  %v741 = vmul.f32 %v739, %v702
  %v743 = vrot.slane %v741, 6
  %v745 = vadd.f32 %v736, %v743
  %v747 = vrot.slane %v702, 6
  %748 = vrot.lane.b32.xlu0 %v747, 32
  %v749 = vpop.permute.xlu0 %748
  %v750 = vsel %vm168, %v749, 0
  %752 = vmatprep.subr.mxu0 0.0
  %753 = vmatpush1.msra.mxu0 0.0
  %754 = vmatprep.subr.mxu0 0.0
  %755 = vmatpush1.msra.mxu0 0.0
  %756 = vmatprep.subr.mxu0 0.0
  %757 = vmatpush1.msra.mxu0 0.0
  %758 = vmatprep.subr.mxu0 0.0
  %759 = vmatpush1.msra.mxu0 0.0
  %760 = vmatprep.subr.mxu0 0.0
  %761 = vmatpush1.msra.mxu0 0.0
  %762 = vmatprep.subr.mxu0 0.0
  %763 = vmatpush1.msra.mxu0 0.0
  %764 = vmatprep.subr.mxu0 0.0
  %765 = vmatpush1.msra.mxu0 0.0
  %766 = vmatprep.subr.mxu0 0.0
  %767 = vmatpush1.msra.mxu0 0.0
  %768 = vmatprep.subr.mxu0 0.0
  %769 = vmatpush1.msra.mxu0 0.0
  %770 = vmatprep.subr.mxu0 0.0
  %771 = vmatpush1.msra.mxu0 0.0
  %772 = vmatprep.subr.mxu0 0.0
  %773 = vmatpush1.msra.mxu0 0.0
  %774 = vmatprep.subr.mxu0 0.0
  %775 = vmatpush1.msra.mxu0 0.0
  %776 = vmatprep.subr.mxu0 0.0
  %777 = vmatpush1.msra.mxu0 %v166
  %778 = vmatprep.subr.mxu0 0.0
  %779 = vmatpush1.msra.mxu0 %v165
  %780 = vmatprep.subr.mxu0 0.0
  %781 = vmatpush1.msra.mxu0 %v164
  %782 = vmatprep.subr.mxu0 0.0
  %783 = vmatpush1.msra.mxu0 %v163
  %784 = vmatprep.subr.mxu0 0.0
  %785 = vmatpush2.msra.mxu0 0.0
  %786 = vmatprep.subr.mxu0 0.0
  %787 = vmatpush2.msra.mxu0 0.0
  %788 = vmatprep.subr.mxu0 0.0
  %789 = vmatpush2.msra.mxu0 0.0
  %790 = vmatprep.subr.mxu0 0.0
  %791 = vmatpush2.msra.mxu0 0.0
  %792 = vmatprep.subr.mxu0 0.0
  %793 = vmatpush2.msra.mxu0 0.0
  %794 = vmatprep.subr.mxu0 0.0
  %795 = vmatpush2.msra.mxu0 0.0
  %796 = vmatprep.subr.mxu0 0.0
  %797 = vmatpush2.msra.mxu0 0.0
  %798 = vmatprep.subr.mxu0 0.0
  %799 = vmatpush2.msra.mxu0 0.0
  %800 = vmatprep.subr.mxu0 0.0
  %801 = vmatpush2.msra.mxu0 0.0
  %802 = vmatprep.subr.mxu0 0.0
  %803 = vmatpush2.msra.mxu0 0.0
  %804 = vmatprep.subr.mxu0 0.0
  %805 = vmatpush2.msra.mxu0 0.0
  %806 = vmatprep.subr.mxu0 0.0
  %807 = vmatpush2.msra.mxu0 0.0
  %808 = vmatprep.subr.mxu0 0.0
  %809 = vmatpush2.msra.mxu0 0.0
  %810 = vmatprep.subr.mxu0 0.0
  %811 = vmatpush2.msra.mxu0 0.0
  %812 = vmatprep.subr.mxu0 0.0
  %813 = vmatpush2.msra.mxu0 0.0
  %814 = vmatprep.subr.mxu0 0.0
  %815 = vmatpush2.msra.mxu0 0.0
  %816 = vmatprep.mubr.f32.mxu0 0.0
  %817 = vmatmul.mubr.f32.gmra.mxu0 %v750
  %v818 = vpop.f32.mrf.mxu0
  %v819 = vadd.f32 0.0, %v818
  %v820 = vpop.f32.mrf.mxu0
  %821 = vdwg.mxu0
  %v822 = vadd.f32 %v160, %v819
  %v823 = vxor.u32 %v822, 2147483648
  %v824 = vmul.f32 %v823, 1.442695
  %v825 = vpow.pop %v824
  %v826 = vadd.f32 %v825, 1.0
  %v827 = vrcp.pop %v826
  %v828 = vmul.f32 1.0, %v827
  %v829 = vtanh.pop %v822
  %v831 = vrot.slane %v696, 6
  %v833 = vmul.f32 %v828, %v831
  %835 = vrot.lane.b32.xlu0 %v829, 64
  %v836 = vpop.permute.xlu0 %835
  %v838 = vmul.f32 %v828, %v836
  %840 = vrot.lane.b32.xlu0 %v838, 32
  %v841 = vpop.permute.xlu0 %840
  %v843 = vadd.f32 %v833, %v841
  %v844 = vtanh.pop %v843
  %846 = vrot.lane.b32.xlu0 %v844, 64
  %v847 = vpop.permute.xlu0 %846
  %v849 = vmul.f32 %v828, %v847
  %v850 = vmul.f32 %v849, %v273
  %852 = vrot.lane.b32.xlu0 %v850, 32
  %v853 = vpop.permute.xlu0 %852
  %v855 = vsel %vm280, %v853, 0.0
  %856 = vadd.xlane.f32.xlu0 %v855
  %v857 = vpop.xlane.xlu0 %856
  %v858 = vadd.f32 %v857, %v284
  %v859 = vmax.f32 %v716, %v858
  %v860 = vsub.f32 %v716, %v859
  %v861 = vmul.f32 %v860, 1.442695
  %v862 = vpow.pop %v861
  %v863 = vsub.f32 %v858, %v859
  %v864 = vmul.f32 %v863, 1.442695
  %v865 = vpow.pop %v864
  %v866 = vmul.f32 %v862, %v730
  %v867 = vadd.f32 %v866, %v865
  %869 = vset.pattern.permute.xlu0 0
  %870 = vperm.xlu0 %869, %v862
  %v871 = vpop.permute.xlu0 %870
  %v873 = vmul.f32 %v871, %v745
  %875 = vset.pattern.permute.xlu0 0
  %876 = vperm.xlu0 %875, %v865
  %v877 = vpop.permute.xlu0 %876
  %v879 = vmul.f32 %v877, %v849
  %v880 = vadd.f32 %v873, %v879
  %882 = vrot.lane.b32.xlu0 %v849, 32
  %v883 = vpop.permute.xlu0 %882
  %v884 = vsel %vm168, %v883, 0
  %886 = vmatprep.subr.mxu0 0.0
  %887 = vmatpush1.msra.mxu0 0.0
  %888 = vmatprep.subr.mxu0 0.0
  %889 = vmatpush1.msra.mxu0 0.0
  %890 = vmatprep.subr.mxu0 0.0
  %891 = vmatpush1.msra.mxu0 0.0
  %892 = vmatprep.subr.mxu0 0.0
  %893 = vmatpush1.msra.mxu0 0.0
  %894 = vmatprep.subr.mxu0 0.0
  %895 = vmatpush1.msra.mxu0 0.0
  %896 = vmatprep.subr.mxu0 0.0
  %897 = vmatpush1.msra.mxu0 0.0
  %898 = vmatprep.subr.mxu0 0.0
  %899 = vmatpush1.msra.mxu0 0.0
  %900 = vmatprep.subr.mxu0 0.0
  %901 = vmatpush1.msra.mxu0 0.0
  %902 = vmatprep.subr.mxu0 0.0
  %903 = vmatpush1.msra.mxu0 0.0
  %904 = vmatprep.subr.mxu0 0.0
  %905 = vmatpush1.msra.mxu0 0.0
  %906 = vmatprep.subr.mxu0 0.0
  %907 = vmatpush1.msra.mxu0 0.0
  %908 = vmatprep.subr.mxu0 0.0
  %909 = vmatpush1.msra.mxu0 0.0
  %910 = vmatprep.subr.mxu0 0.0
  %911 = vmatpush1.msra.mxu0 %v166
  %912 = vmatprep.subr.mxu0 0.0
  %913 = vmatpush1.msra.mxu0 %v165
  %914 = vmatprep.subr.mxu0 0.0
  %915 = vmatpush1.msra.mxu0 %v164
  %916 = vmatprep.subr.mxu0 0.0
  %917 = vmatpush1.msra.mxu0 %v163
  %918 = vmatprep.subr.mxu0 0.0
  %919 = vmatpush2.msra.mxu0 0.0
  %920 = vmatprep.subr.mxu0 0.0
  %921 = vmatpush2.msra.mxu0 0.0
  %922 = vmatprep.subr.mxu0 0.0
  %923 = vmatpush2.msra.mxu0 0.0
  %924 = vmatprep.subr.mxu0 0.0
  %925 = vmatpush2.msra.mxu0 0.0
  %926 = vmatprep.subr.mxu0 0.0
  %927 = vmatpush2.msra.mxu0 0.0
  %928 = vmatprep.subr.mxu0 0.0
  %929 = vmatpush2.msra.mxu0 0.0
  %930 = vmatprep.subr.mxu0 0.0
  %931 = vmatpush2.msra.mxu0 0.0
  %932 = vmatprep.subr.mxu0 0.0
  %933 = vmatpush2.msra.mxu0 0.0
  %934 = vmatprep.subr.mxu0 0.0
  %935 = vmatpush2.msra.mxu0 0.0
  %936 = vmatprep.subr.mxu0 0.0
  %937 = vmatpush2.msra.mxu0 0.0
  %938 = vmatprep.subr.mxu0 0.0
  %939 = vmatpush2.msra.mxu0 0.0
  %940 = vmatprep.subr.mxu0 0.0
  %941 = vmatpush2.msra.mxu0 0.0
  %942 = vmatprep.subr.mxu0 0.0
  %943 = vmatpush2.msra.mxu0 0.0
  %944 = vmatprep.subr.mxu0 0.0
  %945 = vmatpush2.msra.mxu0 0.0
  %946 = vmatprep.subr.mxu0 0.0
  %947 = vmatpush2.msra.mxu0 0.0
  %948 = vmatprep.subr.mxu0 0.0
  %949 = vmatpush2.msra.mxu0 0.0
  %950 = vmatprep.mubr.f32.mxu0 0.0
  %951 = vmatmul.mubr.f32.gmra.mxu0 %v884
  %v952 = vpop.f32.mrf.mxu0
  %v953 = vadd.f32 0.0, %v952
  %v954 = vpop.f32.mrf.mxu0
  %955 = vdwg.mxu0
  %v957 = vrot.slane %v953, 6
  %v959 = vadd.f32 %v160, %v957
  %v960 = vxor.u32 %v959, 2147483648
  %v961 = vmul.f32 %v960, 1.442695
  %v962 = vpow.pop %v961
  %v963 = vadd.f32 %v962, 1.0
  %v964 = vrcp.pop %v963
  %v965 = vmul.f32 1.0, %v964
  %v966 = vtanh.pop %v959
  %v968 = vrot.slane %v843, 6
  %v970 = vmul.f32 %v965, %v968
  %972 = vrot.lane.b32.xlu0 %v966, 64
  %v973 = vpop.permute.xlu0 %972
  %v975 = vmul.f32 %v965, %v973
  %977 = vrot.lane.b32.xlu0 %v975, 32
  %v978 = vpop.permute.xlu0 %977
  %v980 = vadd.f32 %v970, %v978
  %v981 = vtanh.pop %v980
  %983 = vrot.lane.b32.xlu0 %v981, 64
  %v984 = vpop.permute.xlu0 %983
  %v986 = vmul.f32 %v965, %v984
  %v987 = vmul.f32 %v986, %v273
  %989 = vrot.lane.b32.xlu0 %v987, 32
  %v990 = vpop.permute.xlu0 %989
  %v992 = vsel %vm408, %v990, 0.0
  %993 = vadd.xlane.f32.xlu0 %v992
  %v994 = vpop.xlane.xlu0 %993
  %v995 = vadd.f32 %v994, %v284
  %v997 = vrot.slane %v995, 2
  %v999 = vmax.f32 %v859, %v997
  %v1000 = vsub.f32 %v859, %v999
  %v1001 = vmul.f32 %v1000, 1.442695
  %v1002 = vpow.pop %v1001
  %v1004 = vrot.slane %v999, 6
  %v1006 = vsub.f32 %v995, %v1004
  %v1007 = vmul.f32 %v1006, 1.442695
  %v1008 = vpow.pop %v1007
  %v1009 = vmul.f32 %v1002, %v867
  %v1011 = vrot.slane %v1008, 2
  %v1013 = vadd.f32 %v1009, %v1011
  %1015 = vset.pattern.permute.xlu0 0
  %1016 = vperm.xlu0 %1015, %v1002
  %v1017 = vpop.permute.xlu0 %1016
  %v1019 = vmul.f32 %v1017, %v880
  %1020 = vset.pattern.permute.xlu0 0
  %1021 = vperm.xlu0 %1020, %v1008
  %v1022 = vpop.permute.xlu0 %1021
  %v1024 = vmul.f32 %v1022, %v986
  %v1026 = vrot.slane %v1024, 2
  %v1028 = vadd.f32 %v1019, %v1026
  %v1030 = vrot.slane %v986, 2
  %1031 = vrot.lane.b32.xlu0 %v1030, 32
  %v1032 = vpop.permute.xlu0 %1031
  %v1033 = vsel %vm168, %v1032, 0
  %1035 = vmatprep.subr.mxu0 0.0
  %1036 = vmatpush1.msra.mxu0 0.0
  %1037 = vmatprep.subr.mxu0 0.0
  %1038 = vmatpush1.msra.mxu0 0.0
  %1039 = vmatprep.subr.mxu0 0.0
  %1040 = vmatpush1.msra.mxu0 0.0
  %1041 = vmatprep.subr.mxu0 0.0
  %1042 = vmatpush1.msra.mxu0 0.0
  %1043 = vmatprep.subr.mxu0 0.0
  %1044 = vmatpush1.msra.mxu0 0.0
  %1045 = vmatprep.subr.mxu0 0.0
  %1046 = vmatpush1.msra.mxu0 0.0
  %1047 = vmatprep.subr.mxu0 0.0
  %1048 = vmatpush1.msra.mxu0 0.0
  %1049 = vmatprep.subr.mxu0 0.0
  %1050 = vmatpush1.msra.mxu0 0.0
  %1051 = vmatprep.subr.mxu0 0.0
  %1052 = vmatpush1.msra.mxu0 0.0
  %1053 = vmatprep.subr.mxu0 0.0
  %1054 = vmatpush1.msra.mxu0 0.0
  %1055 = vmatprep.subr.mxu0 0.0
  %1056 = vmatpush1.msra.mxu0 0.0
  %1057 = vmatprep.subr.mxu0 0.0
  %1058 = vmatpush1.msra.mxu0 0.0
  %1059 = vmatprep.subr.mxu0 0.0
  %1060 = vmatpush1.msra.mxu0 %v166
  %1061 = vmatprep.subr.mxu0 0.0
  %1062 = vmatpush1.msra.mxu0 %v165
  %1063 = vmatprep.subr.mxu0 0.0
  %1064 = vmatpush1.msra.mxu0 %v164
  %1065 = vmatprep.subr.mxu0 0.0
  %1066 = vmatpush1.msra.mxu0 %v163
  %1067 = vmatprep.subr.mxu0 0.0
  %1068 = vmatpush2.msra.mxu0 0.0
  %1069 = vmatprep.subr.mxu0 0.0
  %1070 = vmatpush2.msra.mxu0 0.0
  %1071 = vmatprep.subr.mxu0 0.0
  %1072 = vmatpush2.msra.mxu0 0.0
  %1073 = vmatprep.subr.mxu0 0.0
  %1074 = vmatpush2.msra.mxu0 0.0
  %1075 = vmatprep.subr.mxu0 0.0
  %1076 = vmatpush2.msra.mxu0 0.0
  %1077 = vmatprep.subr.mxu0 0.0
  %1078 = vmatpush2.msra.mxu0 0.0
  %1079 = vmatprep.subr.mxu0 0.0
  %1080 = vmatpush2.msra.mxu0 0.0
  %1081 = vmatprep.subr.mxu0 0.0
  %1082 = vmatpush2.msra.mxu0 0.0
  %1083 = vmatprep.subr.mxu0 0.0
  %1084 = vmatpush2.msra.mxu0 0.0
  %1085 = vmatprep.subr.mxu0 0.0
  %1086 = vmatpush2.msra.mxu0 0.0
  %1087 = vmatprep.subr.mxu0 0.0
  %1088 = vmatpush2.msra.mxu0 0.0
  %1089 = vmatprep.subr.mxu0 0.0
  %1090 = vmatpush2.msra.mxu0 0.0
  %1091 = vmatprep.subr.mxu0 0.0
  %1092 = vmatpush2.msra.mxu0 0.0
  %1093 = vmatprep.subr.mxu0 0.0
  %1094 = vmatpush2.msra.mxu0 0.0
  %1095 = vmatprep.subr.mxu0 0.0
  %1096 = vmatpush2.msra.mxu0 0.0
  %1097 = vmatprep.subr.mxu0 0.0
  %1098 = vmatpush2.msra.mxu0 0.0
  %1099 = vmatprep.mubr.f32.mxu0 0.0
  %1100 = vmatmul.mubr.f32.gmra.mxu0 %v1033
  %v1101 = vpop.f32.mrf.mxu0
  %v1102 = vadd.f32 0.0, %v1101
  %v1103 = vpop.f32.mrf.mxu0
  %1104 = vdwg.mxu0
  %v1106 = vrot.slane %v1102, 4
  %v1108 = vadd.f32 %v160, %v1106
  %v1109 = vxor.u32 %v1108, 2147483648
  %v1110 = vmul.f32 %v1109, 1.442695
  %v1111 = vpow.pop %v1110
  %v1112 = vadd.f32 %v1111, 1.0
  %v1113 = vrcp.pop %v1112
  %v1114 = vmul.f32 1.0, %v1113
  %v1115 = vtanh.pop %v1108
  %v1117 = vrot.slane %v980, 6
  %v1119 = vmul.f32 %v1114, %v1117
  %1121 = vrot.lane.b32.xlu0 %v1115, 64
  %v1122 = vpop.permute.xlu0 %1121
  %v1124 = vmul.f32 %v1114, %v1122
  %1126 = vrot.lane.b32.xlu0 %v1124, 32
  %v1127 = vpop.permute.xlu0 %1126
  %v1129 = vadd.f32 %v1119, %v1127
  %v1130 = vtanh.pop %v1129
  %1132 = vrot.lane.b32.xlu0 %v1130, 64
  %v1133 = vpop.permute.xlu0 %1132
  %v1135 = vmul.f32 %v1114, %v1133
  %v1136 = vmul.f32 %v1135, %v273
  %1138 = vrot.lane.b32.xlu0 %v1136, 32
  %v1139 = vpop.permute.xlu0 %1138
  %v1141 = vsel %vm558, %v1139, 0.0
  %1142 = vadd.xlane.f32.xlu0 %v1141
  %v1143 = vpop.xlane.xlu0 %1142
  %v1144 = vadd.f32 %v1143, %v284
  %v1146 = vrot.slane %v1144, 4
  %v1148 = vmax.f32 %v999, %v1146
  %v1149 = vsub.f32 %v999, %v1148
  %v1150 = vmul.f32 %v1149, 1.442695
  %v1151 = vpow.pop %v1150
  %v1153 = vrot.slane %v1148, 4
  %v1155 = vsub.f32 %v1144, %v1153
  %v1156 = vmul.f32 %v1155, 1.442695
  %v1157 = vpow.pop %v1156
  %v1158 = vmul.f32 %v1151, %v1013
  %v1160 = vrot.slane %v1157, 4
  %v1162 = vadd.f32 %v1158, %v1160
  %1164 = vset.pattern.permute.xlu0 0
  %1165 = vperm.xlu0 %1164, %v1151
  %v1166 = vpop.permute.xlu0 %1165
  %v1168 = vmul.f32 %v1166, %v1028
  %1169 = vset.pattern.permute.xlu0 0
  %1170 = vperm.xlu0 %1169, %v1157
  %v1171 = vpop.permute.xlu0 %1170
  %v1173 = vmul.f32 %v1171, %v1135
  %v1175 = vrot.slane %v1173, 4
  %v1177 = vadd.f32 %v1168, %v1175
  %v1179 = vrot.slane %v1135, 4
  %1180 = vrot.lane.b32.xlu0 %v1179, 32
  %v1181 = vpop.permute.xlu0 %1180
  %v1182 = vsel %vm168, %v1181, 0
  %1184 = vmatprep.subr.mxu0 0.0
  %1185 = vmatpush1.msra.mxu0 0.0
  %1186 = vmatprep.subr.mxu0 0.0
  %1187 = vmatpush1.msra.mxu0 0.0
  %1188 = vmatprep.subr.mxu0 0.0
  %1189 = vmatpush1.msra.mxu0 0.0
  %1190 = vmatprep.subr.mxu0 0.0
  %1191 = vmatpush1.msra.mxu0 0.0
  %1192 = vmatprep.subr.mxu0 0.0
  %1193 = vmatpush1.msra.mxu0 0.0
  %1194 = vmatprep.subr.mxu0 0.0
  %1195 = vmatpush1.msra.mxu0 0.0
  %1196 = vmatprep.subr.mxu0 0.0
  %1197 = vmatpush1.msra.mxu0 0.0
  %1198 = vmatprep.subr.mxu0 0.0
  %1199 = vmatpush1.msra.mxu0 0.0
  %1200 = vmatprep.subr.mxu0 0.0
  %1201 = vmatpush1.msra.mxu0 0.0
  %1202 = vmatprep.subr.mxu0 0.0
  %1203 = vmatpush1.msra.mxu0 0.0
  %1204 = vmatprep.subr.mxu0 0.0
  %1205 = vmatpush1.msra.mxu0 0.0
  %1206 = vmatprep.subr.mxu0 0.0
  %1207 = vmatpush1.msra.mxu0 0.0
  %1208 = vmatprep.subr.mxu0 0.0
  %1209 = vmatpush1.msra.mxu0 %v166
  %1210 = vmatprep.subr.mxu0 0.0
  %1211 = vmatpush1.msra.mxu0 %v165
  %1212 = vmatprep.subr.mxu0 0.0
  %1213 = vmatpush1.msra.mxu0 %v164
  %1214 = vmatprep.subr.mxu0 0.0
  %1215 = vmatpush1.msra.mxu0 %v163
  %1216 = vmatprep.subr.mxu0 0.0
  %1217 = vmatpush2.msra.mxu0 0.0
  %1218 = vmatprep.subr.mxu0 0.0
  %1219 = vmatpush2.msra.mxu0 0.0
  %1220 = vmatprep.subr.mxu0 0.0
  %1221 = vmatpush2.msra.mxu0 0.0
  %1222 = vmatprep.subr.mxu0 0.0
  %1223 = vmatpush2.msra.mxu0 0.0
  %1224 = vmatprep.subr.mxu0 0.0
  %1225 = vmatpush2.msra.mxu0 0.0
  %1226 = vmatprep.subr.mxu0 0.0
  %1227 = vmatpush2.msra.mxu0 0.0
  %1228 = vmatprep.subr.mxu0 0.0
  %1229 = vmatpush2.msra.mxu0 0.0
  %1230 = vmatprep.subr.mxu0 0.0
  %1231 = vmatpush2.msra.mxu0 0.0
  %1232 = vmatprep.subr.mxu0 0.0
  %1233 = vmatpush2.msra.mxu0 0.0
  %1234 = vmatprep.subr.mxu0 0.0
  %1235 = vmatpush2.msra.mxu0 0.0
  %1236 = vmatprep.subr.mxu0 0.0
  %1237 = vmatpush2.msra.mxu0 0.0
  %1238 = vmatprep.subr.mxu0 0.0
  %1239 = vmatpush2.msra.mxu0 0.0
  %1240 = vmatprep.subr.mxu0 0.0
  %1241 = vmatpush2.msra.mxu0 0.0
  %1242 = vmatprep.subr.mxu0 0.0
  %1243 = vmatpush2.msra.mxu0 0.0
  %1244 = vmatprep.subr.mxu0 0.0
  %1245 = vmatpush2.msra.mxu0 0.0
  %1246 = vmatprep.subr.mxu0 0.0
  %1247 = vmatpush2.msra.mxu0 0.0
  %1248 = vmatprep.mubr.f32.mxu0 0.0
  %1249 = vmatmul.mubr.f32.gmra.mxu0 %v1182
  %v1250 = vpop.f32.mrf.mxu0
  %v1251 = vadd.f32 0.0, %v1250
  %v1252 = vpop.f32.mrf.mxu0
  %1253 = vdwg.mxu0
  %v1255 = vrot.slane %v1251, 2
  %v1257 = vadd.f32 %v160, %v1255
  %v1258 = vxor.u32 %v1257, 2147483648
  %v1259 = vmul.f32 %v1258, 1.442695
  %v1260 = vpow.pop %v1259
  %v1261 = vadd.f32 %v1260, 1.0
  %v1262 = vrcp.pop %v1261
  %v1263 = vmul.f32 1.0, %v1262
  %v1264 = vtanh.pop %v1257
  %v1266 = vrot.slane %v1129, 6
  %v1268 = vmul.f32 %v1263, %v1266
  %1270 = vrot.lane.b32.xlu0 %v1264, 64
  %v1271 = vpop.permute.xlu0 %1270
  %v1273 = vmul.f32 %v1263, %v1271
  %1275 = vrot.lane.b32.xlu0 %v1273, 32
  %v1276 = vpop.permute.xlu0 %1275
  %v1278 = vadd.f32 %v1268, %v1276
  %v1279 = vtanh.pop %v1278
  %1281 = vrot.lane.b32.xlu0 %v1279, 64
  %v1282 = vpop.permute.xlu0 %1281
  %v1284 = vmul.f32 %v1263, %v1282
  %v1285 = vmul.f32 %v1284, %v273
  %1287 = vrot.lane.b32.xlu0 %v1285, 32
  %v1288 = vpop.permute.xlu0 %1287
  %v1290 = vsel %vm708, %v1288, 0.0
  %1291 = vadd.xlane.f32.xlu0 %v1290
  %v1292 = vpop.xlane.xlu0 %1291
  %v1293 = vadd.f32 %v1292, %v284
  %v1295 = vrot.slane %v1293, 6
  %v1297 = vmax.f32 %v1148, %v1295
  %v1298 = vsub.f32 %v1148, %v1297
  %v1299 = vmul.f32 %v1298, 1.442695
  %v1300 = vpow.pop %v1299
  %v1302 = vrot.slane %v1297, 2
  %v1304 = vsub.f32 %v1293, %v1302
  %v1305 = vmul.f32 %v1304, 1.442695
  %v1306 = vpow.pop %v1305
  %v1307 = vmul.f32 %v1300, %v1162
  %v1309 = vrot.slane %v1306, 6
  %v1311 = vadd.f32 %v1307, %v1309
  %1313 = vset.pattern.permute.xlu0 0
  %1314 = vperm.xlu0 %1313, %v1300
  %v1315 = vpop.permute.xlu0 %1314
  %v1317 = vmul.f32 %v1315, %v1177
  %1318 = vset.pattern.permute.xlu0 0
  %1319 = vperm.xlu0 %1318, %v1306
  %v1320 = vpop.permute.xlu0 %1319
  %v1322 = vmul.f32 %v1320, %v1284
  %v1324 = vrot.slane %v1322, 6
  %v1326 = vadd.f32 %v1317, %v1324
  %v1327 = vrcp.pop %v1311
  %1329 = vset.pattern.permute.xlu0 0
  %1330 = vperm.xlu0 %1329, %v1327
  %v1331 = vpop.permute.xlu0 %1330
  %v1333 = vmul.f32 %v1326, %v1331
  %s1334 = sld [smem:[#allocation4]]
  %v1335 = vld [vmem:[%s1] sm:$0xff]
  %v1336 = vld [vmem:[%s1 + $0x8] sm:$0xff]
  %v1337 = vld [vmem:[%s6] sm:$0xff]
  %v1338 = vld [vmem:[%s6 + $0x8] sm:$0xff]
  %v1339 = vld [vmem:[%s8] sm:$0x1]
  %v1341 = vlaneseq
  %v1342 = vshrl.u32 %v1341, 7
  %v1343 = vsub.s32 0, %v1342
  %v1344 = vrot.slane %v1339, %v1343
  %v1347 = vsel %vm81, %v1335, 0
  %v1350 = vsel %vm81, %v1336, 0
  %1352 = vmatprep.subr.mxu0 0.0
  %1353 = vmatpush1.msra.mxu0 0.0
  %1354 = vmatprep.subr.mxu0 0.0
  %1355 = vmatpush1.msra.mxu0 0.0
  %1356 = vmatprep.subr.mxu0 0.0
  %1357 = vmatpush1.msra.mxu0 0.0
  %1358 = vmatprep.subr.mxu0 0.0
  %1359 = vmatpush1.msra.mxu0 0.0
  %1360 = vmatprep.subr.mxu0 0.0
  %1361 = vmatpush1.msra.mxu0 0.0
  %1362 = vmatprep.subr.mxu0 0.0
  %1363 = vmatpush1.msra.mxu0 0.0
  %1364 = vmatprep.subr.mxu0 0.0
  %1365 = vmatpush1.msra.mxu0 0.0
  %1366 = vmatprep.subr.mxu0 0.0
  %1367 = vmatpush1.msra.mxu0 0.0
  %1368 = vmatprep.subr.mxu0 0.0
  %1369 = vmatpush1.msra.mxu0 0.0
  %1370 = vmatprep.subr.mxu0 0.0
  %1371 = vmatpush1.msra.mxu0 0.0
  %1372 = vmatprep.subr.mxu0 0.0
  %1373 = vmatpush1.msra.mxu0 0.0
  %1374 = vmatprep.subr.mxu0 0.0
  %1375 = vmatpush1.msra.mxu0 0.0
  %1376 = vmatprep.subr.mxu0 0.0
  %1377 = vmatpush1.msra.mxu0 0.0
  %1378 = vmatprep.subr.mxu0 0.0
  %1379 = vmatpush1.msra.mxu0 0.0
  %1380 = vmatprep.subr.mxu0 0.0
  %1381 = vmatpush1.msra.mxu0 %v1338
  %1382 = vmatprep.subr.mxu0 0.0
  %1383 = vmatpush1.msra.mxu0 %v1337
  %1384 = vmatprep.subr.mxu0 0.0
  %1385 = vmatpush2.msra.mxu0 0.0
  %1386 = vmatprep.subr.mxu0 0.0
  %1387 = vmatpush2.msra.mxu0 0.0
  %1388 = vmatprep.subr.mxu0 0.0
  %1389 = vmatpush2.msra.mxu0 0.0
  %1390 = vmatprep.subr.mxu0 0.0
  %1391 = vmatpush2.msra.mxu0 0.0
  %1392 = vmatprep.subr.mxu0 0.0
  %1393 = vmatpush2.msra.mxu0 0.0
  %1394 = vmatprep.subr.mxu0 0.0
  %1395 = vmatpush2.msra.mxu0 0.0
  %1396 = vmatprep.subr.mxu0 0.0
  %1397 = vmatpush2.msra.mxu0 0.0
  %1398 = vmatprep.subr.mxu0 0.0
  %1399 = vmatpush2.msra.mxu0 0.0
  %1400 = vmatprep.subr.mxu0 0.0
  %1401 = vmatpush2.msra.mxu0 0.0
  %1402 = vmatprep.subr.mxu0 0.0
  %1403 = vmatpush2.msra.mxu0 0.0
  %1404 = vmatprep.subr.mxu0 0.0
  %1405 = vmatpush2.msra.mxu0 0.0
  %1406 = vmatprep.subr.mxu0 0.0
  %1407 = vmatpush2.msra.mxu0 0.0
  %1408 = vmatprep.subr.mxu0 0.0
  %1409 = vmatpush2.msra.mxu0 0.0
  %1410 = vmatprep.subr.mxu0 0.0
  %1411 = vmatpush2.msra.mxu0 0.0
  %1412 = vmatprep.subr.mxu0 0.0
  %1413 = vmatpush2.msra.mxu0 0.0
  %1414 = vmatprep.subr.mxu0 0.0
  %1415 = vmatpush2.msra.mxu0 0.0
  %1416 = vmatprep.mubr.f32.mxu0 0.0
  %1417 = vmatmul.mubr.f32.gmra.mxu0 %v1347
  %v1418 = vpop.f32.mrf.mxu0
  %v1419 = vadd.f32 %v1344, %v1418
  %v1420 = vpop.f32.mrf.mxu0
  %1421 = vmatprep.mubr.f32.mxu0 0.0
  %1422 = vmatmul.mubr.f32.gmra.mxu0 %v1350
  %v1423 = vpop.f32.mrf.mxu0
  %v1424 = vadd.f32 %v1344, %v1423
  %v1425 = vpop.f32.mrf.mxu0
  %1426 = vdwg.mxu0
  %v1427 = vld [vmem:[%s7] sm:$0xff]
  %v1428 = vld [vmem:[%s7 + $0x8] sm:$0xff]
  %v1429 = vld [vmem:[%s7 + $0x10] sm:$0xff]
  %v1430 = vld [vmem:[%s7 + $0x18] sm:$0xff]
  %v1431 = vld [vmem:[%s9] sm:$0x1]
  %1432 = vmatprep.subr.mxu0 0.0
  %1433 = vmatpush1.msra.mxu0 0.0
  %1434 = vmatprep.subr.mxu0 0.0
  %1435 = vmatpush1.msra.mxu0 0.0
  %1436 = vmatprep.subr.mxu0 0.0
  %1437 = vmatpush1.msra.mxu0 0.0
  %1438 = vmatprep.subr.mxu0 0.0
  %1439 = vmatpush1.msra.mxu0 0.0
  %1440 = vmatprep.subr.mxu0 0.0
  %1441 = vmatpush1.msra.mxu0 0.0
  %1442 = vmatprep.subr.mxu0 0.0
  %1443 = vmatpush1.msra.mxu0 0.0
  %1444 = vmatprep.subr.mxu0 0.0
  %1445 = vmatpush1.msra.mxu0 0.0
  %1446 = vmatprep.subr.mxu0 0.0
  %1447 = vmatpush1.msra.mxu0 0.0
  %1448 = vmatprep.subr.mxu0 0.0
  %1449 = vmatpush1.msra.mxu0 0.0
  %1450 = vmatprep.subr.mxu0 0.0
  %1451 = vmatpush1.msra.mxu0 0.0
  %1452 = vmatprep.subr.mxu0 0.0
  %1453 = vmatpush1.msra.mxu0 0.0
  %1454 = vmatprep.subr.mxu0 0.0
  %1455 = vmatpush1.msra.mxu0 0.0
  %1456 = vmatprep.subr.mxu0 0.0
  %1457 = vmatpush1.msra.mxu0 %v1430
  %1458 = vmatprep.subr.mxu0 0.0
  %1459 = vmatpush1.msra.mxu0 %v1429
  %1460 = vmatprep.subr.mxu0 0.0
  %1461 = vmatpush1.msra.mxu0 %v1428
  %1462 = vmatprep.subr.mxu0 0.0
  %1463 = vmatpush1.msra.mxu0 %v1427
  %1464 = vmatprep.subr.mxu0 0.0
  %1465 = vmatpush2.msra.mxu0 0.0
  %1466 = vmatprep.subr.mxu0 0.0
  %1467 = vmatpush2.msra.mxu0 0.0
  %1468 = vmatprep.subr.mxu0 0.0
  %1469 = vmatpush2.msra.mxu0 0.0
  %1470 = vmatprep.subr.mxu0 0.0
  %1471 = vmatpush2.msra.mxu0 0.0
  %1472 = vmatprep.subr.mxu0 0.0
  %1473 = vmatpush2.msra.mxu0 0.0
  %1474 = vmatprep.subr.mxu0 0.0
  %1475 = vmatpush2.msra.mxu0 0.0
  %1476 = vmatprep.subr.mxu0 0.0
  %1477 = vmatpush2.msra.mxu0 0.0
  %1478 = vmatprep.subr.mxu0 0.0
  %1479 = vmatpush2.msra.mxu0 0.0
  %1480 = vmatprep.subr.mxu0 0.0
  %1481 = vmatpush2.msra.mxu0 0.0
  %1482 = vmatprep.subr.mxu0 0.0
  %1483 = vmatpush2.msra.mxu0 0.0
  %1484 = vmatprep.subr.mxu0 0.0
  %1485 = vmatpush2.msra.mxu0 0.0
  %1486 = vmatprep.subr.mxu0 0.0
  %1487 = vmatpush2.msra.mxu0 0.0
  %1488 = vmatprep.subr.mxu0 0.0
  %1489 = vmatpush2.msra.mxu0 0.0
  %1490 = vmatprep.subr.mxu0 0.0
  %1491 = vmatpush2.msra.mxu0 0.0
  %1492 = vmatprep.subr.mxu0 0.0
  %1493 = vmatpush2.msra.mxu0 0.0
  %1494 = vmatprep.subr.mxu0 0.0
  %1495 = vmatpush2.msra.mxu0 0.0
  %1496 = vmatprep.mubr.f32.mxu0 0.0
  %1497 = vmatmul.mubr.f32.gmra.mxu0 %v170
  %v1498 = vpop.f32.mrf.mxu0
  %v1499 = vadd.f32 0.0, %v1498
  %v1500 = vpop.f32.mrf.mxu0
  %1501 = vdwg.mxu0
  %v1502 = vadd.f32 %v1419, %v1499
  %v1503 = vxor.u32 %v1502, 2147483648
  %v1504 = vmul.f32 %v1503, 1.442695
  %v1505 = vpow.pop %v1504
  %v1506 = vadd.f32 %v1505, 1.0
  %v1507 = vrcp.pop %v1506
  %v1508 = vmul.f32 1.0, %v1507
  %v1509 = vtanh.pop %v1502
  %v1510 = vmul.f32 %v1508, 0.0
  %1512 = vrot.lane.b32.xlu0 %v1509, 64
  %v1513 = vpop.permute.xlu0 %1512
  %v1515 = vmul.f32 %v1508, %v1513
  %1517 = vrot.lane.b32.xlu0 %v1515, 32
  %v1518 = vpop.permute.xlu0 %1517
  %v1520 = vadd.f32 %v1510, %v1518
  %v1521 = vtanh.pop %v1520
  %1523 = vrot.lane.b32.xlu0 %v1521, 64
  %v1524 = vpop.permute.xlu0 %1523
  %v1526 = vmul.f32 %v1508, %v1524
  %v1528 = vlaneseq
  %v1529 = vshrl.u32 %v1528, 7
  %v1530 = vsub.s32 0, %v1529
  %v1531 = vrot.slane %v1431, %v1530
  %1532 = vrot.lane.b32.xlu0 %v1531, 96
  %v1533 = vpop.permute.xlu0 %1532
  %v1535 = vmul.f32 %v1526, %v1533
  %1537 = vrot.lane.b32.xlu0 %v1535, 32
  %v1538 = vpop.permute.xlu0 %1537
  %v1540 = vsel %vm280, %v1538, 0.0
  %1541 = vadd.xlane.f32.xlu0 %v1540
  %v1542 = vpop.xlane.xlu0 %1541
  %v1543 = vstv %s1334
  %v1544 = vadd.f32 %v1542, %v1543
  %v1545 = vmax.f32 %v1544, -1e+30
  %v1546 = vsub.f32 -1e+30, %v1545
  %v1547 = vmul.f32 %v1546, 1.442695
  %v1548 = vpow.pop %v1547
  %v1549 = vsub.f32 %v1544, %v1545
  %v1550 = vmul.f32 %v1549, 1.442695
  %v1551 = vpow.pop %v1550
  %v1552 = vmul.f32 %v1548, 0.0
  %v1553 = vadd.f32 %v1552, %v1551
  %v1554 = vmul.f32 %v1551, %v1526
  %v1555 = vadd.f32 %v1552, %v1554
  %1557 = vrot.lane.b32.xlu0 %v1526, 32
  %v1558 = vpop.permute.xlu0 %1557
  %v1559 = vsel %vm168, %v1558, 0
  %1561 = vmatprep.subr.mxu0 0.0
  %1562 = vmatpush1.msra.mxu0 0.0
  %1563 = vmatprep.subr.mxu0 0.0
  %1564 = vmatpush1.msra.mxu0 0.0
  %1565 = vmatprep.subr.mxu0 0.0
  %1566 = vmatpush1.msra.mxu0 0.0
  %1567 = vmatprep.subr.mxu0 0.0
  %1568 = vmatpush1.msra.mxu0 0.0
  %1569 = vmatprep.subr.mxu0 0.0
  %1570 = vmatpush1.msra.mxu0 0.0
  %1571 = vmatprep.subr.mxu0 0.0
  %1572 = vmatpush1.msra.mxu0 0.0
  %1573 = vmatprep.subr.mxu0 0.0
  %1574 = vmatpush1.msra.mxu0 0.0
  %1575 = vmatprep.subr.mxu0 0.0
  %1576 = vmatpush1.msra.mxu0 0.0
  %1577 = vmatprep.subr.mxu0 0.0
  %1578 = vmatpush1.msra.mxu0 0.0
  %1579 = vmatprep.subr.mxu0 0.0
  %1580 = vmatpush1.msra.mxu0 0.0
  %1581 = vmatprep.subr.mxu0 0.0
  %1582 = vmatpush1.msra.mxu0 0.0
  %1583 = vmatprep.subr.mxu0 0.0
  %1584 = vmatpush1.msra.mxu0 0.0
  %1585 = vmatprep.subr.mxu0 0.0
  %1586 = vmatpush1.msra.mxu0 %v1430
  %1587 = vmatprep.subr.mxu0 0.0
  %1588 = vmatpush1.msra.mxu0 %v1429
  %1589 = vmatprep.subr.mxu0 0.0
  %1590 = vmatpush1.msra.mxu0 %v1428
  %1591 = vmatprep.subr.mxu0 0.0
  %1592 = vmatpush1.msra.mxu0 %v1427
  %1593 = vmatprep.subr.mxu0 0.0
  %1594 = vmatpush2.msra.mxu0 0.0
  %1595 = vmatprep.subr.mxu0 0.0
  %1596 = vmatpush2.msra.mxu0 0.0
  %1597 = vmatprep.subr.mxu0 0.0
  %1598 = vmatpush2.msra.mxu0 0.0
  %1599 = vmatprep.subr.mxu0 0.0
  %1600 = vmatpush2.msra.mxu0 0.0
  %1601 = vmatprep.subr.mxu0 0.0
  %1602 = vmatpush2.msra.mxu0 0.0
  %1603 = vmatprep.subr.mxu0 0.0
  %1604 = vmatpush2.msra.mxu0 0.0
  %1605 = vmatprep.subr.mxu0 0.0
  %1606 = vmatpush2.msra.mxu0 0.0
  %1607 = vmatprep.subr.mxu0 0.0
  %1608 = vmatpush2.msra.mxu0 0.0
  %1609 = vmatprep.subr.mxu0 0.0
  %1610 = vmatpush2.msra.mxu0 0.0
  %1611 = vmatprep.subr.mxu0 0.0
  %1612 = vmatpush2.msra.mxu0 0.0
  %1613 = vmatprep.subr.mxu0 0.0
  %1614 = vmatpush2.msra.mxu0 0.0
  %1615 = vmatprep.subr.mxu0 0.0
  %1616 = vmatpush2.msra.mxu0 0.0
  %1617 = vmatprep.subr.mxu0 0.0
  %1618 = vmatpush2.msra.mxu0 0.0
  %1619 = vmatprep.subr.mxu0 0.0
  %1620 = vmatpush2.msra.mxu0 0.0
  %1621 = vmatprep.subr.mxu0 0.0
  %1622 = vmatpush2.msra.mxu0 0.0
  %1623 = vmatprep.subr.mxu0 0.0
  %1624 = vmatpush2.msra.mxu0 0.0
  %1625 = vmatprep.mubr.f32.mxu0 0.0
  %1626 = vmatmul.mubr.f32.gmra.mxu0 %v1559
  %v1627 = vpop.f32.mrf.mxu0
  %v1628 = vadd.f32 0.0, %v1627
  %v1629 = vpop.f32.mrf.mxu0
  %1630 = vdwg.mxu0
  %v1632 = vrot.slane %v1628, 6
  %v1634 = vadd.f32 %v1419, %v1632
  %v1635 = vxor.u32 %v1634, 2147483648
  %v1636 = vmul.f32 %v1635, 1.442695
  %v1637 = vpow.pop %v1636
  %v1638 = vadd.f32 %v1637, 1.0
  %v1639 = vrcp.pop %v1638
  %v1640 = vmul.f32 1.0, %v1639
  %v1641 = vtanh.pop %v1634
  %v1643 = vrot.slane %v1520, 6
  %v1645 = vmul.f32 %v1640, %v1643
  %1647 = vrot.lane.b32.xlu0 %v1641, 64
  %v1648 = vpop.permute.xlu0 %1647
  %v1650 = vmul.f32 %v1640, %v1648
  %1652 = vrot.lane.b32.xlu0 %v1650, 32
  %v1653 = vpop.permute.xlu0 %1652
  %v1655 = vadd.f32 %v1645, %v1653
  %v1656 = vtanh.pop %v1655
  %1658 = vrot.lane.b32.xlu0 %v1656, 64
  %v1659 = vpop.permute.xlu0 %1658
  %v1661 = vmul.f32 %v1640, %v1659
  %v1662 = vmul.f32 %v1661, %v1533
  %1664 = vrot.lane.b32.xlu0 %v1662, 32
  %v1665 = vpop.permute.xlu0 %1664
  %v1667 = vsel %vm408, %v1665, 0.0
  %1668 = vadd.xlane.f32.xlu0 %v1667
  %v1669 = vpop.xlane.xlu0 %1668
  %v1670 = vadd.f32 %v1669, %v1543
  %v1672 = vrot.slane %v1670, 2
  %v1674 = vmax.f32 %v1545, %v1672
  %v1675 = vsub.f32 %v1545, %v1674
  %v1676 = vmul.f32 %v1675, 1.442695
  %v1677 = vpow.pop %v1676
  %v1679 = vrot.slane %v1674, 6
  %v1681 = vsub.f32 %v1670, %v1679
  %v1682 = vmul.f32 %v1681, 1.442695
  %v1683 = vpow.pop %v1682
  %v1684 = vmul.f32 %v1677, %v1553
  %v1686 = vrot.slane %v1683, 2
  %v1688 = vadd.f32 %v1684, %v1686
  %1690 = vset.pattern.permute.xlu0 0
  %1691 = vperm.xlu0 %1690, %v1677
  %v1692 = vpop.permute.xlu0 %1691
  %v1694 = vmul.f32 %v1692, %v1555
  %1695 = vset.pattern.permute.xlu0 0
  %1696 = vperm.xlu0 %1695, %v1683
  %v1697 = vpop.permute.xlu0 %1696
  %v1699 = vmul.f32 %v1697, %v1661
  %v1701 = vrot.slane %v1699, 2
  %v1703 = vadd.f32 %v1694, %v1701
  %v1705 = vrot.slane %v1661, 2
  %1706 = vrot.lane.b32.xlu0 %v1705, 32
  %v1707 = vpop.permute.xlu0 %1706
  %v1708 = vsel %vm168, %v1707, 0
  %1710 = vmatprep.subr.mxu0 0.0
  %1711 = vmatpush1.msra.mxu0 0.0
  %1712 = vmatprep.subr.mxu0 0.0
  %1713 = vmatpush1.msra.mxu0 0.0
  %1714 = vmatprep.subr.mxu0 0.0
  %1715 = vmatpush1.msra.mxu0 0.0
  %1716 = vmatprep.subr.mxu0 0.0
  %1717 = vmatpush1.msra.mxu0 0.0
  %1718 = vmatprep.subr.mxu0 0.0
  %1719 = vmatpush1.msra.mxu0 0.0
  %1720 = vmatprep.subr.mxu0 0.0
  %1721 = vmatpush1.msra.mxu0 0.0
  %1722 = vmatprep.subr.mxu0 0.0
  %1723 = vmatpush1.msra.mxu0 0.0
  %1724 = vmatprep.subr.mxu0 0.0
  %1725 = vmatpush1.msra.mxu0 0.0
  %1726 = vmatprep.subr.mxu0 0.0
  %1727 = vmatpush1.msra.mxu0 0.0
  %1728 = vmatprep.subr.mxu0 0.0
  %1729 = vmatpush1.msra.mxu0 0.0
  %1730 = vmatprep.subr.mxu0 0.0
  %1731 = vmatpush1.msra.mxu0 0.0
  %1732 = vmatprep.subr.mxu0 0.0
  %1733 = vmatpush1.msra.mxu0 0.0
  %1734 = vmatprep.subr.mxu0 0.0
  %1735 = vmatpush1.msra.mxu0 %v1430
  %1736 = vmatprep.subr.mxu0 0.0
  %1737 = vmatpush1.msra.mxu0 %v1429
  %1738 = vmatprep.subr.mxu0 0.0
  %1739 = vmatpush1.msra.mxu0 %v1428
  %1740 = vmatprep.subr.mxu0 0.0
  %1741 = vmatpush1.msra.mxu0 %v1427
  %1742 = vmatprep.subr.mxu0 0.0
  %1743 = vmatpush2.msra.mxu0 0.0
  %1744 = vmatprep.subr.mxu0 0.0
  %1745 = vmatpush2.msra.mxu0 0.0
  %1746 = vmatprep.subr.mxu0 0.0
  %1747 = vmatpush2.msra.mxu0 0.0
  %1748 = vmatprep.subr.mxu0 0.0
  %1749 = vmatpush2.msra.mxu0 0.0
  %1750 = vmatprep.subr.mxu0 0.0
  %1751 = vmatpush2.msra.mxu0 0.0
  %1752 = vmatprep.subr.mxu0 0.0
  %1753 = vmatpush2.msra.mxu0 0.0
  %1754 = vmatprep.subr.mxu0 0.0
  %1755 = vmatpush2.msra.mxu0 0.0
  %1756 = vmatprep.subr.mxu0 0.0
  %1757 = vmatpush2.msra.mxu0 0.0
  %1758 = vmatprep.subr.mxu0 0.0
  %1759 = vmatpush2.msra.mxu0 0.0
  %1760 = vmatprep.subr.mxu0 0.0
  %1761 = vmatpush2.msra.mxu0 0.0
  %1762 = vmatprep.subr.mxu0 0.0
  %1763 = vmatpush2.msra.mxu0 0.0
  %1764 = vmatprep.subr.mxu0 0.0
  %1765 = vmatpush2.msra.mxu0 0.0
  %1766 = vmatprep.subr.mxu0 0.0
  %1767 = vmatpush2.msra.mxu0 0.0
  %1768 = vmatprep.subr.mxu0 0.0
  %1769 = vmatpush2.msra.mxu0 0.0
  %1770 = vmatprep.subr.mxu0 0.0
  %1771 = vmatpush2.msra.mxu0 0.0
  %1772 = vmatprep.subr.mxu0 0.0
  %1773 = vmatpush2.msra.mxu0 0.0
  %1774 = vmatprep.mubr.f32.mxu0 0.0
  %1775 = vmatmul.mubr.f32.gmra.mxu0 %v1708
  %v1776 = vpop.f32.mrf.mxu0
  %v1777 = vadd.f32 0.0, %v1776
  %v1778 = vpop.f32.mrf.mxu0
  %1779 = vdwg.mxu0
  %v1781 = vrot.slane %v1777, 4
  %v1783 = vadd.f32 %v1419, %v1781
  %v1784 = vxor.u32 %v1783, 2147483648
  %v1785 = vmul.f32 %v1784, 1.442695
  %v1786 = vpow.pop %v1785
  %v1787 = vadd.f32 %v1786, 1.0
  %v1788 = vrcp.pop %v1787
  %v1789 = vmul.f32 1.0, %v1788
  %v1790 = vtanh.pop %v1783
  %v1792 = vrot.slane %v1655, 6
  %v1794 = vmul.f32 %v1789, %v1792
  %1796 = vrot.lane.b32.xlu0 %v1790, 64
  %v1797 = vpop.permute.xlu0 %1796
  %v1799 = vmul.f32 %v1789, %v1797
  %1801 = vrot.lane.b32.xlu0 %v1799, 32
  %v1802 = vpop.permute.xlu0 %1801
  %v1804 = vadd.f32 %v1794, %v1802
  %v1805 = vtanh.pop %v1804
  %1807 = vrot.lane.b32.xlu0 %v1805, 64
  %v1808 = vpop.permute.xlu0 %1807
  %v1810 = vmul.f32 %v1789, %v1808
  %v1811 = vmul.f32 %v1810, %v1533
  %1813 = vrot.lane.b32.xlu0 %v1811, 32
  %v1814 = vpop.permute.xlu0 %1813
  %v1816 = vsel %vm558, %v1814, 0.0
  %1817 = vadd.xlane.f32.xlu0 %v1816
  %v1818 = vpop.xlane.xlu0 %1817
  %v1819 = vadd.f32 %v1818, %v1543
  %v1821 = vrot.slane %v1819, 4
  %v1823 = vmax.f32 %v1674, %v1821
  %v1824 = vsub.f32 %v1674, %v1823
  %v1825 = vmul.f32 %v1824, 1.442695
  %v1826 = vpow.pop %v1825
  %v1828 = vrot.slane %v1823, 4
  %v1830 = vsub.f32 %v1819, %v1828
  %v1831 = vmul.f32 %v1830, 1.442695
  %v1832 = vpow.pop %v1831
  %v1833 = vmul.f32 %v1826, %v1688
  %v1835 = vrot.slane %v1832, 4
  %v1837 = vadd.f32 %v1833, %v1835
  %1839 = vset.pattern.permute.xlu0 0
  %1840 = vperm.xlu0 %1839, %v1826
  %v1841 = vpop.permute.xlu0 %1840
  %v1843 = vmul.f32 %v1841, %v1703
  %1844 = vset.pattern.permute.xlu0 0
  %1845 = vperm.xlu0 %1844, %v1832
  %v1846 = vpop.permute.xlu0 %1845
  %v1848 = vmul.f32 %v1846, %v1810
  %v1850 = vrot.slane %v1848, 4
  %v1852 = vadd.f32 %v1843, %v1850
  %v1854 = vrot.slane %v1810, 4
  %1855 = vrot.lane.b32.xlu0 %v1854, 32
  %v1856 = vpop.permute.xlu0 %1855
  %v1857 = vsel %vm168, %v1856, 0
  %1859 = vmatprep.subr.mxu0 0.0
  %1860 = vmatpush1.msra.mxu0 0.0
  %1861 = vmatprep.subr.mxu0 0.0
  %1862 = vmatpush1.msra.mxu0 0.0
  %1863 = vmatprep.subr.mxu0 0.0
  %1864 = vmatpush1.msra.mxu0 0.0
  %1865 = vmatprep.subr.mxu0 0.0
  %1866 = vmatpush1.msra.mxu0 0.0
  %1867 = vmatprep.subr.mxu0 0.0
  %1868 = vmatpush1.msra.mxu0 0.0
  %1869 = vmatprep.subr.mxu0 0.0
  %1870 = vmatpush1.msra.mxu0 0.0
  %1871 = vmatprep.subr.mxu0 0.0
  %1872 = vmatpush1.msra.mxu0 0.0
  %1873 = vmatprep.subr.mxu0 0.0
  %1874 = vmatpush1.msra.mxu0 0.0
  %1875 = vmatprep.subr.mxu0 0.0
  %1876 = vmatpush1.msra.mxu0 0.0
  %1877 = vmatprep.subr.mxu0 0.0
  %1878 = vmatpush1.msra.mxu0 0.0
  %1879 = vmatprep.subr.mxu0 0.0
  %1880 = vmatpush1.msra.mxu0 0.0
  %1881 = vmatprep.subr.mxu0 0.0
  %1882 = vmatpush1.msra.mxu0 0.0
  %1883 = vmatprep.subr.mxu0 0.0
  %1884 = vmatpush1.msra.mxu0 %v1430
  %1885 = vmatprep.subr.mxu0 0.0
  %1886 = vmatpush1.msra.mxu0 %v1429
  %1887 = vmatprep.subr.mxu0 0.0
  %1888 = vmatpush1.msra.mxu0 %v1428
  %1889 = vmatprep.subr.mxu0 0.0
  %1890 = vmatpush1.msra.mxu0 %v1427
  %1891 = vmatprep.subr.mxu0 0.0
  %1892 = vmatpush2.msra.mxu0 0.0
  %1893 = vmatprep.subr.mxu0 0.0
  %1894 = vmatpush2.msra.mxu0 0.0
  %1895 = vmatprep.subr.mxu0 0.0
  %1896 = vmatpush2.msra.mxu0 0.0
  %1897 = vmatprep.subr.mxu0 0.0
  %1898 = vmatpush2.msra.mxu0 0.0
  %1899 = vmatprep.subr.mxu0 0.0
  %1900 = vmatpush2.msra.mxu0 0.0
  %1901 = vmatprep.subr.mxu0 0.0
  %1902 = vmatpush2.msra.mxu0 0.0
  %1903 = vmatprep.subr.mxu0 0.0
  %1904 = vmatpush2.msra.mxu0 0.0
  %1905 = vmatprep.subr.mxu0 0.0
  %1906 = vmatpush2.msra.mxu0 0.0
  %1907 = vmatprep.subr.mxu0 0.0
  %1908 = vmatpush2.msra.mxu0 0.0
  %1909 = vmatprep.subr.mxu0 0.0
  %1910 = vmatpush2.msra.mxu0 0.0
  %1911 = vmatprep.subr.mxu0 0.0
  %1912 = vmatpush2.msra.mxu0 0.0
  %1913 = vmatprep.subr.mxu0 0.0
  %1914 = vmatpush2.msra.mxu0 0.0
  %1915 = vmatprep.subr.mxu0 0.0
  %1916 = vmatpush2.msra.mxu0 0.0
  %1917 = vmatprep.subr.mxu0 0.0
  %1918 = vmatpush2.msra.mxu0 0.0
  %1919 = vmatprep.subr.mxu0 0.0
  %1920 = vmatpush2.msra.mxu0 0.0
  %1921 = vmatprep.subr.mxu0 0.0
  %1922 = vmatpush2.msra.mxu0 0.0
  %1923 = vmatprep.mubr.f32.mxu0 0.0
  %1924 = vmatmul.mubr.f32.gmra.mxu0 %v1857
  %v1925 = vpop.f32.mrf.mxu0
  %v1926 = vadd.f32 0.0, %v1925
  %v1927 = vpop.f32.mrf.mxu0
  %1928 = vdwg.mxu0
  %v1930 = vrot.slane %v1926, 2
  %v1932 = vadd.f32 %v1419, %v1930
  %v1933 = vxor.u32 %v1932, 2147483648
  %v1934 = vmul.f32 %v1933, 1.442695
  %v1935 = vpow.pop %v1934
  %v1936 = vadd.f32 %v1935, 1.0
  %v1937 = vrcp.pop %v1936
  %v1938 = vmul.f32 1.0, %v1937
  %v1939 = vtanh.pop %v1932
  %v1941 = vrot.slane %v1804, 6
  %v1943 = vmul.f32 %v1938, %v1941
  %1945 = vrot.lane.b32.xlu0 %v1939, 64
  %v1946 = vpop.permute.xlu0 %1945
  %v1948 = vmul.f32 %v1938, %v1946
  %1950 = vrot.lane.b32.xlu0 %v1948, 32
  %v1951 = vpop.permute.xlu0 %1950
  %v1953 = vadd.f32 %v1943, %v1951
  %v1954 = vtanh.pop %v1953
  %1956 = vrot.lane.b32.xlu0 %v1954, 64
  %v1957 = vpop.permute.xlu0 %1956
  %v1959 = vmul.f32 %v1938, %v1957
  %v1960 = vmul.f32 %v1959, %v1533
  %1962 = vrot.lane.b32.xlu0 %v1960, 32
  %v1963 = vpop.permute.xlu0 %1962
  %v1965 = vsel %vm708, %v1963, 0.0
  %1966 = vadd.xlane.f32.xlu0 %v1965
  %v1967 = vpop.xlane.xlu0 %1966
  %v1968 = vadd.f32 %v1967, %v1543
  %v1970 = vrot.slane %v1968, 6
  %v1972 = vmax.f32 %v1823, %v1970
  %v1973 = vsub.f32 %v1823, %v1972
  %v1974 = vmul.f32 %v1973, 1.442695
  %v1975 = vpow.pop %v1974
  %v1977 = vrot.slane %v1972, 2
  %v1979 = vsub.f32 %v1968, %v1977
  %v1980 = vmul.f32 %v1979, 1.442695
  %v1981 = vpow.pop %v1980
  %v1982 = vmul.f32 %v1975, %v1837
  %v1984 = vrot.slane %v1981, 6
  %v1986 = vadd.f32 %v1982, %v1984
  %1988 = vset.pattern.permute.xlu0 0
  %1989 = vperm.xlu0 %1988, %v1975
  %v1990 = vpop.permute.xlu0 %1989
  %v1992 = vmul.f32 %v1990, %v1852
  %1993 = vset.pattern.permute.xlu0 0
  %1994 = vperm.xlu0 %1993, %v1981
  %v1995 = vpop.permute.xlu0 %1994
  %v1997 = vmul.f32 %v1995, %v1959
  %v1999 = vrot.slane %v1997, 6
  %v2001 = vadd.f32 %v1992, %v1999
  %v2003 = vrot.slane %v1959, 6
  %2004 = vrot.lane.b32.xlu0 %v2003, 32
  %v2005 = vpop.permute.xlu0 %2004
  %v2006 = vsel %vm168, %v2005, 0
  %2008 = vmatprep.subr.mxu0 0.0
  %2009 = vmatpush1.msra.mxu0 0.0
  %2010 = vmatprep.subr.mxu0 0.0
  %2011 = vmatpush1.msra.mxu0 0.0
  %2012 = vmatprep.subr.mxu0 0.0
  %2013 = vmatpush1.msra.mxu0 0.0
  %2014 = vmatprep.subr.mxu0 0.0
  %2015 = vmatpush1.msra.mxu0 0.0
  %2016 = vmatprep.subr.mxu0 0.0
  %2017 = vmatpush1.msra.mxu0 0.0
  %2018 = vmatprep.subr.mxu0 0.0
  %2019 = vmatpush1.msra.mxu0 0.0
  %2020 = vmatprep.subr.mxu0 0.0
  %2021 = vmatpush1.msra.mxu0 0.0
  %2022 = vmatprep.subr.mxu0 0.0
  %2023 = vmatpush1.msra.mxu0 0.0
  %2024 = vmatprep.subr.mxu0 0.0
  %2025 = vmatpush1.msra.mxu0 0.0
  %2026 = vmatprep.subr.mxu0 0.0
  %2027 = vmatpush1.msra.mxu0 0.0
  %2028 = vmatprep.subr.mxu0 0.0
  %2029 = vmatpush1.msra.mxu0 0.0
  %2030 = vmatprep.subr.mxu0 0.0
  %2031 = vmatpush1.msra.mxu0 0.0
  %2032 = vmatprep.subr.mxu0 0.0
  %2033 = vmatpush1.msra.mxu0 %v1430
  %2034 = vmatprep.subr.mxu0 0.0
  %2035 = vmatpush1.msra.mxu0 %v1429
  %2036 = vmatprep.subr.mxu0 0.0
  %2037 = vmatpush1.msra.mxu0 %v1428
  %2038 = vmatprep.subr.mxu0 0.0
  %2039 = vmatpush1.msra.mxu0 %v1427
  %2040 = vmatprep.subr.mxu0 0.0
  %2041 = vmatpush2.msra.mxu0 0.0
  %2042 = vmatprep.subr.mxu0 0.0
  %2043 = vmatpush2.msra.mxu0 0.0
  %2044 = vmatprep.subr.mxu0 0.0
  %2045 = vmatpush2.msra.mxu0 0.0
  %2046 = vmatprep.subr.mxu0 0.0
  %2047 = vmatpush2.msra.mxu0 0.0
  %2048 = vmatprep.subr.mxu0 0.0
  %2049 = vmatpush2.msra.mxu0 0.0
  %2050 = vmatprep.subr.mxu0 0.0
  %2051 = vmatpush2.msra.mxu0 0.0
  %2052 = vmatprep.subr.mxu0 0.0
  %2053 = vmatpush2.msra.mxu0 0.0
  %2054 = vmatprep.subr.mxu0 0.0
  %2055 = vmatpush2.msra.mxu0 0.0
  %2056 = vmatprep.subr.mxu0 0.0
  %2057 = vmatpush2.msra.mxu0 0.0
  %2058 = vmatprep.subr.mxu0 0.0
  %2059 = vmatpush2.msra.mxu0 0.0
  %2060 = vmatprep.subr.mxu0 0.0
  %2061 = vmatpush2.msra.mxu0 0.0
  %2062 = vmatprep.subr.mxu0 0.0
  %2063 = vmatpush2.msra.mxu0 0.0
  %2064 = vmatprep.subr.mxu0 0.0
  %2065 = vmatpush2.msra.mxu0 0.0
  %2066 = vmatprep.subr.mxu0 0.0
  %2067 = vmatpush2.msra.mxu0 0.0
  %2068 = vmatprep.subr.mxu0 0.0
  %2069 = vmatpush2.msra.mxu0 0.0
  %2070 = vmatprep.subr.mxu0 0.0
  %2071 = vmatpush2.msra.mxu0 0.0
  %2072 = vmatprep.mubr.f32.mxu0 0.0
  %2073 = vmatmul.mubr.f32.gmra.mxu0 %v2006
  %v2074 = vpop.f32.mrf.mxu0
  %v2075 = vadd.f32 0.0, %v2074
  %v2076 = vpop.f32.mrf.mxu0
  %2077 = vdwg.mxu0
  %v2078 = vadd.f32 %v1424, %v2075
  %v2079 = vxor.u32 %v2078, 2147483648
  %v2080 = vmul.f32 %v2079, 1.442695
  %v2081 = vpow.pop %v2080
  %v2082 = vadd.f32 %v2081, 1.0
  %v2083 = vrcp.pop %v2082
  %v2084 = vmul.f32 1.0, %v2083
  %v2085 = vtanh.pop %v2078
  %v2087 = vrot.slane %v1953, 6
  %v2089 = vmul.f32 %v2084, %v2087
  %2091 = vrot.lane.b32.xlu0 %v2085, 64
  %v2092 = vpop.permute.xlu0 %2091
  %v2094 = vmul.f32 %v2084, %v2092
  %2096 = vrot.lane.b32.xlu0 %v2094, 32
  %v2097 = vpop.permute.xlu0 %2096
  %v2099 = vadd.f32 %v2089, %v2097
  %v2100 = vtanh.pop %v2099
  %2102 = vrot.lane.b32.xlu0 %v2100, 64
  %v2103 = vpop.permute.xlu0 %2102
  %v2105 = vmul.f32 %v2084, %v2103
  %v2106 = vmul.f32 %v2105, %v1533
  %2108 = vrot.lane.b32.xlu0 %v2106, 32
  %v2109 = vpop.permute.xlu0 %2108
  %v2111 = vsel %vm280, %v2109, 0.0
  %2112 = vadd.xlane.f32.xlu0 %v2111
  %v2113 = vpop.xlane.xlu0 %2112
  %v2114 = vadd.f32 %v2113, %v1543
  %v2115 = vmax.f32 %v1972, %v2114
  %v2116 = vsub.f32 %v1972, %v2115
  %v2117 = vmul.f32 %v2116, 1.442695
  %v2118 = vpow.pop %v2117
  %v2119 = vsub.f32 %v2114, %v2115
  %v2120 = vmul.f32 %v2119, 1.442695
  %v2121 = vpow.pop %v2120
  %v2122 = vmul.f32 %v2118, %v1986
  %v2123 = vadd.f32 %v2122, %v2121
  %2125 = vset.pattern.permute.xlu0 0
  %2126 = vperm.xlu0 %2125, %v2118
  %v2127 = vpop.permute.xlu0 %2126
  %v2129 = vmul.f32 %v2127, %v2001
  %2131 = vset.pattern.permute.xlu0 0
  %2132 = vperm.xlu0 %2131, %v2121
  %v2133 = vpop.permute.xlu0 %2132
  %v2135 = vmul.f32 %v2133, %v2105
  %v2136 = vadd.f32 %v2129, %v2135
  %2138 = vrot.lane.b32.xlu0 %v2105, 32
  %v2139 = vpop.permute.xlu0 %2138
  %v2140 = vsel %vm168, %v2139, 0
  %2142 = vmatprep.subr.mxu0 0.0
  %2143 = vmatpush1.msra.mxu0 0.0
  %2144 = vmatprep.subr.mxu0 0.0
  %2145 = vmatpush1.msra.mxu0 0.0
  %2146 = vmatprep.subr.mxu0 0.0
  %2147 = vmatpush1.msra.mxu0 0.0
  %2148 = vmatprep.subr.mxu0 0.0
  %2149 = vmatpush1.msra.mxu0 0.0
  %2150 = vmatprep.subr.mxu0 0.0
  %2151 = vmatpush1.msra.mxu0 0.0
  %2152 = vmatprep.subr.mxu0 0.0
  %2153 = vmatpush1.msra.mxu0 0.0
  %2154 = vmatprep.subr.mxu0 0.0
  %2155 = vmatpush1.msra.mxu0 0.0
  %2156 = vmatprep.subr.mxu0 0.0
  %2157 = vmatpush1.msra.mxu0 0.0
  %2158 = vmatprep.subr.mxu0 0.0
  %2159 = vmatpush1.msra.mxu0 0.0
  %2160 = vmatprep.subr.mxu0 0.0
  %2161 = vmatpush1.msra.mxu0 0.0
  %2162 = vmatprep.subr.mxu0 0.0
  %2163 = vmatpush1.msra.mxu0 0.0
  %2164 = vmatprep.subr.mxu0 0.0
  %2165 = vmatpush1.msra.mxu0 0.0
  %2166 = vmatprep.subr.mxu0 0.0
  %2167 = vmatpush1.msra.mxu0 %v1430
  %2168 = vmatprep.subr.mxu0 0.0
  %2169 = vmatpush1.msra.mxu0 %v1429
  %2170 = vmatprep.subr.mxu0 0.0
  %2171 = vmatpush1.msra.mxu0 %v1428
  %2172 = vmatprep.subr.mxu0 0.0
  %2173 = vmatpush1.msra.mxu0 %v1427
  %2174 = vmatprep.subr.mxu0 0.0
  %2175 = vmatpush2.msra.mxu0 0.0
  %2176 = vmatprep.subr.mxu0 0.0
  %2177 = vmatpush2.msra.mxu0 0.0
  %2178 = vmatprep.subr.mxu0 0.0
  %2179 = vmatpush2.msra.mxu0 0.0
  %2180 = vmatprep.subr.mxu0 0.0
  %2181 = vmatpush2.msra.mxu0 0.0
  %2182 = vmatprep.subr.mxu0 0.0
  %2183 = vmatpush2.msra.mxu0 0.0
  %2184 = vmatprep.subr.mxu0 0.0
  %2185 = vmatpush2.msra.mxu0 0.0
  %2186 = vmatprep.subr.mxu0 0.0
  %2187 = vmatpush2.msra.mxu0 0.0
  %2188 = vmatprep.subr.mxu0 0.0
  %2189 = vmatpush2.msra.mxu0 0.0
  %2190 = vmatprep.subr.mxu0 0.0
  %2191 = vmatpush2.msra.mxu0 0.0
  %2192 = vmatprep.subr.mxu0 0.0
  %2193 = vmatpush2.msra.mxu0 0.0
  %2194 = vmatprep.subr.mxu0 0.0
  %2195 = vmatpush2.msra.mxu0 0.0
  %2196 = vmatprep.subr.mxu0 0.0
  %2197 = vmatpush2.msra.mxu0 0.0
  %2198 = vmatprep.subr.mxu0 0.0
  %2199 = vmatpush2.msra.mxu0 0.0
  %2200 = vmatprep.subr.mxu0 0.0
  %2201 = vmatpush2.msra.mxu0 0.0
  %2202 = vmatprep.subr.mxu0 0.0
  %2203 = vmatpush2.msra.mxu0 0.0
  %2204 = vmatprep.subr.mxu0 0.0
  %2205 = vmatpush2.msra.mxu0 0.0
  %2206 = vmatprep.mubr.f32.mxu0 0.0
  %2207 = vmatmul.mubr.f32.gmra.mxu0 %v2140
  %v2208 = vpop.f32.mrf.mxu0
  %v2209 = vadd.f32 0.0, %v2208
  %v2210 = vpop.f32.mrf.mxu0
  %2211 = vdwg.mxu0
  %v2213 = vrot.slane %v2209, 6
  %v2215 = vadd.f32 %v1424, %v2213
  %v2216 = vxor.u32 %v2215, 2147483648
  %v2217 = vmul.f32 %v2216, 1.442695
  %v2218 = vpow.pop %v2217
  %v2219 = vadd.f32 %v2218, 1.0
  %v2220 = vrcp.pop %v2219
  %v2221 = vmul.f32 1.0, %v2220
  %v2222 = vtanh.pop %v2215
  %v2224 = vrot.slane %v2099, 6
  %v2226 = vmul.f32 %v2221, %v2224
  %2228 = vrot.lane.b32.xlu0 %v2222, 64
  %v2229 = vpop.permute.xlu0 %2228
  %v2231 = vmul.f32 %v2221, %v2229
  %2233 = vrot.lane.b32.xlu0 %v2231, 32
  %v2234 = vpop.permute.xlu0 %2233
  %v2236 = vadd.f32 %v2226, %v2234
  %v2237 = vtanh.pop %v2236
  %2239 = vrot.lane.b32.xlu0 %v2237, 64
  %v2240 = vpop.permute.xlu0 %2239
  %v2242 = vmul.f32 %v2221, %v2240
  %v2243 = vmul.f32 %v2242, %v1533
  %2245 = vrot.lane.b32.xlu0 %v2243, 32
  %v2246 = vpop.permute.xlu0 %2245
  %v2248 = vsel %vm408, %v2246, 0.0
  %2249 = vadd.xlane.f32.xlu0 %v2248
  %v2250 = vpop.xlane.xlu0 %2249
  %v2251 = vadd.f32 %v2250, %v1543
  %v2253 = vrot.slane %v2251, 2
  %v2255 = vmax.f32 %v2115, %v2253
  %v2256 = vsub.f32 %v2115, %v2255
  %v2257 = vmul.f32 %v2256, 1.442695
  %v2258 = vpow.pop %v2257
  %v2260 = vrot.slane %v2255, 6
  %v2262 = vsub.f32 %v2251, %v2260
  %v2263 = vmul.f32 %v2262, 1.442695
  %v2264 = vpow.pop %v2263
  %v2265 = vmul.f32 %v2258, %v2123
  %v2267 = vrot.slane %v2264, 2
  %v2269 = vadd.f32 %v2265, %v2267
  %2271 = vset.pattern.permute.xlu0 0
  %2272 = vperm.xlu0 %2271, %v2258
  %v2273 = vpop.permute.xlu0 %2272
  %v2275 = vmul.f32 %v2273, %v2136
  %2276 = vset.pattern.permute.xlu0 0
  %2277 = vperm.xlu0 %2276, %v2264
  %v2278 = vpop.permute.xlu0 %2277
  %v2280 = vmul.f32 %v2278, %v2242
  %v2282 = vrot.slane %v2280, 2
  %v2284 = vadd.f32 %v2275, %v2282
  %v2286 = vrot.slane %v2242, 2
  %2287 = vrot.lane.b32.xlu0 %v2286, 32
  %v2288 = vpop.permute.xlu0 %2287
  %v2289 = vsel %vm168, %v2288, 0
  %2291 = vmatprep.subr.mxu0 0.0
  %2292 = vmatpush1.msra.mxu0 0.0
  %2293 = vmatprep.subr.mxu0 0.0
  %2294 = vmatpush1.msra.mxu0 0.0
  %2295 = vmatprep.subr.mxu0 0.0
  %2296 = vmatpush1.msra.mxu0 0.0
  %2297 = vmatprep.subr.mxu0 0.0
  %2298 = vmatpush1.msra.mxu0 0.0
  %2299 = vmatprep.subr.mxu0 0.0
  %2300 = vmatpush1.msra.mxu0 0.0
  %2301 = vmatprep.subr.mxu0 0.0
  %2302 = vmatpush1.msra.mxu0 0.0
  %2303 = vmatprep.subr.mxu0 0.0
  %2304 = vmatpush1.msra.mxu0 0.0
  %2305 = vmatprep.subr.mxu0 0.0
  %2306 = vmatpush1.msra.mxu0 0.0
  %2307 = vmatprep.subr.mxu0 0.0
  %2308 = vmatpush1.msra.mxu0 0.0
  %2309 = vmatprep.subr.mxu0 0.0
  %2310 = vmatpush1.msra.mxu0 0.0
  %2311 = vmatprep.subr.mxu0 0.0
  %2312 = vmatpush1.msra.mxu0 0.0
  %2313 = vmatprep.subr.mxu0 0.0
  %2314 = vmatpush1.msra.mxu0 0.0
  %2315 = vmatprep.subr.mxu0 0.0
  %2316 = vmatpush1.msra.mxu0 %v1430
  %2317 = vmatprep.subr.mxu0 0.0
  %2318 = vmatpush1.msra.mxu0 %v1429
  %2319 = vmatprep.subr.mxu0 0.0
  %2320 = vmatpush1.msra.mxu0 %v1428
  %2321 = vmatprep.subr.mxu0 0.0
  %2322 = vmatpush1.msra.mxu0 %v1427
  %2323 = vmatprep.subr.mxu0 0.0
  %2324 = vmatpush2.msra.mxu0 0.0
  %2325 = vmatprep.subr.mxu0 0.0
  %2326 = vmatpush2.msra.mxu0 0.0
  %2327 = vmatprep.subr.mxu0 0.0
  %2328 = vmatpush2.msra.mxu0 0.0
  %2329 = vmatprep.subr.mxu0 0.0
  %2330 = vmatpush2.msra.mxu0 0.0
  %2331 = vmatprep.subr.mxu0 0.0
  %2332 = vmatpush2.msra.mxu0 0.0
  %2333 = vmatprep.subr.mxu0 0.0
  %2334 = vmatpush2.msra.mxu0 0.0
  %2335 = vmatprep.subr.mxu0 0.0
  %2336 = vmatpush2.msra.mxu0 0.0
  %2337 = vmatprep.subr.mxu0 0.0
  %2338 = vmatpush2.msra.mxu0 0.0
  %2339 = vmatprep.subr.mxu0 0.0
  %2340 = vmatpush2.msra.mxu0 0.0
  %2341 = vmatprep.subr.mxu0 0.0
  %2342 = vmatpush2.msra.mxu0 0.0
  %2343 = vmatprep.subr.mxu0 0.0
  %2344 = vmatpush2.msra.mxu0 0.0
  %2345 = vmatprep.subr.mxu0 0.0
  %2346 = vmatpush2.msra.mxu0 0.0
  %2347 = vmatprep.subr.mxu0 0.0
  %2348 = vmatpush2.msra.mxu0 0.0
  %2349 = vmatprep.subr.mxu0 0.0
  %2350 = vmatpush2.msra.mxu0 0.0
  %2351 = vmatprep.subr.mxu0 0.0
  %2352 = vmatpush2.msra.mxu0 0.0
  %2353 = vmatprep.subr.mxu0 0.0
  %2354 = vmatpush2.msra.mxu0 0.0
  %2355 = vmatprep.mubr.f32.mxu0 0.0
  %2356 = vmatmul.mubr.f32.gmra.mxu0 %v2289
  %v2357 = vpop.f32.mrf.mxu0
  %v2358 = vadd.f32 0.0, %v2357
  %v2359 = vpop.f32.mrf.mxu0
  %2360 = vdwg.mxu0
  %v2362 = vrot.slane %v2358, 4
  %v2364 = vadd.f32 %v1424, %v2362
  %v2365 = vxor.u32 %v2364, 2147483648
  %v2366 = vmul.f32 %v2365, 1.442695
  %v2367 = vpow.pop %v2366
  %v2368 = vadd.f32 %v2367, 1.0
  %v2369 = vrcp.pop %v2368
  %v2370 = vmul.f32 1.0, %v2369
  %v2371 = vtanh.pop %v2364
  %v2373 = vrot.slane %v2236, 6
  %v2375 = vmul.f32 %v2370, %v2373
  %2377 = vrot.lane.b32.xlu0 %v2371, 64
  %v2378 = vpop.permute.xlu0 %2377
  %v2380 = vmul.f32 %v2370, %v2378
  %2382 = vrot.lane.b32.xlu0 %v2380, 32
  %v2383 = vpop.permute.xlu0 %2382
  %v2385 = vadd.f32 %v2375, %v2383
  %v2386 = vtanh.pop %v2385
  %2388 = vrot.lane.b32.xlu0 %v2386, 64
  %v2389 = vpop.permute.xlu0 %2388
  %v2391 = vmul.f32 %v2370, %v2389
  %v2392 = vmul.f32 %v2391, %v1533
  %2394 = vrot.lane.b32.xlu0 %v2392, 32
  %v2395 = vpop.permute.xlu0 %2394
  %v2397 = vsel %vm558, %v2395, 0.0
  %2398 = vadd.xlane.f32.xlu0 %v2397
  %v2399 = vpop.xlane.xlu0 %2398
  %v2400 = vadd.f32 %v2399, %v1543
  %v2402 = vrot.slane %v2400, 4
  %v2404 = vmax.f32 %v2255, %v2402
  %v2405 = vsub.f32 %v2255, %v2404
  %v2406 = vmul.f32 %v2405, 1.442695
  %v2407 = vpow.pop %v2406
  %v2409 = vrot.slane %v2404, 4
  %v2411 = vsub.f32 %v2400, %v2409
  %v2412 = vmul.f32 %v2411, 1.442695
  %v2413 = vpow.pop %v2412
  %v2414 = vmul.f32 %v2407, %v2269
  %v2416 = vrot.slane %v2413, 4
  %v2418 = vadd.f32 %v2414, %v2416
  %2420 = vset.pattern.permute.xlu0 0
  %2421 = vperm.xlu0 %2420, %v2407
  %v2422 = vpop.permute.xlu0 %2421
  %v2424 = vmul.f32 %v2422, %v2284
  %2425 = vset.pattern.permute.xlu0 0
  %2426 = vperm.xlu0 %2425, %v2413
  %v2427 = vpop.permute.xlu0 %2426
  %v2429 = vmul.f32 %v2427, %v2391
  %v2431 = vrot.slane %v2429, 4
  %v2433 = vadd.f32 %v2424, %v2431
  %v2435 = vrot.slane %v2391, 4
  %2436 = vrot.lane.b32.xlu0 %v2435, 32
  %v2437 = vpop.permute.xlu0 %2436
  %v2438 = vsel %vm168, %v2437, 0
  %2440 = vmatprep.subr.mxu0 0.0
  %2441 = vmatpush1.msra.mxu0 0.0
  %2442 = vmatprep.subr.mxu0 0.0
  %2443 = vmatpush1.msra.mxu0 0.0
  %2444 = vmatprep.subr.mxu0 0.0
  %2445 = vmatpush1.msra.mxu0 0.0
  %2446 = vmatprep.subr.mxu0 0.0
  %2447 = vmatpush1.msra.mxu0 0.0
  %2448 = vmatprep.subr.mxu0 0.0
  %2449 = vmatpush1.msra.mxu0 0.0
  %2450 = vmatprep.subr.mxu0 0.0
  %2451 = vmatpush1.msra.mxu0 0.0
  %2452 = vmatprep.subr.mxu0 0.0
  %2453 = vmatpush1.msra.mxu0 0.0
  %2454 = vmatprep.subr.mxu0 0.0
  %2455 = vmatpush1.msra.mxu0 0.0
  %2456 = vmatprep.subr.mxu0 0.0
  %2457 = vmatpush1.msra.mxu0 0.0
  %2458 = vmatprep.subr.mxu0 0.0
  %2459 = vmatpush1.msra.mxu0 0.0
  %2460 = vmatprep.subr.mxu0 0.0
  %2461 = vmatpush1.msra.mxu0 0.0
  %2462 = vmatprep.subr.mxu0 0.0
  %2463 = vmatpush1.msra.mxu0 0.0
  %2464 = vmatprep.subr.mxu0 0.0
  %2465 = vmatpush1.msra.mxu0 %v1430
  %2466 = vmatprep.subr.mxu0 0.0
  %2467 = vmatpush1.msra.mxu0 %v1429
  %2468 = vmatprep.subr.mxu0 0.0
  %2469 = vmatpush1.msra.mxu0 %v1428
  %2470 = vmatprep.subr.mxu0 0.0
  %2471 = vmatpush1.msra.mxu0 %v1427
  %2472 = vmatprep.subr.mxu0 0.0
  %2473 = vmatpush2.msra.mxu0 0.0
  %2474 = vmatprep.subr.mxu0 0.0
  %2475 = vmatpush2.msra.mxu0 0.0
  %2476 = vmatprep.subr.mxu0 0.0
  %2477 = vmatpush2.msra.mxu0 0.0
  %2478 = vmatprep.subr.mxu0 0.0
  %2479 = vmatpush2.msra.mxu0 0.0
  %2480 = vmatprep.subr.mxu0 0.0
  %2481 = vmatpush2.msra.mxu0 0.0
  %2482 = vmatprep.subr.mxu0 0.0
  %2483 = vmatpush2.msra.mxu0 0.0
  %2484 = vmatprep.subr.mxu0 0.0
  %2485 = vmatpush2.msra.mxu0 0.0
  %2486 = vmatprep.subr.mxu0 0.0
  %2487 = vmatpush2.msra.mxu0 0.0
  %2488 = vmatprep.subr.mxu0 0.0
  %2489 = vmatpush2.msra.mxu0 0.0
  %2490 = vmatprep.subr.mxu0 0.0
  %2491 = vmatpush2.msra.mxu0 0.0
  %2492 = vmatprep.subr.mxu0 0.0
  %2493 = vmatpush2.msra.mxu0 0.0
  %2494 = vmatprep.subr.mxu0 0.0
  %2495 = vmatpush2.msra.mxu0 0.0
  %2496 = vmatprep.subr.mxu0 0.0
  %2497 = vmatpush2.msra.mxu0 0.0
  %2498 = vmatprep.subr.mxu0 0.0
  %2499 = vmatpush2.msra.mxu0 0.0
  %2500 = vmatprep.subr.mxu0 0.0
  %2501 = vmatpush2.msra.mxu0 0.0
  %2502 = vmatprep.subr.mxu0 0.0
  %2503 = vmatpush2.msra.mxu0 0.0
  %2504 = vmatprep.mubr.f32.mxu0 0.0
  %2505 = vmatmul.mubr.f32.gmra.mxu0 %v2438
  %v2506 = vpop.f32.mrf.mxu0
  %v2507 = vadd.f32 0.0, %v2506
  %v2508 = vpop.f32.mrf.mxu0
  %2509 = vdwg.mxu0
  %v2511 = vrot.slane %v2507, 2
  %v2513 = vadd.f32 %v1424, %v2511
  %v2514 = vxor.u32 %v2513, 2147483648
  %v2515 = vmul.f32 %v2514, 1.442695
  %v2516 = vpow.pop %v2515
  %v2517 = vadd.f32 %v2516, 1.0
  %v2518 = vrcp.pop %v2517
  %v2519 = vmul.f32 1.0, %v2518
  %v2520 = vtanh.pop %v2513
  %v2522 = vrot.slane %v2385, 6
  %v2524 = vmul.f32 %v2519, %v2522
  %2526 = vrot.lane.b32.xlu0 %v2520, 64
  %v2527 = vpop.permute.xlu0 %2526
  %v2529 = vmul.f32 %v2519, %v2527
  %2531 = vrot.lane.b32.xlu0 %v2529, 32
  %v2532 = vpop.permute.xlu0 %2531
  %v2534 = vadd.f32 %v2524, %v2532
  %v2535 = vtanh.pop %v2534
  %2537 = vrot.lane.b32.xlu0 %v2535, 64
  %v2538 = vpop.permute.xlu0 %2537
  %v2540 = vmul.f32 %v2519, %v2538
  %v2541 = vmul.f32 %v2540, %v1533
  %2543 = vrot.lane.b32.xlu0 %v2541, 32
  %v2544 = vpop.permute.xlu0 %2543
  %v2546 = vsel %vm708, %v2544, 0.0
  %2547 = vadd.xlane.f32.xlu0 %v2546
  %v2548 = vpop.xlane.xlu0 %2547
  %v2549 = vadd.f32 %v2548, %v1543
  %v2551 = vrot.slane %v2549, 6
  %v2553 = vmax.f32 %v2404, %v2551
  %v2554 = vsub.f32 %v2404, %v2553
  %v2555 = vmul.f32 %v2554, 1.442695
  %v2556 = vpow.pop %v2555
  %v2558 = vrot.slane %v2553, 2
  %v2560 = vsub.f32 %v2549, %v2558
  %v2561 = vmul.f32 %v2560, 1.442695
  %v2562 = vpow.pop %v2561
  %v2563 = vmul.f32 %v2556, %v2418
  %v2565 = vrot.slane %v2562, 6
  %v2567 = vadd.f32 %v2563, %v2565
  %2569 = vset.pattern.permute.xlu0 0
  %2570 = vperm.xlu0 %2569, %v2556
  %v2571 = vpop.permute.xlu0 %2570
  %v2573 = vmul.f32 %v2571, %v2433
  %2574 = vset.pattern.permute.xlu0 0
  %2575 = vperm.xlu0 %2574, %v2562
  %v2576 = vpop.permute.xlu0 %2575
  %v2578 = vmul.f32 %v2576, %v2540
  %v2580 = vrot.slane %v2578, 6
  %v2582 = vadd.f32 %v2573, %v2580
  %v2583 = vrcp.pop %v2567
  %2585 = vset.pattern.permute.xlu0 0
  %2586 = vperm.xlu0 %2585, %v2583
  %v2587 = vpop.permute.xlu0 %2586
  %v2589 = vmul.f32 %v2582, %v2587
  %v2590 = vld [vmem:[%s10] sm:$0xff]
  %v2591 = vld [vmem:[%s10 + $0x8] sm:$0xff]
  %v2592 = vld [vmem:[%s10 + $0x10] sm:$0xff]
  %v2593 = vld [vmem:[%s10 + $0x18] sm:$0xff]
  %v2594 = vld [vmem:[%s10 + $0x20] sm:$0xff]
  %v2595 = vld [vmem:[%s10 + $0x28] sm:$0xff]
  %v2596 = vld [vmem:[%s10 + $0x30] sm:$0xff]
  %v2597 = vld [vmem:[%s10 + $0x38] sm:$0xff]
  %2599 = vrot.lane.b32.xlu0 %v2589, 32
  %v2600 = vpop.permute.xlu0 %2599
  %v2601 = vsel %vm168, %v2600, 0
  %2603 = vmatprep.subr.mxu0 0.0
  %2604 = vmatpush1.msra.mxu0 0.0
  %2605 = vmatprep.subr.mxu0 0.0
  %2606 = vmatpush1.msra.mxu0 0.0
  %2607 = vmatprep.subr.mxu0 0.0
  %2608 = vmatpush1.msra.mxu0 0.0
  %2609 = vmatprep.subr.mxu0 0.0
  %2610 = vmatpush1.msra.mxu0 0.0
  %2611 = vmatprep.subr.mxu0 0.0
  %2612 = vmatpush1.msra.mxu0 0.0
  %2613 = vmatprep.subr.mxu0 0.0
  %2614 = vmatpush1.msra.mxu0 0.0
  %2615 = vmatprep.subr.mxu0 0.0
  %2616 = vmatpush1.msra.mxu0 0.0
  %2617 = vmatprep.subr.mxu0 0.0
  %2618 = vmatpush1.msra.mxu0 0.0
  %2619 = vmatprep.subr.mxu0 0.0
  %2620 = vmatpush1.msra.mxu0 0.0
  %2621 = vmatprep.subr.mxu0 0.0
  %2622 = vmatpush1.msra.mxu0 0.0
  %2623 = vmatprep.subr.mxu0 0.0
  %2624 = vmatpush1.msra.mxu0 0.0
  %2625 = vmatprep.subr.mxu0 0.0
  %2626 = vmatpush1.msra.mxu0 0.0
  %2627 = vmatprep.subr.mxu0 0.0
  %2628 = vmatpush1.msra.mxu0 %v2597
  %2629 = vmatprep.subr.mxu0 0.0
  %2630 = vmatpush1.msra.mxu0 %v2596
  %2631 = vmatprep.subr.mxu0 0.0
  %2632 = vmatpush1.msra.mxu0 %v2595
  %2633 = vmatprep.subr.mxu0 0.0
  %2634 = vmatpush1.msra.mxu0 %v2594
  %2635 = vmatprep.subr.mxu0 0.0
  %2636 = vmatpush2.msra.mxu0 0.0
  %2637 = vmatprep.subr.mxu0 0.0
  %2638 = vmatpush2.msra.mxu0 0.0
  %2639 = vmatprep.subr.mxu0 0.0
  %2640 = vmatpush2.msra.mxu0 0.0
  %2641 = vmatprep.subr.mxu0 0.0
  %2642 = vmatpush2.msra.mxu0 0.0
  %2643 = vmatprep.subr.mxu0 0.0
  %2644 = vmatpush2.msra.mxu0 0.0
  %2645 = vmatprep.subr.mxu0 0.0
  %2646 = vmatpush2.msra.mxu0 0.0
  %2647 = vmatprep.subr.mxu0 0.0
  %2648 = vmatpush2.msra.mxu0 0.0
  %2649 = vmatprep.subr.mxu0 0.0
  %2650 = vmatpush2.msra.mxu0 0.0
  %2651 = vmatprep.subr.mxu0 0.0
  %2652 = vmatpush2.msra.mxu0 0.0
  %2653 = vmatprep.subr.mxu0 0.0
  %2654 = vmatpush2.msra.mxu0 0.0
  %2655 = vmatprep.subr.mxu0 0.0
  %2656 = vmatpush2.msra.mxu0 0.0
  %2657 = vmatprep.subr.mxu0 0.0
  %2658 = vmatpush2.msra.mxu0 0.0
  %2659 = vmatprep.subr.mxu0 0.0
  %2660 = vmatpush2.msra.mxu0 0.0
  %2661 = vmatprep.subr.mxu0 0.0
  %2662 = vmatpush2.msra.mxu0 0.0
  %2663 = vmatprep.subr.mxu0 0.0
  %2664 = vmatpush2.msra.mxu0 0.0
  %2665 = vmatprep.subr.mxu0 0.0
  %2666 = vmatpush2.msra.mxu0 0.0
  %2667 = vmatprep.mubr.f32.mxu0 0.0
  %2668 = vmatmul.mubr.f32.gmra.mxu0 %v2601
  %v2669 = vpop.f32.mrf.mxu0
  %v2670 = vadd.f32 0.0, %v2669
  %v2671 = vpop.f32.mrf.mxu0
  %2672 = vdwg.mxu0
  %2674 = vrot.lane.b32.xlu0 %v1333, 32
  %v2675 = vpop.permute.xlu0 %2674
  %v2676 = vsel %vm168, %v2675, 0
  %2678 = vmatprep.subr.mxu0 0.0
  %2679 = vmatpush1.msra.mxu0 0.0
  %2680 = vmatprep.subr.mxu0 0.0
  %2681 = vmatpush1.msra.mxu0 0.0
  %2682 = vmatprep.subr.mxu0 0.0
  %2683 = vmatpush1.msra.mxu0 0.0
  %2684 = vmatprep.subr.mxu0 0.0
  %2685 = vmatpush1.msra.mxu0 0.0
  %2686 = vmatprep.subr.mxu0 0.0
  %2687 = vmatpush1.msra.mxu0 0.0
  %2688 = vmatprep.subr.mxu0 0.0
  %2689 = vmatpush1.msra.mxu0 0.0
  %2690 = vmatprep.subr.mxu0 0.0
  %2691 = vmatpush1.msra.mxu0 0.0
  %2692 = vmatprep.subr.mxu0 0.0
  %2693 = vmatpush1.msra.mxu0 0.0
  %2694 = vmatprep.subr.mxu0 0.0
  %2695 = vmatpush1.msra.mxu0 0.0
  %2696 = vmatprep.subr.mxu0 0.0
  %2697 = vmatpush1.msra.mxu0 0.0
  %2698 = vmatprep.subr.mxu0 0.0
  %2699 = vmatpush1.msra.mxu0 0.0
  %2700 = vmatprep.subr.mxu0 0.0
  %2701 = vmatpush1.msra.mxu0 0.0
  %2702 = vmatprep.subr.mxu0 0.0
  %2703 = vmatpush1.msra.mxu0 %v2593
  %2704 = vmatprep.subr.mxu0 0.0
  %2705 = vmatpush1.msra.mxu0 %v2592
  %2706 = vmatprep.subr.mxu0 0.0
  %2707 = vmatpush1.msra.mxu0 %v2591
  %2708 = vmatprep.subr.mxu0 0.0
  %2709 = vmatpush1.msra.mxu0 %v2590
  %2710 = vmatprep.subr.mxu0 0.0
  %2711 = vmatpush2.msra.mxu0 0.0
  %2712 = vmatprep.subr.mxu0 0.0
  %2713 = vmatpush2.msra.mxu0 0.0
  %2714 = vmatprep.subr.mxu0 0.0
  %2715 = vmatpush2.msra.mxu0 0.0
  %2716 = vmatprep.subr.mxu0 0.0
  %2717 = vmatpush2.msra.mxu0 0.0
  %2718 = vmatprep.subr.mxu0 0.0
  %2719 = vmatpush2.msra.mxu0 0.0
  %2720 = vmatprep.subr.mxu0 0.0
  %2721 = vmatpush2.msra.mxu0 0.0
  %2722 = vmatprep.subr.mxu0 0.0
  %2723 = vmatpush2.msra.mxu0 0.0
  %2724 = vmatprep.subr.mxu0 0.0
  %2725 = vmatpush2.msra.mxu0 0.0
  %2726 = vmatprep.subr.mxu0 0.0
  %2727 = vmatpush2.msra.mxu0 0.0
  %2728 = vmatprep.subr.mxu0 0.0
  %2729 = vmatpush2.msra.mxu0 0.0
  %2730 = vmatprep.subr.mxu0 0.0
  %2731 = vmatpush2.msra.mxu0 0.0
  %2732 = vmatprep.subr.mxu0 0.0
  %2733 = vmatpush2.msra.mxu0 0.0
  %2734 = vmatprep.subr.mxu0 0.0
  %2735 = vmatpush2.msra.mxu0 0.0
  %2736 = vmatprep.subr.mxu0 0.0
  %2737 = vmatpush2.msra.mxu0 0.0
  %2738 = vmatprep.subr.mxu0 0.0
  %2739 = vmatpush2.msra.mxu0 0.0
  %2740 = vmatprep.subr.mxu0 0.0
  %2741 = vmatpush2.msra.mxu0 0.0
  %2742 = vmatprep.mubr.f32.mxu0 0.0
  %2743 = vmatmul.mubr.f32.gmra.mxu0 %v2676
  %v2744 = vpop.f32.mrf.mxu0
  %v2745 = vadd.f32 %v2670, %v2744
  %v2746 = vpop.f32.mrf.mxu0
  %2747 = vdwg.mxu0
  %v2748 = vld [vmem:[%s11] sm:$0x1]
  %v2750 = vlaneseq
  %v2751 = vshrl.u32 %v2750, 7
  %v2752 = vsub.s32 0, %v2751
  %v2753 = vrot.slane %v2748, %v2752
  %v2755 = vadd.f32 %v2745, %v2753
  %v2756 = vmax.f32 %v2755, 0.0
  %v2757 = vld [vmem:[%s12] sm:$0xff]
  %v2758 = vld [vmem:[%s12 + $0x8] sm:$0xff]
  %v2759 = vld [vmem:[%s12 + $0x10] sm:$0xff]
  %v2760 = vld [vmem:[%s12 + $0x18] sm:$0xff]
  %v2761 = vld [vmem:[%s13] sm:$0x1]
  %v2763 = vlaneseq
  %v2764 = vshrl.u32 %v2763, 7
  %v2765 = vsub.s32 0, %v2764
  %v2766 = vrot.slane %v2761, %v2765
  %v2769 = vsel %vm168, %v2756, 0
  %2771 = vmatprep.subr.mxu0 0.0
  %2772 = vmatpush1.msra.mxu0 0.0
  %2773 = vmatprep.subr.mxu0 0.0
  %2774 = vmatpush1.msra.mxu0 0.0
  %2775 = vmatprep.subr.mxu0 0.0
  %2776 = vmatpush1.msra.mxu0 0.0
  %2777 = vmatprep.subr.mxu0 0.0
  %2778 = vmatpush1.msra.mxu0 0.0
  %2779 = vmatprep.subr.mxu0 0.0
  %2780 = vmatpush1.msra.mxu0 0.0
  %2781 = vmatprep.subr.mxu0 0.0
  %2782 = vmatpush1.msra.mxu0 0.0
  %2783 = vmatprep.subr.mxu0 0.0
  %2784 = vmatpush1.msra.mxu0 0.0
  %2785 = vmatprep.subr.mxu0 0.0
  %2786 = vmatpush1.msra.mxu0 0.0
  %2787 = vmatprep.subr.mxu0 0.0
  %2788 = vmatpush1.msra.mxu0 0.0
  %2789 = vmatprep.subr.mxu0 0.0
  %2790 = vmatpush1.msra.mxu0 0.0
  %2791 = vmatprep.subr.mxu0 0.0
  %2792 = vmatpush1.msra.mxu0 0.0
  %2793 = vmatprep.subr.mxu0 0.0
  %2794 = vmatpush1.msra.mxu0 0.0
  %2795 = vmatprep.subr.mxu0 0.0
  %2796 = vmatpush1.msra.mxu0 %v2760
  %2797 = vmatprep.subr.mxu0 0.0
  %2798 = vmatpush1.msra.mxu0 %v2759
  %2799 = vmatprep.subr.mxu0 0.0
  %2800 = vmatpush1.msra.mxu0 %v2758
  %2801 = vmatprep.subr.mxu0 0.0
  %2802 = vmatpush1.msra.mxu0 %v2757
  %2803 = vmatprep.subr.mxu0 0.0
  %2804 = vmatpush2.msra.mxu0 0.0
  %2805 = vmatprep.subr.mxu0 0.0
  %2806 = vmatpush2.msra.mxu0 0.0
  %2807 = vmatprep.subr.mxu0 0.0
  %2808 = vmatpush2.msra.mxu0 0.0
  %2809 = vmatprep.subr.mxu0 0.0
  %2810 = vmatpush2.msra.mxu0 0.0
  %2811 = vmatprep.subr.mxu0 0.0
  %2812 = vmatpush2.msra.mxu0 0.0
  %2813 = vmatprep.subr.mxu0 0.0
  %2814 = vmatpush2.msra.mxu0 0.0
  %2815 = vmatprep.subr.mxu0 0.0
  %2816 = vmatpush2.msra.mxu0 0.0
  %2817 = vmatprep.subr.mxu0 0.0
  %2818 = vmatpush2.msra.mxu0 0.0
  %2819 = vmatprep.subr.mxu0 0.0
  %2820 = vmatpush2.msra.mxu0 0.0
  %2821 = vmatprep.subr.mxu0 0.0
  %2822 = vmatpush2.msra.mxu0 0.0
  %2823 = vmatprep.subr.mxu0 0.0
  %2824 = vmatpush2.msra.mxu0 0.0
  %2825 = vmatprep.subr.mxu0 0.0
  %2826 = vmatpush2.msra.mxu0 0.0
  %2827 = vmatprep.subr.mxu0 0.0
  %2828 = vmatpush2.msra.mxu0 0.0
  %2829 = vmatprep.subr.mxu0 0.0
  %2830 = vmatpush2.msra.mxu0 0.0
  %2831 = vmatprep.subr.mxu0 0.0
  %2832 = vmatpush2.msra.mxu0 0.0
  %2833 = vmatprep.subr.mxu0 0.0
  %2834 = vmatpush2.msra.mxu0 0.0
  %2835 = vmatprep.mubr.f32.mxu0 0.0
  %2836 = vmatmul.mubr.f32.gmra.mxu0 %v2769
  %v2837 = vpop.f32.mrf.mxu0
  %v2838 = vadd.f32 %v2766, %v2837
  %v2839 = vpop.f32.mrf.mxu0
  %2840 = vdwg.mxu0
  %v2841 = vmax.f32 %v2838, 0.0
  %v2842 = vld [vmem:[%s14] sm:$0xff]
  %v2843 = vld [vmem:[%s14 + $0x8] sm:$0xff]
  %v2844 = vld [vmem:[%s15] sm:$0x1]
  %v2846 = vlaneseq
  %v2847 = vshrl.u32 %v2846, 7
  %v2848 = vsub.s32 0, %v2847
  %v2849 = vrot.slane %v2844, %v2848
  %v2852 = vsel %vm81, %v2841, 0
  %2854 = vmatprep.subr.mxu0 0.0
  %2855 = vmatpush1.msra.mxu0 0.0
  %2856 = vmatprep.subr.mxu0 0.0
  %2857 = vmatpush1.msra.mxu0 0.0
  %2858 = vmatprep.subr.mxu0 0.0
  %2859 = vmatpush1.msra.mxu0 0.0
  %2860 = vmatprep.subr.mxu0 0.0
  %2861 = vmatpush1.msra.mxu0 0.0
  %2862 = vmatprep.subr.mxu0 0.0
  %2863 = vmatpush1.msra.mxu0 0.0
  %2864 = vmatprep.subr.mxu0 0.0
  %2865 = vmatpush1.msra.mxu0 0.0
  %2866 = vmatprep.subr.mxu0 0.0
  %2867 = vmatpush1.msra.mxu0 0.0
  %2868 = vmatprep.subr.mxu0 0.0
  %2869 = vmatpush1.msra.mxu0 0.0
  %2870 = vmatprep.subr.mxu0 0.0
  %2871 = vmatpush1.msra.mxu0 0.0
  %2872 = vmatprep.subr.mxu0 0.0
  %2873 = vmatpush1.msra.mxu0 0.0
  %2874 = vmatprep.subr.mxu0 0.0
  %2875 = vmatpush1.msra.mxu0 0.0
  %2876 = vmatprep.subr.mxu0 0.0
  %2877 = vmatpush1.msra.mxu0 0.0
  %2878 = vmatprep.subr.mxu0 0.0
  %2879 = vmatpush1.msra.mxu0 0.0
  %2880 = vmatprep.subr.mxu0 0.0
  %2881 = vmatpush1.msra.mxu0 0.0
  %2882 = vmatprep.subr.mxu0 0.0
  %2883 = vmatpush1.msra.mxu0 %v2843
  %2884 = vmatprep.subr.mxu0 0.0
  %2885 = vmatpush1.msra.mxu0 %v2842
  %2886 = vmatprep.subr.mxu0 0.0
  %2887 = vmatpush2.msra.mxu0 0.0
  %2888 = vmatprep.subr.mxu0 0.0
  %2889 = vmatpush2.msra.mxu0 0.0
  %2890 = vmatprep.subr.mxu0 0.0
  %2891 = vmatpush2.msra.mxu0 0.0
  %2892 = vmatprep.subr.mxu0 0.0
  %2893 = vmatpush2.msra.mxu0 0.0
  %2894 = vmatprep.subr.mxu0 0.0
  %2895 = vmatpush2.msra.mxu0 0.0
  %2896 = vmatprep.subr.mxu0 0.0
  %2897 = vmatpush2.msra.mxu0 0.0
  %2898 = vmatprep.subr.mxu0 0.0
  %2899 = vmatpush2.msra.mxu0 0.0
  %2900 = vmatprep.subr.mxu0 0.0
  %2901 = vmatpush2.msra.mxu0 0.0
  %2902 = vmatprep.subr.mxu0 0.0
  %2903 = vmatpush2.msra.mxu0 0.0
  %2904 = vmatprep.subr.mxu0 0.0
  %2905 = vmatpush2.msra.mxu0 0.0
  %2906 = vmatprep.subr.mxu0 0.0
  %2907 = vmatpush2.msra.mxu0 0.0
  %2908 = vmatprep.subr.mxu0 0.0
  %2909 = vmatpush2.msra.mxu0 0.0
  %2910 = vmatprep.subr.mxu0 0.0
  %2911 = vmatpush2.msra.mxu0 0.0
  %2912 = vmatprep.subr.mxu0 0.0
  %2913 = vmatpush2.msra.mxu0 0.0
  %2914 = vmatprep.subr.mxu0 0.0
  %2915 = vmatpush2.msra.mxu0 0.0
  %2916 = vmatprep.subr.mxu0 0.0
  %2917 = vmatpush2.msra.mxu0 0.0
  %2918 = vmatprep.mubr.f32.mxu0 0.0
  %2919 = vmatmul.mubr.f32.gmra.mxu0 %v2852
  %v2920 = vpop.f32.mrf.mxu0
  %v2921 = vadd.f32 %v2849, %v2920
  %v2922 = vpop.f32.mrf.mxu0
  %2923 = vdwg.mxu0
  %v2924 = vmax.f32 %v2921, 0.0
  %v2925 = vld [vmem:[%s16] sm:$0xff]
  %v2926 = vld [vmem:[#allocation2] sm:$0x1]
  %v2928 = vlaneseq
  %v2929 = vshrl.u32 %v2928, 7
  %v2930 = vsub.s32 0, %v2929
  %v2931 = vrot.slane %v2926, %v2930
  %vm2933 = vcmask 64512
  %v2935 = vsel %vm2933, %v2924, 0
  %2937 = vmatprep.subr.mxu0 0.0
  %2938 = vmatpush1.msra.mxu0 0.0
  %2939 = vmatprep.subr.mxu0 0.0
  %2940 = vmatpush1.msra.mxu0 0.0
  %2941 = vmatprep.subr.mxu0 0.0
  %2942 = vmatpush1.msra.mxu0 0.0
  %2943 = vmatprep.subr.mxu0 0.0
  %2944 = vmatpush1.msra.mxu0 0.0
  %2945 = vmatprep.subr.mxu0 0.0
  %2946 = vmatpush1.msra.mxu0 0.0
  %2947 = vmatprep.subr.mxu0 0.0
  %2948 = vmatpush1.msra.mxu0 0.0
  %2949 = vmatprep.subr.mxu0 0.0
  %2950 = vmatpush1.msra.mxu0 0.0
  %2951 = vmatprep.subr.mxu0 0.0
  %2952 = vmatpush1.msra.mxu0 0.0
  %2953 = vmatprep.subr.mxu0 0.0
  %2954 = vmatpush1.msra.mxu0 0.0
  %2955 = vmatprep.subr.mxu0 0.0
  %2956 = vmatpush1.msra.mxu0 0.0
  %2957 = vmatprep.subr.mxu0 0.0
  %2958 = vmatpush1.msra.mxu0 0.0
  %2959 = vmatprep.subr.mxu0 0.0
  %2960 = vmatpush1.msra.mxu0 0.0
  %2961 = vmatprep.subr.mxu0 0.0
  %2962 = vmatpush1.msra.mxu0 0.0
  %2963 = vmatprep.subr.mxu0 0.0
  %2964 = vmatpush1.msra.mxu0 0.0
  %2965 = vmatprep.subr.mxu0 0.0
  %2966 = vmatpush1.msra.mxu0 0.0
  %2967 = vmatprep.subr.mxu0 0.0
  %2968 = vmatpush1.msra.mxu0 %v2925
  %2969 = vmatprep.subr.mxu0 0.0
  %2970 = vmatpush2.msra.mxu0 0.0
  %2971 = vmatprep.subr.mxu0 0.0
  %2972 = vmatpush2.msra.mxu0 0.0
  %2973 = vmatprep.subr.mxu0 0.0
  %2974 = vmatpush2.msra.mxu0 0.0
  %2975 = vmatprep.subr.mxu0 0.0
  %2976 = vmatpush2.msra.mxu0 0.0
  %2977 = vmatprep.subr.mxu0 0.0
  %2978 = vmatpush2.msra.mxu0 0.0
  %2979 = vmatprep.subr.mxu0 0.0
  %2980 = vmatpush2.msra.mxu0 0.0
  %2981 = vmatprep.subr.mxu0 0.0
  %2982 = vmatpush2.msra.mxu0 0.0
  %2983 = vmatprep.subr.mxu0 0.0
  %2984 = vmatpush2.msra.mxu0 0.0
  %2985 = vmatprep.subr.mxu0 0.0
  %2986 = vmatpush2.msra.mxu0 0.0
  %2987 = vmatprep.subr.mxu0 0.0
  %2988 = vmatpush2.msra.mxu0 0.0
  %2989 = vmatprep.subr.mxu0 0.0
  %2990 = vmatpush2.msra.mxu0 0.0
  %2991 = vmatprep.subr.mxu0 0.0
  %2992 = vmatpush2.msra.mxu0 0.0
  %2993 = vmatprep.subr.mxu0 0.0
  %2994 = vmatpush2.msra.mxu0 0.0
  %2995 = vmatprep.subr.mxu0 0.0
  %2996 = vmatpush2.msra.mxu0 0.0
  %2997 = vmatprep.subr.mxu0 0.0
  %2998 = vmatpush2.msra.mxu0 0.0
  %2999 = vmatprep.subr.mxu0 0.0
  %3000 = vmatpush2.msra.mxu0 0.0
  %3001 = vmatprep.mubr.f32.mxu0 0.0
  %3002 = vmatmul.mubr.f32.gmra.mxu0 %v2935
  %v3003 = vpop.f32.mrf.mxu0
  %v3004 = vadd.f32 %v2931, %v3003
  %v3005 = vpop.f32.mrf.mxu0
  %3006 = vdwg.mxu0
  %vm3007 = vcmask 1024
  %3008 = vst.msk [vmem:[%s20] sm:$0x3] %vm3007, %v3004
  // Predicated region
  $region82: #{molecular_lstm_forward.1} parent=0 // pred_check
    _
  $region83: #{molecular_lstm_forward.1} parent=0 // pred_check_branch
    %3010 = sbr.rel (0) target = $region85
  $region84: #{molecular_lstm_forward.1} parent=0 // pred_region
    _
  $region85: #{molecular_lstm_forward.1} parent=0 // pred_fallthru
    _
  // Predicated region
  $region86: #{molecular_lstm_forward.1} parent=0 // pred_check
    _
  $region87: #{molecular_lstm_forward.1} parent=0 // pred_check_branch
    %3012 = sbr.rel (0) target = $region89
  $region88: #{molecular_lstm_forward.1} parent=0 // pred_region
    _
  $region89: #{molecular_lstm_forward.1} parent=0 // pred_fallthru
    _

</llo_original>
